<compile_context>
chip_gen: v5e
topology: v5e:2x2
jax: 0.10.0
libtpu: 0.0.40
codegen_flags: <defaults>
</compile_context>

<pallas_src>
import numpy as np
import jax
import jax.numpy as jnp
from jax import lax
from jax.experimental import pallas as pl
from jax.experimental.pallas import tpu as pltpu

GROUPS = 32
EPS = 1e-5


# ----------------------------- kernel helpers --------------------------------
def _silu(x):
    return x * jax.nn.sigmoid(x)


def _group_norm(x3, M, MT, gamma, beta):
    """GroupNorm on a (BT, L, C) tile; stats per (batch, group) over (L, C//G).

    M  : (C, G) channel->group one-hot (f32), built once in the wrapper.
    MT : (G, C) its transpose.
    Two-pass variance: sum((x - mean)^2) to avoid E[x^2]-mean^2 cancellation.
    """
    BT, L, C = x3.shape
    G = M.shape[1]
    n = jnp.float32(L * (C // G))

    ch_sum = jnp.sum(x3, axis=1)                                             # (BT, C)
    mean_g = jnp.dot(ch_sum, M, preferred_element_type=jnp.float32) / n      # (BT, G)
    mean_c = jnp.dot(mean_g, MT, preferred_element_type=jnp.float32)         # (BT, C)

    d = x3 - mean_c[:, None, :]                                              # (BT, L, C)
    ch_sq = jnp.sum(d * d, axis=1)                                           # (BT, C)
    var_g = jnp.dot(ch_sq, M, preferred_element_type=jnp.float32) / n        # (BT, G)
    inv_c = jnp.dot(lax.rsqrt(var_g + EPS), MT,
                    preferred_element_type=jnp.float32)                      # (BT, C)

    return d * inv_c[:, None, :] * gamma + beta


def _conv3(x3, w_ref, b):
    """Conv1d(kernel=3, padding=1) on a (BT, L, C_in) f32 tile -> (BT*L, C_out) f32.

    The shifted taps are built per batch element with zero padding along L
    (so nothing leaks across batch boundaries).  w_ref: (3, C_in, C_out) bf16.
    """
    BT, L, C = x3.shape
    R = BT * L
    wdt = w_ref.dtype

    zero_row = jnp.zeros((BT, 1, C), dtype=x3.dtype)
    xm3 = jnp.concatenate([zero_row, x3[:, : L - 1, :]], axis=1)   # x[l-1]
    xp3 = jnp.concatenate([x3[:, 1:, :], zero_row], axis=1)        # x[l+1]

    x0 = x3.reshape(R, C).astype(wdt)
    xm = xm3.reshape(R, C).astype(wdt)
    xp = xp3.reshape(R, C).astype(wdt)

    y = (jnp.dot(xm, w_ref[0], preferred_element_type=jnp.float32)
         + jnp.dot(x0, w_ref[1], preferred_element_type=jnp.float32)
         + jnp.dot(xp, w_ref[2], preferred_element_type=jnp.float32))
    return y + b


# --------------------------------- kernel -------------------------------------
def residual_block_kernel(
    feat_ref, temb_ref,
    mf_ref, mft_ref, gnf_g_ref, gnf_b_ref, wf_ref, bf_ref,
    mm_ref, mmt_ref, gnm_g_ref, gnm_b_ref, wm_ref, bm_ref,
    wr_ref, br_ref,
    out_ref,
):
    BT, L, C_in = feat_ref.shape
    C_out = out_ref.shape[-1]
    R = BT * L

    x3 = feat_ref[...]                                   # (BT, L, C_in) f32

    # ---- GroupNorm(feature) + SiLU + Conv1d(3, pad=1)
    h3 = _group_norm(x3, mf_ref[...], mft_ref[...], gnf_g_ref[...], gnf_b_ref[...])
    h3 = _silu(h3)
    h = _conv3(h3, wf_ref, bf_ref[...])                   # (R, C_out) f32

    # ---- add precomputed time embedding (per batch, broadcast over L)
    temb = temb_ref[0]                                    # (BT, C_out)
    merged3 = h.reshape(BT, L, C_out) + temb[:, None, :]

    # ---- GroupNorm(merged) + SiLU + Conv1d(3, pad=1)
    m3 = _group_norm(merged3, mm_ref[...], mmt_ref[...], gnm_g_ref[...], gnm_b_ref[...])
    m3 = _silu(m3)
    m = _conv3(m3, wm_ref, bm_ref[...])                   # (R, C_out) f32

    # ---- residual 1x1 conv (in_channels != out_channels; identity case -> wr = I)
    res = jnp.dot(x3.reshape(R, C_in).astype(wr_ref.dtype), wr_ref[...],
                  preferred_element_type=jnp.float32) + br_ref[...]

    out_ref[...] = (m + res).reshape(BT, L, C_out).astype(out_ref.dtype)


# -------------------------------- wrapper --------------------------------------
def residual_block_pallas(feature_ncl, time, params, *, block_batch=2):
    N, C_in, L = feature_ncl.shape
    C_out = params["bf"].shape[-1]
    G = GROUPS
    assert C_in % G == 0 and C_out % G == 0, "channels must be a multiple of 32 (GroupNorm)"
    block_batch = min(block_batch, N)
    assert N % block_batch == 0
    n_blocks = N // block_batch
    bf16 = jnp.bfloat16
    f32 = jnp.float32

    # NCL -> NLC (see TODO(synk) at top of file)
    feat_nlc = jnp.transpose(feature_ncl, (0, 2, 1)).astype(f32)

    # time-embedding branch hoisted out of the kernel: one batched XLA matmul
    temb = (jax.nn.silu(time.astype(f32)) @ params["wt"].astype(f32)
            + params["bt"].astype(f32))                       # (N, C_out)
    temb = temb.reshape(n_blocks, block_batch, C_out)

    # channel -> group one-hot matrices, built once (constant inputs)
    def group_matrix(C):
        return (np.arange(C)[:, None] // (C // G) == np.arange(G)[None, :]).astype(np.float32)
    Mf = jnp.asarray(group_matrix(C_in))
    Mm = jnp.asarray(group_matrix(C_out))

    def full_spec(shape):
        nd = len(shape)
        return pl.BlockSpec(shape, lambda n, _nd=nd: (0,) * _nd)

    out_nlc = pl.pallas_call(
        residual_block_kernel,
        out_shape=jax.ShapeDtypeStruct((N, L, C_out), f32),
        grid_spec=pltpu.PrefetchScalarGridSpec(
            num_scalar_prefetch=0,
            grid=(n_blocks,),
            in_specs=[
                pl.BlockSpec((block_batch, L, C_in), lambda n: (n, 0, 0)),   # feature
                pl.BlockSpec((1, block_batch, C_out), lambda n: (n, 0, 0)),  # time emb
                full_spec((C_in, G)), full_spec((G, C_in)),                  # Mf, Mf^T
                full_spec((1, C_in)), full_spec((1, C_in)),                  # gnf gamma/beta
                full_spec((3, C_in, C_out)), full_spec((1, C_out)),          # conv_feature
                full_spec((C_out, G)), full_spec((G, C_out)),                # Mm, Mm^T
                full_spec((1, C_out)), full_spec((1, C_out)),                # gnm gamma/beta
                full_spec((3, C_out, C_out)), full_spec((1, C_out)),         # conv_merged
                full_spec((C_in, C_out)), full_spec((1, C_out)),             # residual 1x1
            ],
            out_specs=pl.BlockSpec((block_batch, L, C_out), lambda n: (n, 0, 0)),
        ),
        compiler_params=pltpu.CompilerParams(dimension_semantics=("parallel",)),
    )(
        feat_nlc, temb,
        Mf, Mf.T, params["gnf_g"].astype(f32), params["gnf_b"].astype(f32),
        params["wf"].astype(bf16), params["bf"].astype(f32),
        Mm, Mm.T, params["gnm_g"].astype(f32), params["gnm_b"].astype(f32),
        params["wm"].astype(bf16), params["bm"].astype(f32),
        params["wr"].astype(bf16), params["br"].astype(f32),
    )
    return jnp.transpose(out_nlc, (0, 2, 1))


# ----------------------------- pure-JAX reference -------------------------------
def _group_norm_ref(x, gamma, beta, num_groups):
    N, C, L = x.shape
    xg = x.reshape(N, num_groups, (C // num_groups) * L)
    mean = xg.mean(-1, keepdims=True)
    var = xg.var(-1, keepdims=True)
    xn = ((xg - mean) * lax.rsqrt(var + EPS)).reshape(N, C, L)
    return xn * gamma[None, :, None] + beta[None, :, None]


def _conv1d_ref(x, w_oik, b):
    y = lax.conv_general_dilated(
        x, w_oik, window_strides=(1,), padding=[(1, 1)],
        dimension_numbers=("NCH", "OIH", "NCH"))
    return y + b[None, :, None]


def residual_block_ref(feature, time, p):
    h = _group_norm_ref(feature, p["gnf_g"][0], p["gnf_b"][0], GROUPS)
    h = jax.nn.silu(h)
    h = _conv1d_ref(h, jnp.transpose(p["wf"], (2, 1, 0)), p["bf"][0])
    t = jax.nn.silu(time)
    t = t @ p["wt"] + p["bt"][0]
    m = h + t[:, :, None]
    m = _group_norm_ref(m, p["gnm_g"][0], p["gnm_b"][0], GROUPS)
    m = jax.nn.silu(m)
    m = _conv1d_ref(m, jnp.transpose(p["wm"], (2, 1, 0)), p["bm"][0])
    res = jnp.einsum("ncl,co->nol", feature, p["wr"]) + p["br"][0][None, :, None]
    return m + res


# --------------------------------- main -----------------------------------------
if __name__ == "__main__":
    # small shapes consistent with the module (channels must be multiples of 32);
    # L=128 / C_OUT=128 keep the MXU rows and output lanes dense, N=4 with
    # B_TILE=2 gives a 2-step "parallel" grid (both v7x TensorCores busy).
    N, C_IN, C_OUT, L, N_TIME = 4, 64, 128, 128, 1280
    B_TILE = 2

    key = jax.random.PRNGKey(0)
    ks = jax.random.split(key, 16)

    params = {
        "gnf_g": 1.0 + 0.05 * jax.random.normal(ks[0], (1, C_IN), jnp.float32),
        "gnf_b": 0.05 * jax.random.normal(ks[1], (1, C_IN), jnp.float32),
        "wf":    0.05 * jax.random.normal(ks[2], (3, C_IN, C_OUT), jnp.float32),
        "bf":    0.05 * jax.random.normal(ks[3], (1, C_OUT), jnp.float32),
        "wt":    0.02 * jax.random.normal(ks[4], (N_TIME, C_OUT), jnp.float32),
        "bt":    0.05 * jax.random.normal(ks[5], (1, C_OUT), jnp.float32),
        "gnm_g": 1.0 + 0.05 * jax.random.normal(ks[6], (1, C_OUT), jnp.float32),
        "gnm_b": 0.05 * jax.random.normal(ks[7], (1, C_OUT), jnp.float32),
        "wm":    0.05 * jax.random.normal(ks[8], (3, C_OUT, C_OUT), jnp.float32),
        "bm":    0.05 * jax.random.normal(ks[9], (1, C_OUT), jnp.float32),
        "wr":    0.05 * jax.random.normal(ks[10], (C_IN, C_OUT), jnp.float32),
        "br":    0.05 * jax.random.normal(ks[11], (1, C_OUT), jnp.float32),
    }

    feature = jax.random.normal(ks[12], (N, C_IN, L), jnp.float32)   # PyTorch NCL
    time = jax.random.normal(ks[13], (N, N_TIME), jnp.float32)

    out = residual_block_pallas(feature, time, params, block_batch=B_TILE)
    out = jax.block_until_ready(out)

    ref = jax.block_until_ready(residual_block_ref(feature, time, params))
    # bf16 MXU operands (f32 accumulate) vs a pure-f32 reference
    np.testing.assert_allclose(np.asarray(out), np.asarray(ref), rtol=3e-2, atol=3e-2)

    print("KERNEL_OK")
</pallas_src>

<mosaic_0001>
module attributes {stable_mosaic.version = 11 : i64} {
  func.func @residual_block_kernel(%arg0: i32, %arg1: memref<2x128x64xf32, #tpu.memory_space<vmem>>, %arg2: memref<1x2x128xf32, #tpu.memory_space<vmem>>, %arg3: memref<64x32xf32, #tpu.memory_space<vmem>>, %arg4: memref<32x64xf32, #tpu.memory_space<vmem>>, %arg5: memref<1x64xf32, #tpu.memory_space<vmem>>, %arg6: memref<1x64xf32, #tpu.memory_space<vmem>>, %arg7: memref<3x64x128xbf16, #tpu.memory_space<vmem>>, %arg8: memref<1x128xf32, #tpu.memory_space<vmem>>, %arg9: memref<128x32xf32, #tpu.memory_space<vmem>>, %arg10: memref<32x128xf32, #tpu.memory_space<vmem>>, %arg11: memref<1x128xf32, #tpu.memory_space<vmem>>, %arg12: memref<1x128xf32, #tpu.memory_space<vmem>>, %arg13: memref<3x128x128xbf16, #tpu.memory_space<vmem>>, %arg14: memref<1x128xf32, #tpu.memory_space<vmem>>, %arg15: memref<64x128xbf16, #tpu.memory_space<vmem>>, %arg16: memref<1x128xf32, #tpu.memory_space<vmem>>, %arg17: memref<2x128x128xf32, #tpu.memory_space<vmem>>) attributes {dimension_semantics = [#tpu.dimension_semantics<parallel>], iteration_bounds = array<i64: 2>, scalar_prefetch = 0 : i64, scratch_operands = 0 : i64, tpu.core_type = #tpu.core_type<tc>, window_params = [{transform_indices = @transform_0, window_bounds = array<i64: 2, 128, 64>}, {transform_indices = @transform_1, window_bounds = array<i64: 1, 2, 128>}, {pipeline_mode = #tpu.pipeline_mode<synchronous>, transform_indices = @transform_2, window_bounds = array<i64: 64, 32>}, {pipeline_mode = #tpu.pipeline_mode<synchronous>, transform_indices = @transform_3, window_bounds = array<i64: 32, 64>}, {pipeline_mode = #tpu.pipeline_mode<synchronous>, transform_indices = @transform_4, window_bounds = array<i64: 1, 64>}, {pipeline_mode = #tpu.pipeline_mode<synchronous>, transform_indices = @transform_5, window_bounds = array<i64: 1, 64>}, {pipeline_mode = #tpu.pipeline_mode<synchronous>, transform_indices = @transform_6, window_bounds = array<i64: 3, 64, 128>}, {pipeline_mode = #tpu.pipeline_mode<synchronous>, transform_indices = @transform_7, window_bounds = array<i64: 1, 128>}, {pipeline_mode = #tpu.pipeline_mode<synchronous>, transform_indices = @transform_8, window_bounds = array<i64: 128, 32>}, {pipeline_mode = #tpu.pipeline_mode<synchronous>, transform_indices = @transform_9, window_bounds = array<i64: 32, 128>}, {pipeline_mode = #tpu.pipeline_mode<synchronous>, transform_indices = @transform_10, window_bounds = array<i64: 1, 128>}, {pipeline_mode = #tpu.pipeline_mode<synchronous>, transform_indices = @transform_11, window_bounds = array<i64: 1, 128>}, {pipeline_mode = #tpu.pipeline_mode<synchronous>, transform_indices = @transform_12, window_bounds = array<i64: 3, 128, 128>}, {pipeline_mode = #tpu.pipeline_mode<synchronous>, transform_indices = @transform_13, window_bounds = array<i64: 1, 128>}, {pipeline_mode = #tpu.pipeline_mode<synchronous>, transform_indices = @transform_14, window_bounds = array<i64: 64, 128>}, {pipeline_mode = #tpu.pipeline_mode<synchronous>, transform_indices = @transform_15, window_bounds = array<i64: 1, 128>}, {transform_indices = @transform_16, window_bounds = array<i64: 2, 128, 128>}]} {
    %c0 = arith.constant 0 : index
    %c0_0 = arith.constant 0 : index
    %c0_1 = arith.constant 0 : index
    %0 = vector.load %arg1[%c0, %c0_0, %c0_1] : memref<2x128x64xf32, #tpu.memory_space<vmem>>, vector<2x128x64xf32>
    %c0_2 = arith.constant 0 : index
    %c0_3 = arith.constant 0 : index
    %1 = vector.load %arg3[%c0_2, %c0_3] : memref<64x32xf32, #tpu.memory_space<vmem>>, vector<64x32xf32>
    %c0_4 = arith.constant 0 : index
    %c0_5 = arith.constant 0 : index
    %2 = vector.load %arg4[%c0_4, %c0_5] : memref<32x64xf32, #tpu.memory_space<vmem>>, vector<32x64xf32>
    %c0_6 = arith.constant 0 : index
    %c0_7 = arith.constant 0 : index
    %3 = vector.load %arg5[%c0_6, %c0_7] : memref<1x64xf32, #tpu.memory_space<vmem>>, vector<1x64xf32>
    %c0_8 = arith.constant 0 : index
    %c0_9 = arith.constant 0 : index
    %4 = vector.load %arg6[%c0_8, %c0_9] : memref<1x64xf32, #tpu.memory_space<vmem>>, vector<1x64xf32>
    %cst = arith.constant dense<0.000000e+00> : vector<2x64xf32>
    %5 = vector.multi_reduction <add>, %0, %cst [1] : vector<2x128x64xf32> to vector<2x64xf32>
    %cst_10 = arith.constant dense<0.000000e+00> : vector<2x32xf32>
    %6 = tpu.matmul %5, %1, %cst_10 {dimension_numbers = #tpu.dot_dimension_numbers<[1], [0], [0], [1], [0, 0, 1, 1], [], []>} : vector<2x64xf32>, vector<64x32xf32>, vector<2x32xf32> -> vector<2x32xf32>
    %cst_11 = arith.constant 2.560000e+02 : f32
    %7 = vector.broadcast %cst_11 : f32 to vector<2x32xf32>
    %8 = arith.divf %6, %7 : vector<2x32xf32>
    %cst_12 = arith.constant dense<0.000000e+00> : vector<2x64xf32>
    %9 = tpu.matmul %8, %2, %cst_12 {dimension_numbers = #tpu.dot_dimension_numbers<[1], [0], [0], [1], [0, 0, 1, 1], [], []>} : vector<2x32xf32>, vector<32x64xf32>, vector<2x64xf32> -> vector<2x64xf32>
    %10 = vector.shape_cast %9 : vector<2x64xf32> to vector<2x1x64xf32>
    %11 = vector.broadcast %10 : vector<2x1x64xf32> to vector<2x128x64xf32>
    %12 = arith.subf %0, %11 : vector<2x128x64xf32>
    %13 = arith.mulf %12, %12 : vector<2x128x64xf32>
    %cst_13 = arith.constant dense<0.000000e+00> : vector<2x64xf32>
    %14 = vector.multi_reduction <add>, %13, %cst_13 [1] : vector<2x128x64xf32> to vector<2x64xf32>
    %cst_14 = arith.constant dense<0.000000e+00> : vector<2x32xf32>
    %15 = tpu.matmul %14, %1, %cst_14 {dimension_numbers = #tpu.dot_dimension_numbers<[1], [0], [0], [1], [0, 0, 1, 1], [], []>} : vector<2x64xf32>, vector<64x32xf32>, vector<2x32xf32> -> vector<2x32xf32>
    %cst_15 = arith.constant 2.560000e+02 : f32
    %16 = vector.broadcast %cst_15 : f32 to vector<2x32xf32>
    %17 = arith.divf %15, %16 : vector<2x32xf32>
    %cst_16 = arith.constant 9.99999974E-6 : f32
    %18 = vector.broadcast %cst_16 : f32 to vector<2x32xf32>
    %19 = arith.addf %17, %18 : vector<2x32xf32>
    %20 = math.rsqrt %19 : vector<2x32xf32>
    %cst_17 = arith.constant dense<0.000000e+00> : vector<2x64xf32>
    %21 = tpu.matmul %20, %2, %cst_17 {dimension_numbers = #tpu.dot_dimension_numbers<[1], [0], [0], [1], [0, 0, 1, 1], [], []>} : vector<2x32xf32>, vector<32x64xf32>, vector<2x64xf32> -> vector<2x64xf32>
    %22 = vector.shape_cast %21 : vector<2x64xf32> to vector<2x1x64xf32>
    %23 = vector.broadcast %22 : vector<2x1x64xf32> to vector<2x128x64xf32>
    %24 = arith.mulf %12, %23 : vector<2x128x64xf32>
    %25 = vector.shape_cast %3 : vector<1x64xf32> to vector<1x1x64xf32>
    %26 = vector.broadcast %25 : vector<1x1x64xf32> to vector<2x128x64xf32>
    %27 = arith.mulf %24, %26 : vector<2x128x64xf32>
    %28 = vector.shape_cast %4 : vector<1x64xf32> to vector<1x1x64xf32>
    %29 = vector.broadcast %28 : vector<1x1x64xf32> to vector<2x128x64xf32>
    %30 = arith.addf %27, %29 : vector<2x128x64xf32>
    %31 = arith.negf %30 : vector<2x128x64xf32>
    %32 = math.exp %31 : vector<2x128x64xf32>
    %cst_18 = arith.constant 1.000000e+00 : f32
    %33 = vector.broadcast %cst_18 : f32 to vector<2x128x64xf32>
    %34 = arith.addf %33, %32 : vector<2x128x64xf32>
    %35 = arith.divf %33, %34 : vector<2x128x64xf32>
    %36 = arith.mulf %30, %35 : vector<2x128x64xf32>
    %c0_19 = arith.constant 0 : index
    %c0_20 = arith.constant 0 : index
    %37 = vector.load %arg8[%c0_19, %c0_20] : memref<1x128xf32, #tpu.memory_space<vmem>>, vector<1x128xf32>
    %cst_21 = arith.constant 0.000000e+00 : f32
    %38 = vector.broadcast %cst_21 : f32 to vector<2x1x64xf32>
    %39 = vector.extract_strided_slice %36 {offsets = [0, 0, 0], sizes = [2, 127, 64], strides = [1, 1, 1]} : vector<2x128x64xf32> to vector<2x127x64xf32>
    %40 = tpu.concatenate %38, %39 in 1 : vector<2x1x64xf32>, vector<2x127x64xf32> -> vector<2x128x64xf32>
    %41 = vector.extract_strided_slice %36 {offsets = [0, 1, 0], sizes = [2, 127, 64], strides = [1, 1, 1]} : vector<2x128x64xf32> to vector<2x127x64xf32>
    %42 = tpu.concatenate %41, %38 in 1 : vector<2x127x64xf32>, vector<2x1x64xf32> -> vector<2x128x64xf32>
    %43 = vector.shape_cast %36 : vector<2x128x64xf32> to vector<256x64xf32>
    %44 = arith.truncf %43 : vector<256x64xf32> to vector<256x64xbf16>
    %45 = vector.shape_cast %40 : vector<2x128x64xf32> to vector<256x64xf32>
    %46 = arith.truncf %45 : vector<256x64xf32> to vector<256x64xbf16>
    %47 = vector.shape_cast %42 : vector<2x128x64xf32> to vector<256x64xf32>
    %48 = arith.truncf %47 : vector<256x64xf32> to vector<256x64xbf16>
    %c0_22 = arith.constant 0 : index
    %c0_23 = arith.constant 0 : index
    %c0_24 = arith.constant 0 : index
    %49 = vector.load %arg7[%c0_22, %c0_23, %c0_24] : memref<3x64x128xbf16, #tpu.memory_space<vmem>>, vector<1x64x128xbf16>
    %50 = vector.shape_cast %49 : vector<1x64x128xbf16> to vector<64x128xbf16>
    %cst_25 = arith.constant dense<0.000000e+00> : vector<256x128xf32>
    %51 = tpu.matmul %46, %50, %cst_25 {dimension_numbers = #tpu.dot_dimension_numbers<[1], [0], [0], [1], [0, 0, 1, 1], [], []>} : vector<256x64xbf16>, vector<64x128xbf16>, vector<256x128xf32> -> vector<256x128xf32>
    %c1 = arith.constant 1 : index
    %c0_26 = arith.constant 0 : index
    %c0_27 = arith.constant 0 : index
    %52 = vector.load %arg7[%c1, %c0_26, %c0_27] : memref<3x64x128xbf16, #tpu.memory_space<vmem>>, vector<1x64x128xbf16>
    %53 = vector.shape_cast %52 : vector<1x64x128xbf16> to vector<64x128xbf16>
    %cst_28 = arith.constant dense<0.000000e+00> : vector<256x128xf32>
    %54 = tpu.matmul %44, %53, %cst_28 {dimension_numbers = #tpu.dot_dimension_numbers<[1], [0], [0], [1], [0, 0, 1, 1], [], []>} : vector<256x64xbf16>, vector<64x128xbf16>, vector<256x128xf32> -> vector<256x128xf32>
    %55 = arith.addf %51, %54 : vector<256x128xf32>
    %c2 = arith.constant 2 : index
    %c0_29 = arith.constant 0 : index
    %c0_30 = arith.constant 0 : index
    %56 = vector.load %arg7[%c2, %c0_29, %c0_30] : memref<3x64x128xbf16, #tpu.memory_space<vmem>>, vector<1x64x128xbf16>
    %57 = vector.shape_cast %56 : vector<1x64x128xbf16> to vector<64x128xbf16>
    %cst_31 = arith.constant dense<0.000000e+00> : vector<256x128xf32>
    %58 = tpu.matmul %48, %57, %cst_31 {dimension_numbers = #tpu.dot_dimension_numbers<[1], [0], [0], [1], [0, 0, 1, 1], [], []>} : vector<256x64xbf16>, vector<64x128xbf16>, vector<256x128xf32> -> vector<256x128xf32>
    %59 = arith.addf %55, %58 : vector<256x128xf32>
    %60 = vector.broadcast %37 : vector<1x128xf32> to vector<256x128xf32>
    %61 = arith.addf %59, %60 : vector<256x128xf32>
    %c0_32 = arith.constant 0 : index
    %c0_33 = arith.constant 0 : index
    %c0_34 = arith.constant 0 : index
    %62 = vector.load %arg2[%c0_32, %c0_33, %c0_34] : memref<1x2x128xf32, #tpu.memory_space<vmem>>, vector<1x2x128xf32>
    %63 = vector.shape_cast %62 : vector<1x2x128xf32> to vector<2x128xf32>
    %64 = vector.shape_cast %61 : vector<256x128xf32> to vector<2x128x128xf32>
    %65 = vector.shape_cast %63 : vector<2x128xf32> to vector<2x1x128xf32>
    %66 = vector.broadcast %65 : vector<2x1x128xf32> to vector<2x128x128xf32>
    %67 = arith.addf %64, %66 : vector<2x128x128xf32>
    %c0_35 = arith.constant 0 : index
    %c0_36 = arith.constant 0 : index
    %68 = vector.load %arg9[%c0_35, %c0_36] : memref<128x32xf32, #tpu.memory_space<vmem>>, vector<128x32xf32>
    %c0_37 = arith.constant 0 : index
    %c0_38 = arith.constant 0 : index
    %69 = vector.load %arg10[%c0_37, %c0_38] : memref<32x128xf32, #tpu.memory_space<vmem>>, vector<32x128xf32>
    %c0_39 = arith.constant 0 : index
    %c0_40 = arith.constant 0 : index
    %70 = vector.load %arg11[%c0_39, %c0_40] : memref<1x128xf32, #tpu.memory_space<vmem>>, vector<1x128xf32>
    %c0_41 = arith.constant 0 : index
    %c0_42 = arith.constant 0 : index
    %71 = vector.load %arg12[%c0_41, %c0_42] : memref<1x128xf32, #tpu.memory_space<vmem>>, vector<1x128xf32>
    %cst_43 = arith.constant dense<0.000000e+00> : vector<2x128xf32>
    %72 = vector.multi_reduction <add>, %67, %cst_43 [1] : vector<2x128x128xf32> to vector<2x128xf32>
    %cst_44 = arith.constant dense<0.000000e+00> : vector<2x32xf32>
    %73 = tpu.matmul %72, %68, %cst_44 {dimension_numbers = #tpu.dot_dimension_numbers<[1], [0], [0], [1], [0, 0, 1, 1], [], []>} : vector<2x128xf32>, vector<128x32xf32>, vector<2x32xf32> -> vector<2x32xf32>
    %cst_45 = arith.constant 5.120000e+02 : f32
    %74 = vector.broadcast %cst_45 : f32 to vector<2x32xf32>
    %75 = arith.divf %73, %74 : vector<2x32xf32>
    %cst_46 = arith.constant dense<0.000000e+00> : vector<2x128xf32>
    %76 = tpu.matmul %75, %69, %cst_46 {dimension_numbers = #tpu.dot_dimension_numbers<[1], [0], [0], [1], [0, 0, 1, 1], [], []>} : vector<2x32xf32>, vector<32x128xf32>, vector<2x128xf32> -> vector<2x128xf32>
    %77 = vector.shape_cast %76 : vector<2x128xf32> to vector<2x1x128xf32>
    %78 = vector.broadcast %77 : vector<2x1x128xf32> to vector<2x128x128xf32>
    %79 = arith.subf %67, %78 : vector<2x128x128xf32>
    %80 = arith.mulf %79, %79 : vector<2x128x128xf32>
    %cst_47 = arith.constant dense<0.000000e+00> : vector<2x128xf32>
    %81 = vector.multi_reduction <add>, %80, %cst_47 [1] : vector<2x128x128xf32> to vector<2x128xf32>
    %cst_48 = arith.constant dense<0.000000e+00> : vector<2x32xf32>
    %82 = tpu.matmul %81, %68, %cst_48 {dimension_numbers = #tpu.dot_dimension_numbers<[1], [0], [0], [1], [0, 0, 1, 1], [], []>} : vector<2x128xf32>, vector<128x32xf32>, vector<2x32xf32> -> vector<2x32xf32>
    %cst_49 = arith.constant 5.120000e+02 : f32
    %83 = vector.broadcast %cst_49 : f32 to vector<2x32xf32>
    %84 = arith.divf %82, %83 : vector<2x32xf32>
    %cst_50 = arith.constant 9.99999974E-6 : f32
    %85 = vector.broadcast %cst_50 : f32 to vector<2x32xf32>
    %86 = arith.addf %84, %85 : vector<2x32xf32>
    %87 = math.rsqrt %86 : vector<2x32xf32>
    %cst_51 = arith.constant dense<0.000000e+00> : vector<2x128xf32>
    %88 = tpu.matmul %87, %69, %cst_51 {dimension_numbers = #tpu.dot_dimension_numbers<[1], [0], [0], [1], [0, 0, 1, 1], [], []>} : vector<2x32xf32>, vector<32x128xf32>, vector<2x128xf32> -> vector<2x128xf32>
    %89 = vector.shape_cast %88 : vector<2x128xf32> to vector<2x1x128xf32>
    %90 = vector.broadcast %89 : vector<2x1x128xf32> to vector<2x128x128xf32>
    %91 = arith.mulf %79, %90 : vector<2x128x128xf32>
    %92 = vector.shape_cast %70 : vector<1x128xf32> to vector<1x1x128xf32>
    %93 = vector.broadcast %92 : vector<1x1x128xf32> to vector<2x128x128xf32>
    %94 = arith.mulf %91, %93 : vector<2x128x128xf32>
    %95 = vector.shape_cast %71 : vector<1x128xf32> to vector<1x1x128xf32>
    %96 = vector.broadcast %95 : vector<1x1x128xf32> to vector<2x128x128xf32>
    %97 = arith.addf %94, %96 : vector<2x128x128xf32>
    %98 = arith.negf %97 : vector<2x128x128xf32>
    %99 = math.exp %98 : vector<2x128x128xf32>
    %cst_52 = arith.constant 1.000000e+00 : f32
    %100 = vector.broadcast %cst_52 : f32 to vector<2x128x128xf32>
    %101 = arith.addf %100, %99 : vector<2x128x128xf32>
    %102 = arith.divf %100, %101 : vector<2x128x128xf32>
    %103 = arith.mulf %97, %102 : vector<2x128x128xf32>
    %c0_53 = arith.constant 0 : index
    %c0_54 = arith.constant 0 : index
    %104 = vector.load %arg14[%c0_53, %c0_54] : memref<1x128xf32, #tpu.memory_space<vmem>>, vector<1x128xf32>
    %cst_55 = arith.constant 0.000000e+00 : f32
    %105 = vector.broadcast %cst_55 : f32 to vector<2x1x128xf32>
    %106 = vector.extract_strided_slice %103 {offsets = [0, 0, 0], sizes = [2, 127, 128], strides = [1, 1, 1]} : vector<2x128x128xf32> to vector<2x127x128xf32>
    %107 = tpu.concatenate %105, %106 in 1 : vector<2x1x128xf32>, vector<2x127x128xf32> -> vector<2x128x128xf32>
    %108 = vector.extract_strided_slice %103 {offsets = [0, 1, 0], sizes = [2, 127, 128], strides = [1, 1, 1]} : vector<2x128x128xf32> to vector<2x127x128xf32>
    %109 = tpu.concatenate %108, %105 in 1 : vector<2x127x128xf32>, vector<2x1x128xf32> -> vector<2x128x128xf32>
    %110 = vector.shape_cast %103 : vector<2x128x128xf32> to vector<256x128xf32>
    %111 = arith.truncf %110 : vector<256x128xf32> to vector<256x128xbf16>
    %112 = vector.shape_cast %107 : vector<2x128x128xf32> to vector<256x128xf32>
    %113 = arith.truncf %112 : vector<256x128xf32> to vector<256x128xbf16>
    %114 = vector.shape_cast %109 : vector<2x128x128xf32> to vector<256x128xf32>
    %115 = arith.truncf %114 : vector<256x128xf32> to vector<256x128xbf16>
    %c0_56 = arith.constant 0 : index
    %c0_57 = arith.constant 0 : index
    %c0_58 = arith.constant 0 : index
    %116 = vector.load %arg13[%c0_56, %c0_57, %c0_58] : memref<3x128x128xbf16, #tpu.memory_space<vmem>>, vector<1x128x128xbf16>
    %117 = vector.shape_cast %116 : vector<1x128x128xbf16> to vector<128x128xbf16>
    %cst_59 = arith.constant dense<0.000000e+00> : vector<256x128xf32>
    %118 = tpu.matmul %113, %117, %cst_59 {dimension_numbers = #tpu.dot_dimension_numbers<[1], [0], [0], [1], [0, 0, 1, 1], [], []>} : vector<256x128xbf16>, vector<128x128xbf16>, vector<256x128xf32> -> vector<256x128xf32>
    %c1_60 = arith.constant 1 : index
    %c0_61 = arith.constant 0 : index
    %c0_62 = arith.constant 0 : index
    %119 = vector.load %arg13[%c1_60, %c0_61, %c0_62] : memref<3x128x128xbf16, #tpu.memory_space<vmem>>, vector<1x128x128xbf16>
    %120 = vector.shape_cast %119 : vector<1x128x128xbf16> to vector<128x128xbf16>
    %cst_63 = arith.constant dense<0.000000e+00> : vector<256x128xf32>
    %121 = tpu.matmul %111, %120, %cst_63 {dimension_numbers = #tpu.dot_dimension_numbers<[1], [0], [0], [1], [0, 0, 1, 1], [], []>} : vector<256x128xbf16>, vector<128x128xbf16>, vector<256x128xf32> -> vector<256x128xf32>
    %122 = arith.addf %118, %121 : vector<256x128xf32>
    %c2_64 = arith.constant 2 : index
    %c0_65 = arith.constant 0 : index
    %c0_66 = arith.constant 0 : index
    %123 = vector.load %arg13[%c2_64, %c0_65, %c0_66] : memref<3x128x128xbf16, #tpu.memory_space<vmem>>, vector<1x128x128xbf16>
    %124 = vector.shape_cast %123 : vector<1x128x128xbf16> to vector<128x128xbf16>
    %cst_67 = arith.constant dense<0.000000e+00> : vector<256x128xf32>
    %125 = tpu.matmul %115, %124, %cst_67 {dimension_numbers = #tpu.dot_dimension_numbers<[1], [0], [0], [1], [0, 0, 1, 1], [], []>} : vector<256x128xbf16>, vector<128x128xbf16>, vector<256x128xf32> -> vector<256x128xf32>
    %126 = arith.addf %122, %125 : vector<256x128xf32>
    %127 = vector.broadcast %104 : vector<1x128xf32> to vector<256x128xf32>
    %128 = arith.addf %126, %127 : vector<256x128xf32>
    %129 = vector.shape_cast %0 : vector<2x128x64xf32> to vector<256x64xf32>
    %130 = arith.truncf %129 : vector<256x64xf32> to vector<256x64xbf16>
    %c0_68 = arith.constant 0 : index
    %c0_69 = arith.constant 0 : index
    %131 = vector.load %arg15[%c0_68, %c0_69] : memref<64x128xbf16, #tpu.memory_space<vmem>>, vector<64x128xbf16>
    %cst_70 = arith.constant dense<0.000000e+00> : vector<256x128xf32>
    %132 = tpu.matmul %130, %131, %cst_70 {dimension_numbers = #tpu.dot_dimension_numbers<[1], [0], [0], [1], [0, 0, 1, 1], [], []>} : vector<256x64xbf16>, vector<64x128xbf16>, vector<256x128xf32> -> vector<256x128xf32>
    %c0_71 = arith.constant 0 : index
    %c0_72 = arith.constant 0 : index
    %133 = vector.load %arg16[%c0_71, %c0_72] : memref<1x128xf32, #tpu.memory_space<vmem>>, vector<1x128xf32>
    %134 = vector.broadcast %133 : vector<1x128xf32> to vector<256x128xf32>
    %135 = arith.addf %132, %134 : vector<256x128xf32>
    %136 = arith.addf %128, %135 : vector<256x128xf32>
    %137 = vector.shape_cast %136 : vector<256x128xf32> to vector<2x128x128xf32>
    %c0_73 = arith.constant 0 : index
    %c0_74 = arith.constant 0 : index
    %c0_75 = arith.constant 0 : index
    %138 = vector.load %arg17[%c0_73, %c0_74, %c0_75] : memref<2x128x128xf32, #tpu.memory_space<vmem>>, vector<2x128x128xf32>
    tpu.vector_store %arg17[%c0_73, %c0_74, %c0_75], %137 {strides = array<i32>} : memref<2x128x128xf32, #tpu.memory_space<vmem>>, vector<2x128x128xf32>,
    return
  }
  func.func @transform_0(%arg0: i32) -> (i32, i32, i32) {
    %c0_i32 = arith.constant 0 : i32
    %c0_i32_0 = arith.constant 0 : i32
    %c0_i32_1 = arith.constant 0 : i32
    return %arg0, %c0_i32, %c0_i32_0 : i32, i32, i32
  }
  func.func @transform_1(%arg0: i32) -> (i32, i32, i32) {
    %c0_i32 = arith.constant 0 : i32
    %c0_i32_0 = arith.constant 0 : i32
    %c0_i32_1 = arith.constant 0 : i32
    return %arg0, %c0_i32, %c0_i32_0 : i32, i32, i32
  }
  func.func @transform_2(%arg0: i32) -> (i32, i32) {
    %c0_i32 = arith.constant 0 : i32
    %c0_i32_0 = arith.constant 0 : i32
    %c0_i32_1 = arith.constant 0 : i32
    return %c0_i32, %c0_i32_0 : i32, i32
  }
  func.func @transform_3(%arg0: i32) -> (i32, i32) {
    %c0_i32 = arith.constant 0 : i32
    %c0_i32_0 = arith.constant 0 : i32
    %c0_i32_1 = arith.constant 0 : i32
    return %c0_i32, %c0_i32_0 : i32, i32
  }
  func.func @transform_4(%arg0: i32) -> (i32, i32) {
    %c0_i32 = arith.constant 0 : i32
    %c0_i32_0 = arith.constant 0 : i32
    %c0_i32_1 = arith.constant 0 : i32
    return %c0_i32, %c0_i32_0 : i32, i32
  }
  func.func @transform_5(%arg0: i32) -> (i32, i32) {
    %c0_i32 = arith.constant 0 : i32
    %c0_i32_0 = arith.constant 0 : i32
    %c0_i32_1 = arith.constant 0 : i32
    return %c0_i32, %c0_i32_0 : i32, i32
  }
  func.func @transform_6(%arg0: i32) -> (i32, i32, i32) {
    %c0_i32 = arith.constant 0 : i32
    %c0_i32_0 = arith.constant 0 : i32
    %c0_i32_1 = arith.constant 0 : i32
    %c0_i32_2 = arith.constant 0 : i32
    return %c0_i32, %c0_i32_0, %c0_i32_1 : i32, i32, i32
  }
  func.func @transform_7(%arg0: i32) -> (i32, i32) {
    %c0_i32 = arith.constant 0 : i32
    %c0_i32_0 = arith.constant 0 : i32
    %c0_i32_1 = arith.constant 0 : i32
    return %c0_i32, %c0_i32_0 : i32, i32
  }
  func.func @transform_8(%arg0: i32) -> (i32, i32) {
    %c0_i32 = arith.constant 0 : i32
    %c0_i32_0 = arith.constant 0 : i32
    %c0_i32_1 = arith.constant 0 : i32
    return %c0_i32, %c0_i32_0 : i32, i32
  }
  func.func @transform_9(%arg0: i32) -> (i32, i32) {
    %c0_i32 = arith.constant 0 : i32
    %c0_i32_0 = arith.constant 0 : i32
    %c0_i32_1 = arith.constant 0 : i32
    return %c0_i32, %c0_i32_0 : i32, i32
  }
  func.func @transform_10(%arg0: i32) -> (i32, i32) {
    %c0_i32 = arith.constant 0 : i32
    %c0_i32_0 = arith.constant 0 : i32
    %c0_i32_1 = arith.constant 0 : i32
    return %c0_i32, %c0_i32_0 : i32, i32
  }
  func.func @transform_11(%arg0: i32) -> (i32, i32) {
    %c0_i32 = arith.constant 0 : i32
    %c0_i32_0 = arith.constant 0 : i32
    %c0_i32_1 = arith.constant 0 : i32
    return %c0_i32, %c0_i32_0 : i32, i32
  }
  func.func @transform_12(%arg0: i32) -> (i32, i32, i32) {
    %c0_i32 = arith.constant 0 : i32
    %c0_i32_0 = arith.constant 0 : i32
    %c0_i32_1 = arith.constant 0 : i32
    %c0_i32_2 = arith.constant 0 : i32
    return %c0_i32, %c0_i32_0, %c0_i32_1 : i32, i32, i32
  }
  func.func @transform_13(%arg0: i32) -> (i32, i32) {
    %c0_i32 = arith.constant 0 : i32
    %c0_i32_0 = arith.constant 0 : i32
    %c0_i32_1 = arith.constant 0 : i32
    return %c0_i32, %c0_i32_0 : i32, i32
  }
  func.func @transform_14(%arg0: i32) -> (i32, i32) {
    %c0_i32 = arith.constant 0 : i32
    %c0_i32_0 = arith.constant 0 : i32
    %c0_i32_1 = arith.constant 0 : i32
    return %c0_i32, %c0_i32_0 : i32, i32
  }
  func.func @transform_15(%arg0: i32) -> (i32, i32) {
    %c0_i32 = arith.constant 0 : i32
    %c0_i32_0 = arith.constant 0 : i32
    %c0_i32_1 = arith.constant 0 : i32
    return %c0_i32, %c0_i32_0 : i32, i32
  }
  func.func @transform_16(%arg0: i32) -> (i32, i32, i32) {
    %c0_i32 = arith.constant 0 : i32
    %c0_i32_0 = arith.constant 0 : i32
    %c0_i32_1 = arith.constant 0 : i32
    return %arg0, %c0_i32, %c0_i32_0 : i32, i32, i32
  }
}

</mosaic_0001>

<llo_original>
// kernel: tpu_custom_call.1
$region0: #{tpu_custom_call.1}
  #allocation0 [shape = 'u32[]', space=smem, size = 0x4, offset = 0x4, fixed_abs, tag = 'smem constant byte address 0x4 - core index']
  #allocation1 [shape = 'u32[72,128]{1,0:T(1,128)}', space=vmem, size = 0x9000, scoped, tag = 'internal scratch']
  %s0 = inlined_call_operand.vmem [shape: f32[4,128,64], index: 0, kind: input, shape index: {}]
  %s1 = inlined_call_operand.vmem [shape: f32[2,2,128], index: 1, kind: input, shape index: {}]
  %s2 = inlined_call_operand.vmem [shape: f32[64,32], index: 2, kind: input, shape index: {}]
  %s3 = inlined_call_operand.vmem [shape: f32[32,64], index: 3, kind: input, shape index: {}]
  %s4 = inlined_call_operand.vmem [shape: f32[1,64], index: 4, kind: input, shape index: {}]
  %s5 = inlined_call_operand.vmem [shape: f32[1,64], index: 5, kind: input, shape index: {}]
  %s6 = inlined_call_operand.vmem [shape: bf16[3,64,128], index: 6, kind: input, shape index: {}]
  %s7 = inlined_call_operand.vmem [shape: f32[1,128], index: 7, kind: input, shape index: {}]
  %s8 = inlined_call_operand.vmem [shape: f32[128,32], index: 8, kind: input, shape index: {}]
  %s9 = inlined_call_operand.vmem [shape: f32[32,128], index: 9, kind: input, shape index: {}]
  %s10 = inlined_call_operand.vmem [shape: f32[1,128], index: 10, kind: input, shape index: {}]
  %s11 = inlined_call_operand.vmem [shape: f32[1,128], index: 11, kind: input, shape index: {}]
  %s12 = inlined_call_operand.vmem [shape: bf16[3,128,128], index: 12, kind: input, shape index: {}]
  %s13 = inlined_call_operand.vmem [shape: f32[1,128], index: 13, kind: input, shape index: {}]
  %s14 = inlined_call_operand.vmem [shape: bf16[64,128], index: 14, kind: input, shape index: {}]
  %s15 = inlined_call_operand.vmem [shape: f32[1,128], index: 15, kind: input, shape index: {}]
  %s16 = inlined_call_operand.hbm [shape: f32[4,128,128], index: 16, kind: output, shape index: {}]
  %s17 = sld [smem:[#allocation0]]
  $region97: #{tpu_custom_call.1} parent=0
    _
  %s19 = ssub.s32 1, %s17
  %s20 = scalar_select 0, %s19, %s17
  $region1: #{tpu_custom_call.1} parent=0
    #allocation2 [shape = 'u8[262144]{0}', space=vmem, size = 0x40000, scoped, tag = 'output window, operand 0']
    #allocation3 [shape = 's32[2]{0}', space=sflag, size = 0x8, scoped, tag = 'scoped memory for tpu_custom_call.1']
    %21 = vsyncpa [#allocation3], 0
    %s22 = scalar_lea.sflag [#allocation3], 1
    %23 = vsyncpa %s22, 0
    loop: start=0, step=1, limit=4
    $region2: #{tpu_custom_call.1} parent=1 // loop_pre_header
      _
    $region3: #{tpu_custom_call.1} parent=1 // loop_header
      %s25 = sphi 0, %s29
      %p26 = scmp.ge.s32.totalorder %s25, 4
      %s35 = sphi 0, %s37
      %s38 = sphi 0, %s35
      %s39 = sphi 0, %s38
      %s55 = sphi 0, %s39
      %s61 = sphi 0, %s63
      %s64 = sphi 0, %s61
      %s65 = sphi 0, %s64
      %s81 = sphi 0, %s65
      %s85 = sphi 0, %s85
      %s87 = sphi 0, %s85
      %s88 = sphi 0, %s87
      %s102 = sphi 0, %s88
      %s106 = sphi 0, %s106
      %s108 = sphi 0, %s106
      %s109 = sphi 0, %s108
      %s123 = sphi 0, %s109
      %s127 = sphi 0, %s127
      %s129 = sphi 0, %s127
      %s130 = sphi 0, %s129
      %s144 = sphi 0, %s130
      %s148 = sphi 0, %s148
      %s150 = sphi 0, %s148
      %s151 = sphi 0, %s150
      %s165 = sphi 0, %s151
      %s169 = sphi 0, %s169
      %s171 = sphi 0, %s169
      %s172 = sphi 0, %s171
      %s186 = sphi 0, %s172
      %s190 = sphi 0, %s190
      %s192 = sphi 0, %s190
      %s193 = sphi 0, %s192
      %s207 = sphi 0, %s193
      %s211 = sphi 0, %s211
      %s213 = sphi 0, %s211
      %s214 = sphi 0, %s213
      %s228 = sphi 0, %s214
      %s232 = sphi 0, %s232
      %s234 = sphi 0, %s232
      %s235 = sphi 0, %s234
      %s249 = sphi 0, %s235
      %s253 = sphi 0, %s253
      %s255 = sphi 0, %s253
      %s256 = sphi 0, %s255
      %s270 = sphi 0, %s256
      %s274 = sphi 0, %s274
      %s276 = sphi 0, %s274
      %s277 = sphi 0, %s276
      %s291 = sphi 0, %s277
      %s295 = sphi 0, %s295
      %s297 = sphi 0, %s295
      %s298 = sphi 0, %s297
      %s312 = sphi 0, %s298
      %s316 = sphi 0, %s316
      %s318 = sphi 0, %s316
      %s319 = sphi 0, %s318
      %s333 = sphi 0, %s319
      %s337 = sphi 0, %s337
      %s339 = sphi 0, %s337
      %s340 = sphi 0, %s339
      %s354 = sphi 0, %s340
      %s358 = sphi 0, %s358
      %s360 = sphi 0, %s358
      %s361 = sphi 0, %s360
      %s375 = sphi 0, %s361
      %s381 = sphi 0, %s383
      %s384 = sphi 0, %s381
      %s385 = sphi 0, %s384
      %s401 = sphi 0, %s385
    $region4: #{tpu_custom_call.1} parent=1 // loop_header_branch
      %28 = sbr.rel (%p26) target = $region8
    $region5: #{tpu_custom_call.1} parent=1 // loop_body
      %s30 = ssub.s32 %s25, 1
      %s31 = ssub.s32 %s25, 2
      %s32 = sadd.s32 %s25, 1
      %s33 = ssub.s32 %s25, %s32
      %p34 = scmp.eq.s32.totalorder %s33, 0
      %s36 = sadd.s32 %s35, 1
      %s37 = scalar_select %p34, %s35, %s36
      %p40 = pneg %p34
      %p41 = scmp.eq.s32.totalorder %s25, 1
      %p42 = por %p40, %p41
      %p43 = scmp.ne.s32.totalorder %s35, %s38
      %p44 = scmp.eq.s32.totalorder %s25, 0
      %p45 = por %p43, %p44
      %p46 = scmp.ne.s32.totalorder %s35, %s38
      %p47 = scmp.eq.s32.totalorder %s30, 1
      %p48 = por %p46, %p47
      %p49 = scmp.ne.s32.totalorder %s38, %s39
      %p50 = scmp.eq.s32.totalorder %s30, 0
      %p51 = por %p49, %p50
      %p52 = scmp.ne.s32.totalorder %s38, %s39
      %p53 = scmp.eq.s32.totalorder %s31, 1
      %p54 = por %p52, %p53
      %p56 = scmp.ne.s32.totalorder %s39, %s55
      %p57 = scmp.eq.s32.totalorder %s31, 0
      %p58 = por %p56, %p57
      %s59 = ssub.s32 %s25, %s32
      %p60 = scmp.eq.s32.totalorder %s59, 0
      %s62 = sadd.s32 %s61, 1
      %s63 = scalar_select %p60, %s61, %s62
      %p66 = pneg %p60
      %p67 = scmp.eq.s32.totalorder %s25, 1
      %p68 = por %p66, %p67
      %p69 = scmp.ne.s32.totalorder %s61, %s64
      %p70 = scmp.eq.s32.totalorder %s25, 0
      %p71 = por %p69, %p70
      %p72 = scmp.ne.s32.totalorder %s61, %s64
      %p73 = scmp.eq.s32.totalorder %s30, 1
      %p74 = por %p72, %p73
      %p75 = scmp.ne.s32.totalorder %s64, %s65
      %p76 = scmp.eq.s32.totalorder %s30, 0
      %p77 = por %p75, %p76
      %p78 = scmp.ne.s32.totalorder %s64, %s65
      %p79 = scmp.eq.s32.totalorder %s31, 1
      %p80 = por %p78, %p79
      %p82 = scmp.ne.s32.totalorder %s65, %s81
      %p83 = scmp.eq.s32.totalorder %s31, 0
      %p84 = por %p82, %p83
      %s86 = sadd.s32 %s85, 1
      %p89 = scmp.eq.s32.totalorder %s25, 1
      %p90 = scmp.ne.s32.totalorder %s85, %s87
      %p91 = scmp.eq.s32.totalorder %s25, 0
      %p92 = por %p90, %p91
      %p93 = scmp.ne.s32.totalorder %s85, %s87
      %p94 = scmp.eq.s32.totalorder %s30, 1
      %p95 = por %p93, %p94
      %p96 = scmp.ne.s32.totalorder %s87, %s88
      %p97 = scmp.eq.s32.totalorder %s30, 0
      %p98 = por %p96, %p97
      %p99 = scmp.ne.s32.totalorder %s87, %s88
      %p100 = scmp.eq.s32.totalorder %s31, 1
      %p101 = por %p99, %p100
      %p103 = scmp.ne.s32.totalorder %s88, %s102
      %p104 = scmp.eq.s32.totalorder %s31, 0
      %p105 = por %p103, %p104
      %s107 = sadd.s32 %s106, 1
      %p110 = scmp.eq.s32.totalorder %s25, 1
      %p111 = scmp.ne.s32.totalorder %s106, %s108
      %p112 = scmp.eq.s32.totalorder %s25, 0
      %p113 = por %p111, %p112
      %p114 = scmp.ne.s32.totalorder %s106, %s108
      %p115 = scmp.eq.s32.totalorder %s30, 1
      %p116 = por %p114, %p115
      %p117 = scmp.ne.s32.totalorder %s108, %s109
      %p118 = scmp.eq.s32.totalorder %s30, 0
      %p119 = por %p117, %p118
      %p120 = scmp.ne.s32.totalorder %s108, %s109
      %p121 = scmp.eq.s32.totalorder %s31, 1
      %p122 = por %p120, %p121
      %p124 = scmp.ne.s32.totalorder %s109, %s123
      %p125 = scmp.eq.s32.totalorder %s31, 0
      %p126 = por %p124, %p125
      %s128 = sadd.s32 %s127, 1
      %p131 = scmp.eq.s32.totalorder %s25, 1
      %p132 = scmp.ne.s32.totalorder %s127, %s129
      %p133 = scmp.eq.s32.totalorder %s25, 0
      %p134 = por %p132, %p133
      %p135 = scmp.ne.s32.totalorder %s127, %s129
      %p136 = scmp.eq.s32.totalorder %s30, 1
      %p137 = por %p135, %p136
      %p138 = scmp.ne.s32.totalorder %s129, %s130
      %p139 = scmp.eq.s32.totalorder %s30, 0
      %p140 = por %p138, %p139
      %p141 = scmp.ne.s32.totalorder %s129, %s130
      %p142 = scmp.eq.s32.totalorder %s31, 1
      %p143 = por %p141, %p142
      %p145 = scmp.ne.s32.totalorder %s130, %s144
      %p146 = scmp.eq.s32.totalorder %s31, 0
      %p147 = por %p145, %p146
      %s149 = sadd.s32 %s148, 1
      %p152 = scmp.eq.s32.totalorder %s25, 1
      %p153 = scmp.ne.s32.totalorder %s148, %s150
      %p154 = scmp.eq.s32.totalorder %s25, 0
      %p155 = por %p153, %p154
      %p156 = scmp.ne.s32.totalorder %s148, %s150
      %p157 = scmp.eq.s32.totalorder %s30, 1
      %p158 = por %p156, %p157
      %p159 = scmp.ne.s32.totalorder %s150, %s151
      %p160 = scmp.eq.s32.totalorder %s30, 0
      %p161 = por %p159, %p160
      %p162 = scmp.ne.s32.totalorder %s150, %s151
      %p163 = scmp.eq.s32.totalorder %s31, 1
      %p164 = por %p162, %p163
      %p166 = scmp.ne.s32.totalorder %s151, %s165
      %p167 = scmp.eq.s32.totalorder %s31, 0
      %p168 = por %p166, %p167
      %s170 = sadd.s32 %s169, 1
      %p173 = scmp.eq.s32.totalorder %s25, 1
      %p174 = scmp.ne.s32.totalorder %s169, %s171
      %p175 = scmp.eq.s32.totalorder %s25, 0
      %p176 = por %p174, %p175
      %p177 = scmp.ne.s32.totalorder %s169, %s171
      %p178 = scmp.eq.s32.totalorder %s30, 1
      %p179 = por %p177, %p178
      %p180 = scmp.ne.s32.totalorder %s171, %s172
      %p181 = scmp.eq.s32.totalorder %s30, 0
      %p182 = por %p180, %p181
      %p183 = scmp.ne.s32.totalorder %s171, %s172
      %p184 = scmp.eq.s32.totalorder %s31, 1
      %p185 = por %p183, %p184
      %p187 = scmp.ne.s32.totalorder %s172, %s186
      %p188 = scmp.eq.s32.totalorder %s31, 0
      %p189 = por %p187, %p188
      %s191 = sadd.s32 %s190, 1
      %p194 = scmp.eq.s32.totalorder %s25, 1
      %p195 = scmp.ne.s32.totalorder %s190, %s192
      %p196 = scmp.eq.s32.totalorder %s25, 0
      %p197 = por %p195, %p196
      %p198 = scmp.ne.s32.totalorder %s190, %s192
      %p199 = scmp.eq.s32.totalorder %s30, 1
      %p200 = por %p198, %p199
      %p201 = scmp.ne.s32.totalorder %s192, %s193
      %p202 = scmp.eq.s32.totalorder %s30, 0
      %p203 = por %p201, %p202
      %p204 = scmp.ne.s32.totalorder %s192, %s193
      %p205 = scmp.eq.s32.totalorder %s31, 1
      %p206 = por %p204, %p205
      %p208 = scmp.ne.s32.totalorder %s193, %s207
      %p209 = scmp.eq.s32.totalorder %s31, 0
      %p210 = por %p208, %p209
      %s212 = sadd.s32 %s211, 1
      %p215 = scmp.eq.s32.totalorder %s25, 1
      %p216 = scmp.ne.s32.totalorder %s211, %s213
      %p217 = scmp.eq.s32.totalorder %s25, 0
      %p218 = por %p216, %p217
      %p219 = scmp.ne.s32.totalorder %s211, %s213
      %p220 = scmp.eq.s32.totalorder %s30, 1
      %p221 = por %p219, %p220
      %p222 = scmp.ne.s32.totalorder %s213, %s214
      %p223 = scmp.eq.s32.totalorder %s30, 0
      %p224 = por %p222, %p223
      %p225 = scmp.ne.s32.totalorder %s213, %s214
      %p226 = scmp.eq.s32.totalorder %s31, 1
      %p227 = por %p225, %p226
      %p229 = scmp.ne.s32.totalorder %s214, %s228
      %p230 = scmp.eq.s32.totalorder %s31, 0
      %p231 = por %p229, %p230
      %s233 = sadd.s32 %s232, 1
      %p236 = scmp.eq.s32.totalorder %s25, 1
      %p237 = scmp.ne.s32.totalorder %s232, %s234
      %p238 = scmp.eq.s32.totalorder %s25, 0
      %p239 = por %p237, %p238
      %p240 = scmp.ne.s32.totalorder %s232, %s234
      %p241 = scmp.eq.s32.totalorder %s30, 1
      %p242 = por %p240, %p241
      %p243 = scmp.ne.s32.totalorder %s234, %s235
      %p244 = scmp.eq.s32.totalorder %s30, 0
      %p245 = por %p243, %p244
      %p246 = scmp.ne.s32.totalorder %s234, %s235
      %p247 = scmp.eq.s32.totalorder %s31, 1
      %p248 = por %p246, %p247
      %p250 = scmp.ne.s32.totalorder %s235, %s249
      %p251 = scmp.eq.s32.totalorder %s31, 0
      %p252 = por %p250, %p251
      %s254 = sadd.s32 %s253, 1
      %p257 = scmp.eq.s32.totalorder %s25, 1
      %p258 = scmp.ne.s32.totalorder %s253, %s255
      %p259 = scmp.eq.s32.totalorder %s25, 0
      %p260 = por %p258, %p259
      %p261 = scmp.ne.s32.totalorder %s253, %s255
      %p262 = scmp.eq.s32.totalorder %s30, 1
      %p263 = por %p261, %p262
      %p264 = scmp.ne.s32.totalorder %s255, %s256
      %p265 = scmp.eq.s32.totalorder %s30, 0
      %p266 = por %p264, %p265
      %p267 = scmp.ne.s32.totalorder %s255, %s256
      %p268 = scmp.eq.s32.totalorder %s31, 1
      %p269 = por %p267, %p268
      %p271 = scmp.ne.s32.totalorder %s256, %s270
      %p272 = scmp.eq.s32.totalorder %s31, 0
      %p273 = por %p271, %p272
      %s275 = sadd.s32 %s274, 1
      %p278 = scmp.eq.s32.totalorder %s25, 1
      %p279 = scmp.ne.s32.totalorder %s274, %s276
      %p280 = scmp.eq.s32.totalorder %s25, 0
      %p281 = por %p279, %p280
      %p282 = scmp.ne.s32.totalorder %s274, %s276
      %p283 = scmp.eq.s32.totalorder %s30, 1
      %p284 = por %p282, %p283
      %p285 = scmp.ne.s32.totalorder %s276, %s277
      %p286 = scmp.eq.s32.totalorder %s30, 0
      %p287 = por %p285, %p286
      %p288 = scmp.ne.s32.totalorder %s276, %s277
      %p289 = scmp.eq.s32.totalorder %s31, 1
      %p290 = por %p288, %p289
      %p292 = scmp.ne.s32.totalorder %s277, %s291
      %p293 = scmp.eq.s32.totalorder %s31, 0
      %p294 = por %p292, %p293
      %s296 = sadd.s32 %s295, 1
      %p299 = scmp.eq.s32.totalorder %s25, 1
      %p300 = scmp.ne.s32.totalorder %s295, %s297
      %p301 = scmp.eq.s32.totalorder %s25, 0
      %p302 = por %p300, %p301
      %p303 = scmp.ne.s32.totalorder %s295, %s297
      %p304 = scmp.eq.s32.totalorder %s30, 1
      %p305 = por %p303, %p304
      %p306 = scmp.ne.s32.totalorder %s297, %s298
      %p307 = scmp.eq.s32.totalorder %s30, 0
      %p308 = por %p306, %p307
      %p309 = scmp.ne.s32.totalorder %s297, %s298
      %p310 = scmp.eq.s32.totalorder %s31, 1
      %p311 = por %p309, %p310
      %p313 = scmp.ne.s32.totalorder %s298, %s312
      %p314 = scmp.eq.s32.totalorder %s31, 0
      %p315 = por %p313, %p314
      %s317 = sadd.s32 %s316, 1
      %p320 = scmp.eq.s32.totalorder %s25, 1
      %p321 = scmp.ne.s32.totalorder %s316, %s318
      %p322 = scmp.eq.s32.totalorder %s25, 0
      %p323 = por %p321, %p322
      %p324 = scmp.ne.s32.totalorder %s316, %s318
      %p325 = scmp.eq.s32.totalorder %s30, 1
      %p326 = por %p324, %p325
      %p327 = scmp.ne.s32.totalorder %s318, %s319
      %p328 = scmp.eq.s32.totalorder %s30, 0
      %p329 = por %p327, %p328
      %p330 = scmp.ne.s32.totalorder %s318, %s319
      %p331 = scmp.eq.s32.totalorder %s31, 1
      %p332 = por %p330, %p331
      %p334 = scmp.ne.s32.totalorder %s319, %s333
      %p335 = scmp.eq.s32.totalorder %s31, 0
      %p336 = por %p334, %p335
      %s338 = sadd.s32 %s337, 1
      %p341 = scmp.eq.s32.totalorder %s25, 1
      %p342 = scmp.ne.s32.totalorder %s337, %s339
      %p343 = scmp.eq.s32.totalorder %s25, 0
      %p344 = por %p342, %p343
      %p345 = scmp.ne.s32.totalorder %s337, %s339
      %p346 = scmp.eq.s32.totalorder %s30, 1
      %p347 = por %p345, %p346
      %p348 = scmp.ne.s32.totalorder %s339, %s340
      %p349 = scmp.eq.s32.totalorder %s30, 0
      %p350 = por %p348, %p349
      %p351 = scmp.ne.s32.totalorder %s339, %s340
      %p352 = scmp.eq.s32.totalorder %s31, 1
      %p353 = por %p351, %p352
      %p355 = scmp.ne.s32.totalorder %s340, %s354
      %p356 = scmp.eq.s32.totalorder %s31, 0
      %p357 = por %p355, %p356
      %s359 = sadd.s32 %s358, 1
      %p362 = scmp.eq.s32.totalorder %s25, 1
      %p363 = scmp.ne.s32.totalorder %s358, %s360
      %p364 = scmp.eq.s32.totalorder %s25, 0
      %p365 = por %p363, %p364
      %p366 = scmp.ne.s32.totalorder %s358, %s360
      %p367 = scmp.eq.s32.totalorder %s30, 1
      %p368 = por %p366, %p367
      %p369 = scmp.ne.s32.totalorder %s360, %s361
      %p370 = scmp.eq.s32.totalorder %s30, 0
      %p371 = por %p369, %p370
      %p372 = scmp.ne.s32.totalorder %s360, %s361
      %p373 = scmp.eq.s32.totalorder %s31, 1
      %p374 = por %p372, %p373
      %p376 = scmp.ne.s32.totalorder %s361, %s375
      %p377 = scmp.eq.s32.totalorder %s31, 0
      %p378 = por %p376, %p377
      %s379 = ssub.s32 %s25, %s32
      %p380 = scmp.eq.s32.totalorder %s379, 0
      %s382 = sadd.s32 %s381, 1
      %s383 = scalar_select %p380, %s381, %s382
      %p386 = pneg %p380
      %p387 = scmp.eq.s32.totalorder %s25, 1
      %p388 = por %p386, %p387
      %p389 = scmp.ne.s32.totalorder %s381, %s384
      %p390 = scmp.eq.s32.totalorder %s25, 0
      %p391 = por %p389, %p390
      %p392 = scmp.ne.s32.totalorder %s381, %s384
      %p393 = scmp.eq.s32.totalorder %s30, 1
      %p394 = por %p392, %p393
      %p395 = scmp.ne.s32.totalorder %s384, %s385
      %p396 = scmp.eq.s32.totalorder %s30, 0
      %p397 = por %p395, %p396
      %p398 = scmp.ne.s32.totalorder %s384, %s385
      %p399 = scmp.eq.s32.totalorder %s31, 1
      %p400 = por %p398, %p399
      %p402 = scmp.ne.s32.totalorder %s385, %s401
      %p403 = scmp.eq.s32.totalorder %s31, 0
      %p404 = por %p402, %p403
      %p405 = scmp.le.s32.totalorder 1, %s25
      %p406 = scmp.lt.s32.totalorder %s25, 3
      %p407 = pnand %p405, %p406
      %p408 = pneg %p407
      // Predicated region
      $region9: #{tpu_custom_call.1} parent=5 // pred_check
        _
      $region10: #{tpu_custom_call.1} parent=5 // pred_check_branch
        %410 = sbr.rel (%p407) target = $region12
      $region11: #{tpu_custom_call.1} parent=5 // pred_region
        %s411 = ssub.s32 %s25, 1
        // Predicated region
        $region13: #{tpu_custom_call.1} parent=11 // pred_check
          %p412 = pneg %p98
        $region14: #{tpu_custom_call.1} parent=11 // pred_check_branch
          %414 = sbr.rel (%p412) target = $region16
        $region15: #{tpu_custom_call.1} parent=11 // pred_region
          _
        $region16: #{tpu_custom_call.1} parent=11 // pred_fallthru
          _
        // Predicated region
        $region17: #{tpu_custom_call.1} parent=11 // pred_check
          %p415 = pneg %p119
        $region18: #{tpu_custom_call.1} parent=11 // pred_check_branch
          %417 = sbr.rel (%p415) target = $region20
        $region19: #{tpu_custom_call.1} parent=11 // pred_region
          _
        $region20: #{tpu_custom_call.1} parent=11 // pred_fallthru
          _
        // Predicated region
        $region21: #{tpu_custom_call.1} parent=11 // pred_check
          %p418 = pneg %p140
        $region22: #{tpu_custom_call.1} parent=11 // pred_check_branch
          %420 = sbr.rel (%p418) target = $region24
        $region23: #{tpu_custom_call.1} parent=11 // pred_region
          _
        $region24: #{tpu_custom_call.1} parent=11 // pred_fallthru
          _
        // Predicated region
        $region25: #{tpu_custom_call.1} parent=11 // pred_check
          %p421 = pneg %p161
        $region26: #{tpu_custom_call.1} parent=11 // pred_check_branch
          %423 = sbr.rel (%p421) target = $region28
        $region27: #{tpu_custom_call.1} parent=11 // pred_region
          _
        $region28: #{tpu_custom_call.1} parent=11 // pred_fallthru
          _
        // Predicated region
        $region29: #{tpu_custom_call.1} parent=11 // pred_check
          %p424 = pneg %p182
        $region30: #{tpu_custom_call.1} parent=11 // pred_check_branch
          %426 = sbr.rel (%p424) target = $region32
        $region31: #{tpu_custom_call.1} parent=11 // pred_region
          _
        $region32: #{tpu_custom_call.1} parent=11 // pred_fallthru
          _
        // Predicated region
        $region33: #{tpu_custom_call.1} parent=11 // pred_check
          %p427 = pneg %p203
        $region34: #{tpu_custom_call.1} parent=11 // pred_check_branch
          %429 = sbr.rel (%p427) target = $region36
        $region35: #{tpu_custom_call.1} parent=11 // pred_region
          _
        $region36: #{tpu_custom_call.1} parent=11 // pred_fallthru
          _
        // Predicated region
        $region37: #{tpu_custom_call.1} parent=11 // pred_check
          %p430 = pneg %p224
        $region38: #{tpu_custom_call.1} parent=11 // pred_check_branch
          %432 = sbr.rel (%p430) target = $region40
        $region39: #{tpu_custom_call.1} parent=11 // pred_region
          _
        $region40: #{tpu_custom_call.1} parent=11 // pred_fallthru
          _
        // Predicated region
        $region41: #{tpu_custom_call.1} parent=11 // pred_check
          %p433 = pneg %p245
        $region42: #{tpu_custom_call.1} parent=11 // pred_check_branch
          %435 = sbr.rel (%p433) target = $region44
        $region43: #{tpu_custom_call.1} parent=11 // pred_region
          _
        $region44: #{tpu_custom_call.1} parent=11 // pred_fallthru
          _
        // Predicated region
        $region45: #{tpu_custom_call.1} parent=11 // pred_check
          %p436 = pneg %p266
        $region46: #{tpu_custom_call.1} parent=11 // pred_check_branch
          %438 = sbr.rel (%p436) target = $region48
        $region47: #{tpu_custom_call.1} parent=11 // pred_region
          _
        $region48: #{tpu_custom_call.1} parent=11 // pred_fallthru
          _
        // Predicated region
        $region49: #{tpu_custom_call.1} parent=11 // pred_check
          %p439 = pneg %p287
        $region50: #{tpu_custom_call.1} parent=11 // pred_check_branch
          %441 = sbr.rel (%p439) target = $region52
        $region51: #{tpu_custom_call.1} parent=11 // pred_region
          _
        $region52: #{tpu_custom_call.1} parent=11 // pred_fallthru
          _
        // Predicated region
        $region53: #{tpu_custom_call.1} parent=11 // pred_check
          %p442 = pneg %p308
        $region54: #{tpu_custom_call.1} parent=11 // pred_check_branch
          %444 = sbr.rel (%p442) target = $region56
        $region55: #{tpu_custom_call.1} parent=11 // pred_region
          _
        $region56: #{tpu_custom_call.1} parent=11 // pred_fallthru
          _
        // Predicated region
        $region57: #{tpu_custom_call.1} parent=11 // pred_check
          %p445 = pneg %p329
        $region58: #{tpu_custom_call.1} parent=11 // pred_check_branch
          %447 = sbr.rel (%p445) target = $region60
        $region59: #{tpu_custom_call.1} parent=11 // pred_region
          _
        $region60: #{tpu_custom_call.1} parent=11 // pred_fallthru
          _
        // Predicated region
        $region61: #{tpu_custom_call.1} parent=11 // pred_check
          %p448 = pneg %p350
        $region62: #{tpu_custom_call.1} parent=11 // pred_check_branch
          %450 = sbr.rel (%p448) target = $region64
        $region63: #{tpu_custom_call.1} parent=11 // pred_region
          _
        $region64: #{tpu_custom_call.1} parent=11 // pred_fallthru
          _
        // Predicated region
        $region65: #{tpu_custom_call.1} parent=11 // pred_check
          %p451 = pneg %p371
        $region66: #{tpu_custom_call.1} parent=11 // pred_check_branch
          %453 = sbr.rel (%p451) target = $region68
        $region67: #{tpu_custom_call.1} parent=11 // pred_region
          _
        $region68: #{tpu_custom_call.1} parent=11 // pred_fallthru
          _
      $region12: #{tpu_custom_call.1} parent=5 // pred_fallthru
        _
      %p454 = scmp.lt.s32.totalorder %s25, 2
      // Predicated region
      $region69: #{tpu_custom_call.1} parent=5 // pred_check
        %p455 = pneg %p454
      $region70: #{tpu_custom_call.1} parent=5 // pred_check_branch
        %457 = sbr.rel (%p455) target = $region72
      $region71: #{tpu_custom_call.1} parent=5 // pred_region
        // Predicated region
        $region73: #{tpu_custom_call.1} parent=71 // pred_check
          %p458 = pneg %p45
        $region74: #{tpu_custom_call.1} parent=71 // pred_check_branch
          %460 = sbr.rel (%p458) target = $region76
        $region75: #{tpu_custom_call.1} parent=71 // pred_region
          %s461 = smul.u32 2, %s25
          %p462 = scmp.lt.s32.totalorder %s461, 3
          %s463 = scalar_select %p462, %s461, 3
          %s464 = smul.addr %s463, 16
          %s465 = smul.addr %s464, 8
          %s466 = scalar_lea.vmem %s0, %s465
          %s467 = smul.u32 2, %s25
        $region76: #{tpu_custom_call.1} parent=71 // pred_fallthru
          _
        // Predicated region
        $region77: #{tpu_custom_call.1} parent=71 // pred_check
          %p468 = pneg %p71
        $region78: #{tpu_custom_call.1} parent=71 // pred_check_branch
          %470 = sbr.rel (%p468) target = $region80
        $region79: #{tpu_custom_call.1} parent=71 // pred_region
          %p471 = scmp.lt.s32.totalorder %s25, 1
          %s472 = scalar_select %p471, %s25, 1
          %s473 = smul.addr %s472, 2
          %s474 = scalar_lea.vmem %s1, %s473
        $region80: #{tpu_custom_call.1} parent=71 // pred_fallthru
          _
      $region72: #{tpu_custom_call.1} parent=5 // pred_fallthru
        _
      %p475 = scmp.le.s32.totalorder 1, %s25
      %p476 = scmp.lt.s32.totalorder %s25, 3
      %p477 = pnand %p475, %p476
      %p478 = pneg %p477
      // Predicated region
      $region81: #{tpu_custom_call.1} parent=5 // pred_check
        _
      $region82: #{tpu_custom_call.1} parent=5 // pred_check_branch
        %480 = sbr.rel (%p477) target = $region84
      $region83: #{tpu_custom_call.1} parent=5 // pred_region
        %s481 = ssub.s32 %s25, 1
        %s482 = smul.u32 2, %s30
        %p483 = scmp.lt.s32.totalorder %s482, 3
        %s484 = scalar_select %p483, %s482, 3
        %s485 = smul.addr %s484, 16
        %s486 = smul.addr %s485, 8
        %s487 = scalar_lea.vmem %s0, %s486
        %p488 = pneg %p51
        %p489 = pneg %p48
        %p490 = scmp.lt.s32.totalorder %s30, 1
        %s491 = scalar_select %p490, %s30, 1
        %s492 = smul.addr %s491, 2
        %s493 = scalar_lea.vmem %s1, %s492
        %p494 = pneg %p77
        %p495 = pneg %p74
        %p496 = pneg %p98
        %p497 = pneg %p95
        %p498 = pneg %p119
        %p499 = pneg %p116
        %p500 = pneg %p140
        %p501 = pneg %p137
        %p502 = pneg %p161
        %p503 = pneg %p158
        %p504 = pneg %p182
        %p505 = pneg %p179
        %p506 = pneg %p203
        %p507 = pneg %p200
        %p508 = pneg %p224
        %p509 = pneg %p221
        %p510 = pneg %p245
        %p511 = pneg %p242
        %p512 = pneg %p266
        %p513 = pneg %p263
        %p514 = pneg %p287
        %p515 = pneg %p284
        %p516 = pneg %p308
        %p517 = pneg %p305
        %p518 = pneg %p329
        %p519 = pneg %p326
        %p520 = pneg %p350
        %p521 = pneg %p347
        %p522 = pneg %p371
        %p523 = pneg %p368
        %p524 = pneg %p397
        %p525 = pneg %p394
        %s526 = sand.u32 %s384, 1
        %s527 = scalar_lea.sflag [#allocation3], %s526
        %s528 = sand.u32 %s384, 1
        %s529 = smul.addr %s528, 256
        %s530 = scalar_lea.vmem [#allocation2], %s529
        %s531 = smul.u32 2, %s30
        %p532 = scmp.lt.s32.totalorder %s531, 3
        %s533 = scalar_select %p532, %s531, 3
        %s534 = smul.addr %s533, 16
        %s535 = smul.addr %s534, 8
        %s536 = scalar_lea.vmem %s0, %s535
        %s537 = smul.u32 2, %s30
        %p538 = scmp.lt.s32.totalorder %s30, 1
        %s539 = scalar_select %p538, %s30, 1
        %s540 = smul.addr %s539, 2
        %s541 = scalar_lea.vmem %s1, %s540
        %s542 = smul.u32 2, %s30
        %v544 = vld [vmem:[%s536] sm:$0xff]
        %v545 = vld [vmem:[%s536 + $0x8] sm:$0xff]
        %v546 = vld [vmem:[%s536 + $0x10] sm:$0xff]
        %v547 = vld [vmem:[%s536 + $0x18] sm:$0xff]
        %v548 = vld [vmem:[%s536 + $0x20] sm:$0xff]
        %v549 = vld [vmem:[%s536 + $0x28] sm:$0xff]
        %v550 = vld [vmem:[%s536 + $0x30] sm:$0xff]
        %v551 = vld [vmem:[%s536 + $0x38] sm:$0xff]
        %v552 = vld [vmem:[%s536 + $0x40] sm:$0xff]
        %v553 = vld [vmem:[%s536 + $0x48] sm:$0xff]
        %v554 = vld [vmem:[%s536 + $0x50] sm:$0xff]
        %v555 = vld [vmem:[%s536 + $0x58] sm:$0xff]
        %v556 = vld [vmem:[%s536 + $0x60] sm:$0xff]
        %v557 = vld [vmem:[%s536 + $0x68] sm:$0xff]
        %v558 = vld [vmem:[%s536 + $0x70] sm:$0xff]
        %v559 = vld [vmem:[%s536 + $0x78] sm:$0xff]
        %v560 = vld [vmem:[%s536 + $0x80] sm:$0xff]
        %v561 = vld [vmem:[%s536 + $0x88] sm:$0xff]
        %v562 = vld [vmem:[%s536 + $0x90] sm:$0xff]
        %v563 = vld [vmem:[%s536 + $0x98] sm:$0xff]
        %v564 = vld [vmem:[%s536 + $0xa0] sm:$0xff]
        %v565 = vld [vmem:[%s536 + $0xa8] sm:$0xff]
        %v566 = vld [vmem:[%s536 + $0xb0] sm:$0xff]
        %v567 = vld [vmem:[%s536 + $0xb8] sm:$0xff]
        %v568 = vld [vmem:[%s536 + $0xc0] sm:$0xff]
        %v569 = vld [vmem:[%s536 + $0xc8] sm:$0xff]
        %v570 = vld [vmem:[%s536 + $0xd0] sm:$0xff]
        %v571 = vld [vmem:[%s536 + $0xd8] sm:$0xff]
        %v572 = vld [vmem:[%s536 + $0xe0] sm:$0xff]
        %v573 = vld [vmem:[%s536 + $0xe8] sm:$0xff]
        %v574 = vld [vmem:[%s536 + $0xf0] sm:$0xff]
        %v575 = vld [vmem:[%s536 + $0xf8] sm:$0xff]
        %v576 = vld [vmem:[%s2] sm:$0xff]
        %v577 = vld [vmem:[%s2 + $0x8] sm:$0xff]
        %v578 = vld [vmem:[%s2 + $0x10] sm:$0xff]
        %v579 = vld [vmem:[%s2 + $0x18] sm:$0xff]
        %v580 = vld [vmem:[%s2 + $0x20] sm:$0xff]
        %v581 = vld [vmem:[%s2 + $0x28] sm:$0xff]
        %v582 = vld [vmem:[%s2 + $0x30] sm:$0xff]
        %v583 = vld [vmem:[%s2 + $0x38] sm:$0xff]
        %v584 = vld [vmem:[%s3] sm:$0xff]
        %v585 = vld [vmem:[%s3 + $0x8] sm:$0xff]
        %v586 = vld [vmem:[%s3 + $0x10] sm:$0xff]
        %v587 = vld [vmem:[%s3 + $0x18] sm:$0xff]
        %v588 = vld [vmem:[%s4] sm:$0x1]
        %v589 = vld [vmem:[%s5] sm:$0x1]
        %vm590 = vcmask 523264
        %v591 = vsel %vm590, %v544, 0.0
        %v592 = vsel %vm590, %v545, 0.0
        %v593 = vadd.f32 %v591, %v592
        %v594 = vsel %vm590, %v546, 0.0
        %v595 = vadd.f32 %v593, %v594
        %v596 = vsel %vm590, %v547, 0.0
        %v597 = vadd.f32 %v595, %v596
        %v598 = vsel %vm590, %v548, 0.0
        %v599 = vadd.f32 %v597, %v598
        %v600 = vsel %vm590, %v549, 0.0
        %v601 = vadd.f32 %v599, %v600
        %v602 = vsel %vm590, %v550, 0.0
        %v603 = vadd.f32 %v601, %v602
        %v604 = vsel %vm590, %v551, 0.0
        %v605 = vadd.f32 %v603, %v604
        %v606 = vsel %vm590, %v552, 0.0
        %v607 = vadd.f32 %v605, %v606
        %v608 = vsel %vm590, %v553, 0.0
        %v609 = vadd.f32 %v607, %v608
        %v610 = vsel %vm590, %v554, 0.0
        %v611 = vadd.f32 %v609, %v610
        %v612 = vsel %vm590, %v555, 0.0
        %v613 = vadd.f32 %v611, %v612
        %v614 = vsel %vm590, %v556, 0.0
        %v615 = vadd.f32 %v613, %v614
        %v616 = vsel %vm590, %v557, 0.0
        %v617 = vadd.f32 %v615, %v616
        %v618 = vsel %vm590, %v558, 0.0
        %v619 = vadd.f32 %v617, %v618
        %v620 = vsel %vm590, %v559, 0.0
        %v621 = vadd.f32 %v619, %v620
        %v622 = vrot.slane %v621, 4
        %v623 = vadd.f32 %v621, %v622
        %v624 = vrot.slane %v623, 2
        %v625 = vadd.f32 %v623, %v624
        %v626 = vrot.slane %v625, 1
        %v627 = vadd.f32 %v625, %v626
        %v628 = vsel %vm590, %v560, 0.0
        %v629 = vsel %vm590, %v561, 0.0
        %v630 = vadd.f32 %v628, %v629
        %v631 = vsel %vm590, %v562, 0.0
        %v632 = vadd.f32 %v630, %v631
        %v633 = vsel %vm590, %v563, 0.0
        %v634 = vadd.f32 %v632, %v633
        %v635 = vsel %vm590, %v564, 0.0
        %v636 = vadd.f32 %v634, %v635
        %v637 = vsel %vm590, %v565, 0.0
        %v638 = vadd.f32 %v636, %v637
        %v639 = vsel %vm590, %v566, 0.0
        %v640 = vadd.f32 %v638, %v639
        %v641 = vsel %vm590, %v567, 0.0
        %v642 = vadd.f32 %v640, %v641
        %v643 = vsel %vm590, %v568, 0.0
        %v644 = vadd.f32 %v642, %v643
        %v645 = vsel %vm590, %v569, 0.0
        %v646 = vadd.f32 %v644, %v645
        %v647 = vsel %vm590, %v570, 0.0
        %v648 = vadd.f32 %v646, %v647
        %v649 = vsel %vm590, %v571, 0.0
        %v650 = vadd.f32 %v648, %v649
        %v651 = vsel %vm590, %v572, 0.0
        %v652 = vadd.f32 %v650, %v651
        %v653 = vsel %vm590, %v573, 0.0
        %v654 = vadd.f32 %v652, %v653
        %v655 = vsel %vm590, %v574, 0.0
        %v656 = vadd.f32 %v654, %v655
        %v657 = vsel %vm590, %v575, 0.0
        %v658 = vadd.f32 %v656, %v657
        %v659 = vrot.slane %v658, 4
        %v660 = vadd.f32 %v658, %v659
        %v661 = vrot.slane %v660, 2
        %v662 = vadd.f32 %v660, %v661
        %v663 = vrot.slane %v662, 1
        %v664 = vadd.f32 %v662, %v663
        %vm667 = vcmask 1041409
        %v668 = vsel %vm667, %v664, %v627
        %v669 = vsel %vm590, %v668, 0
        %671 = vmatpush.msra.mxu0 0.0
        %672 = vmatpush.msra.mxu0 0.0
        %673 = vmatpush.msra.mxu0 0.0
        %674 = vmatpush.msra.mxu0 0.0
        %675 = vmatpush.msra.mxu0 0.0
        %676 = vmatpush.msra.mxu0 0.0
        %677 = vmatpush.msra.mxu0 0.0
        %678 = vmatpush.msra.mxu0 0.0
        %679 = vmatpush.msra.mxu0 %v583
        %680 = vmatpush.msra.mxu0 %v582
        %681 = vmatpush.msra.mxu0 %v581
        %682 = vmatpush.msra.mxu0 %v580
        %683 = vmatpush.msra.mxu0 %v579
        %684 = vmatpush.msra.mxu0 %v578
        %685 = vmatpush.msra.mxu0 %v577
        %686 = vmatpush.msra.mxu0 %v576
        %687 = vmatmul.f32.gmra.mxu0 %v669
        %v688 = vpop.f32.mrf.mxu0
        %v689 = vadd.f32 0.0, %v688
        %690 = vdwg.mxu0
        %v691 = vrcp.pop 256.0
        %v692 = vmul.f32 256.0, %v691
        %v693 = vsub.f32 1.0, %v692
        %v694 = vmul.f32 %v691, %v693
        %v695 = vadd.f32 %v691, %v694
        %vm696 = vweird.f32 %v691
        %v697 = vsel %vm696, %v691, %v695
        %v698 = vmul.f32 %v689, %v697
        %vm699 = vcmask 261120
        %v701 = vsel %vm699, %v698, 0
        %703 = vmatpush.msra.mxu0 0.0
        %704 = vmatpush.msra.mxu0 0.0
        %705 = vmatpush.msra.mxu0 0.0
        %706 = vmatpush.msra.mxu0 0.0
        %707 = vmatpush.msra.mxu0 0.0
        %708 = vmatpush.msra.mxu0 0.0
        %709 = vmatpush.msra.mxu0 0.0
        %710 = vmatpush.msra.mxu0 0.0
        %711 = vmatpush.msra.mxu0 0.0
        %712 = vmatpush.msra.mxu0 0.0
        %713 = vmatpush.msra.mxu0 0.0
        %714 = vmatpush.msra.mxu0 0.0
        %715 = vmatpush.msra.mxu0 %v587
        %716 = vmatpush.msra.mxu0 %v586
        %717 = vmatpush.msra.mxu0 %v585
        %718 = vmatpush.msra.mxu0 %v584
        %719 = vmatmul.f32.gmra.mxu0 %v701
        %v720 = vpop.f32.mrf.mxu0
        %v721 = vadd.f32 0.0, %v720
        %722 = vdwg.mxu0
        %v724 = vrot.slane %v721, 1
        %v725 = vperm.slane %v721, 0
        %v726 = vperm.slane %v724, 0
        %v729 = vsub.f32 %v544, %v725
        %v730 = vsub.f32 %v545, %v725
        %v731 = vsub.f32 %v546, %v725
        %v732 = vsub.f32 %v547, %v725
        %v733 = vsub.f32 %v548, %v725
        %v734 = vsub.f32 %v549, %v725
        %v735 = vsub.f32 %v550, %v725
        %v736 = vsub.f32 %v551, %v725
        %v737 = vsub.f32 %v552, %v725
        %v738 = vsub.f32 %v553, %v725
        %v739 = vsub.f32 %v554, %v725
        %v740 = vsub.f32 %v555, %v725
        %v741 = vsub.f32 %v556, %v725
        %v742 = vsub.f32 %v557, %v725
        %v743 = vsub.f32 %v558, %v725
        %v744 = vsub.f32 %v559, %v725
        %v745 = vsub.f32 %v560, %v726
        %v746 = vsub.f32 %v561, %v726
        %v747 = vsub.f32 %v562, %v726
        %v748 = vsub.f32 %v563, %v726
        %v749 = vsub.f32 %v564, %v726
        %v750 = vsub.f32 %v565, %v726
        %v751 = vsub.f32 %v566, %v726
        %v752 = vsub.f32 %v567, %v726
        %v753 = vsub.f32 %v568, %v726
        %v754 = vsub.f32 %v569, %v726
        %v755 = vsub.f32 %v570, %v726
        %v756 = vsub.f32 %v571, %v726
        %v757 = vsub.f32 %v572, %v726
        %v758 = vsub.f32 %v573, %v726
        %v759 = vsub.f32 %v574, %v726
        %v760 = vsub.f32 %v575, %v726
        %v761 = vmul.f32 %v729, %v729
        %v762 = vmul.f32 %v730, %v730
        %v763 = vmul.f32 %v731, %v731
        %v764 = vmul.f32 %v732, %v732
        %v765 = vmul.f32 %v733, %v733
        %v766 = vmul.f32 %v734, %v734
        %v767 = vmul.f32 %v735, %v735
        %v768 = vmul.f32 %v736, %v736
        %v769 = vmul.f32 %v737, %v737
        %v770 = vmul.f32 %v738, %v738
        %v771 = vmul.f32 %v739, %v739
        %v772 = vmul.f32 %v740, %v740
        %v773 = vmul.f32 %v741, %v741
        %v774 = vmul.f32 %v742, %v742
        %v775 = vmul.f32 %v743, %v743
        %v776 = vmul.f32 %v744, %v744
        %v777 = vmul.f32 %v745, %v745
        %v778 = vmul.f32 %v746, %v746
        %v779 = vmul.f32 %v747, %v747
        %v780 = vmul.f32 %v748, %v748
        %v781 = vmul.f32 %v749, %v749
        %v782 = vmul.f32 %v750, %v750
        %v783 = vmul.f32 %v751, %v751
        %v784 = vmul.f32 %v752, %v752
        %v785 = vmul.f32 %v753, %v753
        %v786 = vmul.f32 %v754, %v754
        %v787 = vmul.f32 %v755, %v755
        %v788 = vmul.f32 %v756, %v756
        %v789 = vmul.f32 %v757, %v757
        %v790 = vmul.f32 %v758, %v758
        %v791 = vmul.f32 %v759, %v759
        %v792 = vmul.f32 %v760, %v760
        %v793 = vsel %vm590, %v761, 0.0
        %v794 = vsel %vm590, %v762, 0.0
        %v795 = vadd.f32 %v793, %v794
        %v796 = vsel %vm590, %v763, 0.0
        %v797 = vadd.f32 %v795, %v796
        %v798 = vsel %vm590, %v764, 0.0
        %v799 = vadd.f32 %v797, %v798
        %v800 = vsel %vm590, %v765, 0.0
        %v801 = vadd.f32 %v799, %v800
        %v802 = vsel %vm590, %v766, 0.0
        %v803 = vadd.f32 %v801, %v802
        %v804 = vsel %vm590, %v767, 0.0
        %v805 = vadd.f32 %v803, %v804
        %v806 = vsel %vm590, %v768, 0.0
        %v807 = vadd.f32 %v805, %v806
        %v808 = vsel %vm590, %v769, 0.0
        %v809 = vadd.f32 %v807, %v808
        %v810 = vsel %vm590, %v770, 0.0
        %v811 = vadd.f32 %v809, %v810
        %v812 = vsel %vm590, %v771, 0.0
        %v813 = vadd.f32 %v811, %v812
        %v814 = vsel %vm590, %v772, 0.0
        %v815 = vadd.f32 %v813, %v814
        %v816 = vsel %vm590, %v773, 0.0
        %v817 = vadd.f32 %v815, %v816
        %v818 = vsel %vm590, %v774, 0.0
        %v819 = vadd.f32 %v817, %v818
        %v820 = vsel %vm590, %v775, 0.0
        %v821 = vadd.f32 %v819, %v820
        %v822 = vsel %vm590, %v776, 0.0
        %v823 = vadd.f32 %v821, %v822
        %v824 = vrot.slane %v823, 4
        %v825 = vadd.f32 %v823, %v824
        %v826 = vrot.slane %v825, 2
        %v827 = vadd.f32 %v825, %v826
        %v828 = vrot.slane %v827, 1
        %v829 = vadd.f32 %v827, %v828
        %v830 = vsel %vm590, %v777, 0.0
        %v831 = vsel %vm590, %v778, 0.0
        %v832 = vadd.f32 %v830, %v831
        %v833 = vsel %vm590, %v779, 0.0
        %v834 = vadd.f32 %v832, %v833
        %v835 = vsel %vm590, %v780, 0.0
        %v836 = vadd.f32 %v834, %v835
        %v837 = vsel %vm590, %v781, 0.0
        %v838 = vadd.f32 %v836, %v837
        %v839 = vsel %vm590, %v782, 0.0
        %v840 = vadd.f32 %v838, %v839
        %v841 = vsel %vm590, %v783, 0.0
        %v842 = vadd.f32 %v840, %v841
        %v843 = vsel %vm590, %v784, 0.0
        %v844 = vadd.f32 %v842, %v843
        %v845 = vsel %vm590, %v785, 0.0
        %v846 = vadd.f32 %v844, %v845
        %v847 = vsel %vm590, %v786, 0.0
        %v848 = vadd.f32 %v846, %v847
        %v849 = vsel %vm590, %v787, 0.0
        %v850 = vadd.f32 %v848, %v849
        %v851 = vsel %vm590, %v788, 0.0
        %v852 = vadd.f32 %v850, %v851
        %v853 = vsel %vm590, %v789, 0.0
        %v854 = vadd.f32 %v852, %v853
        %v855 = vsel %vm590, %v790, 0.0
        %v856 = vadd.f32 %v854, %v855
        %v857 = vsel %vm590, %v791, 0.0
        %v858 = vadd.f32 %v856, %v857
        %v859 = vsel %vm590, %v792, 0.0
        %v860 = vadd.f32 %v858, %v859
        %v861 = vrot.slane %v860, 4
        %v862 = vadd.f32 %v860, %v861
        %v863 = vrot.slane %v862, 2
        %v864 = vadd.f32 %v862, %v863
        %v865 = vrot.slane %v864, 1
        %v866 = vadd.f32 %v864, %v865
        %v869 = vsel %vm667, %v866, %v829
        %v870 = vsel %vm590, %v869, 0
        %872 = vmatpush.msra.mxu0 0.0
        %873 = vmatpush.msra.mxu0 0.0
        %874 = vmatpush.msra.mxu0 0.0
        %875 = vmatpush.msra.mxu0 0.0
        %876 = vmatpush.msra.mxu0 0.0
        %877 = vmatpush.msra.mxu0 0.0
        %878 = vmatpush.msra.mxu0 0.0
        %879 = vmatpush.msra.mxu0 0.0
        %880 = vmatpush.msra.mxu0 %v583
        %881 = vmatpush.msra.mxu0 %v582
        %882 = vmatpush.msra.mxu0 %v581
        %883 = vmatpush.msra.mxu0 %v580
        %884 = vmatpush.msra.mxu0 %v579
        %885 = vmatpush.msra.mxu0 %v578
        %886 = vmatpush.msra.mxu0 %v577
        %887 = vmatpush.msra.mxu0 %v576
        %888 = vmatmul.f32.gmra.mxu0 %v870
        %v889 = vpop.f32.mrf.mxu0
        %v890 = vadd.f32 0.0, %v889
        %891 = vdwg.mxu0
        %v892 = vmul.f32 %v890, %v697
        %v893 = vadd.f32 %v892, 1e-05
        %v894 = vrsqrt.pop %v893
        %v895 = vmul.f32 %v894, %v893
        %v896 = vmul.f32 %v895, %v894
        %v897 = vmul.f32 0.5, %v896
        %v898 = vsub.f32 1.5, %v897
        %v899 = vmul.f32 %v894, %v898
        %vm900 = vweird.f32 %v893
        %vm901 = vweird.f32 %v894
        %vm902 = vmor %vm900, %vm901
        %v903 = vsel %vm902, %v894, %v899
        %v905 = vsel %vm699, %v903, 0
        %907 = vmatpush.msra.mxu0 0.0
        %908 = vmatpush.msra.mxu0 0.0
        %909 = vmatpush.msra.mxu0 0.0
        %910 = vmatpush.msra.mxu0 0.0
        %911 = vmatpush.msra.mxu0 0.0
        %912 = vmatpush.msra.mxu0 0.0
        %913 = vmatpush.msra.mxu0 0.0
        %914 = vmatpush.msra.mxu0 0.0
        %915 = vmatpush.msra.mxu0 0.0
        %916 = vmatpush.msra.mxu0 0.0
        %917 = vmatpush.msra.mxu0 0.0
        %918 = vmatpush.msra.mxu0 0.0
        %919 = vmatpush.msra.mxu0 %v587
        %920 = vmatpush.msra.mxu0 %v586
        %921 = vmatpush.msra.mxu0 %v585
        %922 = vmatpush.msra.mxu0 %v584
        %923 = vmatmul.f32.gmra.mxu0 %v905
        %v924 = vpop.f32.mrf.mxu0
        %v925 = vadd.f32 0.0, %v924
        %926 = vdwg.mxu0
        %v928 = vrot.slane %v925, 1
        %v929 = vperm.slane %v925, 0
        %v930 = vperm.slane %v928, 0
        %v933 = vmul.f32 %v729, %v929
        %v934 = vmul.f32 %v730, %v929
        %v935 = vmul.f32 %v731, %v929
        %v936 = vmul.f32 %v732, %v929
        %v937 = vmul.f32 %v733, %v929
        %v938 = vmul.f32 %v734, %v929
        %v939 = vmul.f32 %v735, %v929
        %v940 = vmul.f32 %v736, %v929
        %v941 = vmul.f32 %v737, %v929
        %v942 = vmul.f32 %v738, %v929
        %v943 = vmul.f32 %v739, %v929
        %v944 = vmul.f32 %v740, %v929
        %v945 = vmul.f32 %v741, %v929
        %v946 = vmul.f32 %v742, %v929
        %v947 = vmul.f32 %v743, %v929
        %v948 = vmul.f32 %v744, %v929
        %v949 = vmul.f32 %v745, %v930
        %v950 = vmul.f32 %v746, %v930
        %v951 = vmul.f32 %v747, %v930
        %v952 = vmul.f32 %v748, %v930
        %v953 = vmul.f32 %v749, %v930
        %v954 = vmul.f32 %v750, %v930
        %v955 = vmul.f32 %v751, %v930
        %v956 = vmul.f32 %v752, %v930
        %v957 = vmul.f32 %v753, %v930
        %v958 = vmul.f32 %v754, %v930
        %v959 = vmul.f32 %v755, %v930
        %v960 = vmul.f32 %v756, %v930
        %v961 = vmul.f32 %v757, %v930
        %v962 = vmul.f32 %v758, %v930
        %v963 = vmul.f32 %v759, %v930
        %v964 = vmul.f32 %v760, %v930
        %v966 = vperm.slane %v588, 0
        %v968 = vmul.f32 %v933, %v966
        %v969 = vmul.f32 %v934, %v966
        %v970 = vmul.f32 %v935, %v966
        %v971 = vmul.f32 %v936, %v966
        %v972 = vmul.f32 %v937, %v966
        %v973 = vmul.f32 %v938, %v966
        %v974 = vmul.f32 %v939, %v966
        %v975 = vmul.f32 %v940, %v966
        %v976 = vmul.f32 %v941, %v966
        %v977 = vmul.f32 %v942, %v966
        %v978 = vmul.f32 %v943, %v966
        %v979 = vmul.f32 %v944, %v966
        %v980 = vmul.f32 %v945, %v966
        %v981 = vmul.f32 %v946, %v966
        %v982 = vmul.f32 %v947, %v966
        %v983 = vmul.f32 %v948, %v966
        %v984 = vmul.f32 %v949, %v966
        %v985 = vmul.f32 %v950, %v966
        %v986 = vmul.f32 %v951, %v966
        %v987 = vmul.f32 %v952, %v966
        %v988 = vmul.f32 %v953, %v966
        %v989 = vmul.f32 %v954, %v966
        %v990 = vmul.f32 %v955, %v966
        %v991 = vmul.f32 %v956, %v966
        %v992 = vmul.f32 %v957, %v966
        %v993 = vmul.f32 %v958, %v966
        %v994 = vmul.f32 %v959, %v966
        %v995 = vmul.f32 %v960, %v966
        %v996 = vmul.f32 %v961, %v966
        %v997 = vmul.f32 %v962, %v966
        %v998 = vmul.f32 %v963, %v966
        %v999 = vmul.f32 %v964, %v966
        %v1001 = vperm.slane %v589, 0
        %v1003 = vadd.f32 %v968, %v1001
        %v1004 = vadd.f32 %v969, %v1001
        %v1005 = vadd.f32 %v970, %v1001
        %v1006 = vadd.f32 %v971, %v1001
        %v1007 = vadd.f32 %v972, %v1001
        %v1008 = vadd.f32 %v973, %v1001
        %v1009 = vadd.f32 %v974, %v1001
        %v1010 = vadd.f32 %v975, %v1001
        %v1011 = vadd.f32 %v976, %v1001
        %v1012 = vadd.f32 %v977, %v1001
        %v1013 = vadd.f32 %v978, %v1001
        %v1014 = vadd.f32 %v979, %v1001
        %v1015 = vadd.f32 %v980, %v1001
        %v1016 = vadd.f32 %v981, %v1001
        %v1017 = vadd.f32 %v982, %v1001
        %v1018 = vadd.f32 %v983, %v1001
        %v1019 = vadd.f32 %v984, %v1001
        %v1020 = vadd.f32 %v985, %v1001
        %v1021 = vadd.f32 %v986, %v1001
        %v1022 = vadd.f32 %v987, %v1001
        %v1023 = vadd.f32 %v988, %v1001
        %v1024 = vadd.f32 %v989, %v1001
        %v1025 = vadd.f32 %v990, %v1001
        %v1026 = vadd.f32 %v991, %v1001
        %v1027 = vadd.f32 %v992, %v1001
        %v1028 = vadd.f32 %v993, %v1001
        %v1029 = vadd.f32 %v994, %v1001
        %v1030 = vadd.f32 %v995, %v1001
        %v1031 = vadd.f32 %v996, %v1001
        %v1032 = vadd.f32 %v997, %v1001
        %v1033 = vadd.f32 %v998, %v1001
        %v1034 = vadd.f32 %v999, %v1001
        %v1035 = vxor.u32 %v1003, 2147483648
        %v1036 = vxor.u32 %v1004, 2147483648
        %v1037 = vxor.u32 %v1005, 2147483648
        %v1038 = vxor.u32 %v1006, 2147483648
        %v1039 = vxor.u32 %v1007, 2147483648
        %v1040 = vxor.u32 %v1008, 2147483648
        %v1041 = vxor.u32 %v1009, 2147483648
        %v1042 = vxor.u32 %v1010, 2147483648
        %v1043 = vxor.u32 %v1011, 2147483648
        %v1044 = vxor.u32 %v1012, 2147483648
        %v1045 = vxor.u32 %v1013, 2147483648
        %v1046 = vxor.u32 %v1014, 2147483648
        %v1047 = vxor.u32 %v1015, 2147483648
        %v1048 = vxor.u32 %v1016, 2147483648
        %v1049 = vxor.u32 %v1017, 2147483648
        %v1050 = vxor.u32 %v1018, 2147483648
        %v1051 = vxor.u32 %v1019, 2147483648
        %v1052 = vxor.u32 %v1020, 2147483648
        %v1053 = vxor.u32 %v1021, 2147483648
        %v1054 = vxor.u32 %v1022, 2147483648
        %v1055 = vxor.u32 %v1023, 2147483648
        %v1056 = vxor.u32 %v1024, 2147483648
        %v1057 = vxor.u32 %v1025, 2147483648
        %v1058 = vxor.u32 %v1026, 2147483648
        %v1059 = vxor.u32 %v1027, 2147483648
        %v1060 = vxor.u32 %v1028, 2147483648
        %v1061 = vxor.u32 %v1029, 2147483648
        %v1062 = vxor.u32 %v1030, 2147483648
        %v1063 = vxor.u32 %v1031, 2147483648
        %v1064 = vxor.u32 %v1032, 2147483648
        %v1065 = vxor.u32 %v1033, 2147483648
        %v1066 = vxor.u32 %v1034, 2147483648
        %v1067 = vmul.f32 %v1035, 1.442695
        %v1068 = vpow.pop %v1067
        %v1069 = vmul.f32 %v1036, 1.442695
        %v1070 = vpow.pop %v1069
        %v1071 = vmul.f32 %v1037, 1.442695
        %v1072 = vpow.pop %v1071
        %v1073 = vmul.f32 %v1038, 1.442695
        %v1074 = vpow.pop %v1073
        %v1075 = vmul.f32 %v1039, 1.442695
        %v1076 = vpow.pop %v1075
        %v1077 = vmul.f32 %v1040, 1.442695
        %v1078 = vpow.pop %v1077
        %v1079 = vmul.f32 %v1041, 1.442695
        %v1080 = vpow.pop %v1079
        %v1081 = vmul.f32 %v1042, 1.442695
        %v1082 = vpow.pop %v1081
        %v1083 = vmul.f32 %v1043, 1.442695
        %v1084 = vpow.pop %v1083
        %v1085 = vmul.f32 %v1044, 1.442695
        %v1086 = vpow.pop %v1085
        %v1087 = vmul.f32 %v1045, 1.442695
        %v1088 = vpow.pop %v1087
        %v1089 = vmul.f32 %v1046, 1.442695
        %v1090 = vpow.pop %v1089
        %v1091 = vmul.f32 %v1047, 1.442695
        %v1092 = vpow.pop %v1091
        %v1093 = vmul.f32 %v1048, 1.442695
        %v1094 = vpow.pop %v1093
        %v1095 = vmul.f32 %v1049, 1.442695
        %v1096 = vpow.pop %v1095
        %v1097 = vmul.f32 %v1050, 1.442695
        %v1098 = vpow.pop %v1097
        %v1099 = vmul.f32 %v1051, 1.442695
        %v1100 = vpow.pop %v1099
        %v1101 = vmul.f32 %v1052, 1.442695
        %v1102 = vpow.pop %v1101
        %v1103 = vmul.f32 %v1053, 1.442695
        %v1104 = vpow.pop %v1103
        %v1105 = vmul.f32 %v1054, 1.442695
        %v1106 = vpow.pop %v1105
        %v1107 = vmul.f32 %v1055, 1.442695
        %v1108 = vpow.pop %v1107
        %v1109 = vmul.f32 %v1056, 1.442695
        %v1110 = vpow.pop %v1109
        %v1111 = vmul.f32 %v1057, 1.442695
        %v1112 = vpow.pop %v1111
        %v1113 = vmul.f32 %v1058, 1.442695
        %v1114 = vpow.pop %v1113
        %v1115 = vmul.f32 %v1059, 1.442695
        %v1116 = vpow.pop %v1115
        %v1117 = vmul.f32 %v1060, 1.442695
        %v1118 = vpow.pop %v1117
        %v1119 = vmul.f32 %v1061, 1.442695
        %v1120 = vpow.pop %v1119
        %v1121 = vmul.f32 %v1062, 1.442695
        %v1122 = vpow.pop %v1121
        %v1123 = vmul.f32 %v1063, 1.442695
        %v1124 = vpow.pop %v1123
        %v1125 = vmul.f32 %v1064, 1.442695
        %v1126 = vpow.pop %v1125
        %v1127 = vmul.f32 %v1065, 1.442695
        %v1128 = vpow.pop %v1127
        %v1129 = vmul.f32 %v1066, 1.442695
        %v1130 = vpow.pop %v1129
        %v1131 = vadd.f32 %v1068, 1.0
        %v1132 = vadd.f32 %v1070, 1.0
        %v1133 = vadd.f32 %v1072, 1.0
        %v1134 = vadd.f32 %v1074, 1.0
        %v1135 = vadd.f32 %v1076, 1.0
        %v1136 = vadd.f32 %v1078, 1.0
        %v1137 = vadd.f32 %v1080, 1.0
        %v1138 = vadd.f32 %v1082, 1.0
        %v1139 = vadd.f32 %v1084, 1.0
        %v1140 = vadd.f32 %v1086, 1.0
        %v1141 = vadd.f32 %v1088, 1.0
        %v1142 = vadd.f32 %v1090, 1.0
        %v1143 = vadd.f32 %v1092, 1.0
        %v1144 = vadd.f32 %v1094, 1.0
        %v1145 = vadd.f32 %v1096, 1.0
        %v1146 = vadd.f32 %v1098, 1.0
        %v1147 = vadd.f32 %v1100, 1.0
        %v1148 = vadd.f32 %v1102, 1.0
        %v1149 = vadd.f32 %v1104, 1.0
        %v1150 = vadd.f32 %v1106, 1.0
        %v1151 = vadd.f32 %v1108, 1.0
        %v1152 = vadd.f32 %v1110, 1.0
        %v1153 = vadd.f32 %v1112, 1.0
        %v1154 = vadd.f32 %v1114, 1.0
        %v1155 = vadd.f32 %v1116, 1.0
        %v1156 = vadd.f32 %v1118, 1.0
        %v1157 = vadd.f32 %v1120, 1.0
        %v1158 = vadd.f32 %v1122, 1.0
        %v1159 = vadd.f32 %v1124, 1.0
        %v1160 = vadd.f32 %v1126, 1.0
        %v1161 = vadd.f32 %v1128, 1.0
        %v1162 = vadd.f32 %v1130, 1.0
        %v1163 = vrcp.pop %v1131
        %v1164 = vmul.f32 %v1131, %v1163
        %v1165 = vsub.f32 1.0, %v1164
        %v1166 = vmul.f32 %v1163, %v1165
        %v1167 = vadd.f32 %v1163, %v1166
        %vm1168 = vweird.f32 %v1131
        %vm1169 = vweird.f32 %v1163
        %vm1170 = vmor %vm1168, %vm1169
        %v1171 = vsel %vm1170, %v1163, %v1167
        %v1172 = vand.u32 2147483647, %v1131
        %vm1173 = vcmp.eq.f32.partialorder %v1172, 8.507059e+37
        %v1174 = vand.u32 %v1131, 2147483648
        %v1175 = vor.u32 1.1754944e-38, %v1174
        %v1176 = vsel %vm1173, %v1175, %v1171
        %v1177 = vmul.f32 1.0, %v1176
        %v1178 = vrcp.pop %v1132
        %v1179 = vmul.f32 %v1132, %v1178
        %v1180 = vsub.f32 1.0, %v1179
        %v1181 = vmul.f32 %v1178, %v1180
        %v1182 = vadd.f32 %v1178, %v1181
        %vm1183 = vweird.f32 %v1132
        %vm1184 = vweird.f32 %v1178
        %vm1185 = vmor %vm1183, %vm1184
        %v1186 = vsel %vm1185, %v1178, %v1182
        %v1187 = vand.u32 2147483647, %v1132
        %vm1188 = vcmp.eq.f32.partialorder %v1187, 8.507059e+37
        %v1189 = vand.u32 %v1132, 2147483648
        %v1190 = vor.u32 1.1754944e-38, %v1189
        %v1191 = vsel %vm1188, %v1190, %v1186
        %v1192 = vmul.f32 1.0, %v1191
        %v1193 = vrcp.pop %v1133
        %v1194 = vmul.f32 %v1133, %v1193
        %v1195 = vsub.f32 1.0, %v1194
        %v1196 = vmul.f32 %v1193, %v1195
        %v1197 = vadd.f32 %v1193, %v1196
        %vm1198 = vweird.f32 %v1133
        %vm1199 = vweird.f32 %v1193
        %vm1200 = vmor %vm1198, %vm1199
        %v1201 = vsel %vm1200, %v1193, %v1197
        %v1202 = vand.u32 2147483647, %v1133
        %vm1203 = vcmp.eq.f32.partialorder %v1202, 8.507059e+37
        %v1204 = vand.u32 %v1133, 2147483648
        %v1205 = vor.u32 1.1754944e-38, %v1204
        %v1206 = vsel %vm1203, %v1205, %v1201
        %v1207 = vmul.f32 1.0, %v1206
        %v1208 = vrcp.pop %v1134
        %v1209 = vmul.f32 %v1134, %v1208
        %v1210 = vsub.f32 1.0, %v1209
        %v1211 = vmul.f32 %v1208, %v1210
        %v1212 = vadd.f32 %v1208, %v1211
        %vm1213 = vweird.f32 %v1134
        %vm1214 = vweird.f32 %v1208
        %vm1215 = vmor %vm1213, %vm1214
        %v1216 = vsel %vm1215, %v1208, %v1212
        %v1217 = vand.u32 2147483647, %v1134
        %vm1218 = vcmp.eq.f32.partialorder %v1217, 8.507059e+37
        %v1219 = vand.u32 %v1134, 2147483648
        %v1220 = vor.u32 1.1754944e-38, %v1219
        %v1221 = vsel %vm1218, %v1220, %v1216
        %v1222 = vmul.f32 1.0, %v1221
        %v1223 = vrcp.pop %v1135
        %v1224 = vmul.f32 %v1135, %v1223
        %v1225 = vsub.f32 1.0, %v1224
        %v1226 = vmul.f32 %v1223, %v1225
        %v1227 = vadd.f32 %v1223, %v1226
        %vm1228 = vweird.f32 %v1135
        %vm1229 = vweird.f32 %v1223
        %vm1230 = vmor %vm1228, %vm1229
        %v1231 = vsel %vm1230, %v1223, %v1227
        %v1232 = vand.u32 2147483647, %v1135
        %vm1233 = vcmp.eq.f32.partialorder %v1232, 8.507059e+37
        %v1234 = vand.u32 %v1135, 2147483648
        %v1235 = vor.u32 1.1754944e-38, %v1234
        %v1236 = vsel %vm1233, %v1235, %v1231
        %v1237 = vmul.f32 1.0, %v1236
        %v1238 = vrcp.pop %v1136
        %v1239 = vmul.f32 %v1136, %v1238
        %v1240 = vsub.f32 1.0, %v1239
        %v1241 = vmul.f32 %v1238, %v1240
        %v1242 = vadd.f32 %v1238, %v1241
        %vm1243 = vweird.f32 %v1136
        %vm1244 = vweird.f32 %v1238
        %vm1245 = vmor %vm1243, %vm1244
        %v1246 = vsel %vm1245, %v1238, %v1242
        %v1247 = vand.u32 2147483647, %v1136
        %vm1248 = vcmp.eq.f32.partialorder %v1247, 8.507059e+37
        %v1249 = vand.u32 %v1136, 2147483648
        %v1250 = vor.u32 1.1754944e-38, %v1249
        %v1251 = vsel %vm1248, %v1250, %v1246
        %v1252 = vmul.f32 1.0, %v1251
        %v1253 = vrcp.pop %v1137
        %v1254 = vmul.f32 %v1137, %v1253
        %v1255 = vsub.f32 1.0, %v1254
        %v1256 = vmul.f32 %v1253, %v1255
        %v1257 = vadd.f32 %v1253, %v1256
        %vm1258 = vweird.f32 %v1137
        %vm1259 = vweird.f32 %v1253
        %vm1260 = vmor %vm1258, %vm1259
        %v1261 = vsel %vm1260, %v1253, %v1257
        %v1262 = vand.u32 2147483647, %v1137
        %vm1263 = vcmp.eq.f32.partialorder %v1262, 8.507059e+37
        %v1264 = vand.u32 %v1137, 2147483648
        %v1265 = vor.u32 1.1754944e-38, %v1264
        %v1266 = vsel %vm1263, %v1265, %v1261
        %v1267 = vmul.f32 1.0, %v1266
        %v1268 = vrcp.pop %v1138
        %v1269 = vmul.f32 %v1138, %v1268
        %v1270 = vsub.f32 1.0, %v1269
        %v1271 = vmul.f32 %v1268, %v1270
        %v1272 = vadd.f32 %v1268, %v1271
        %vm1273 = vweird.f32 %v1138
        %vm1274 = vweird.f32 %v1268
        %vm1275 = vmor %vm1273, %vm1274
        %v1276 = vsel %vm1275, %v1268, %v1272
        %v1277 = vand.u32 2147483647, %v1138
        %vm1278 = vcmp.eq.f32.partialorder %v1277, 8.507059e+37
        %v1279 = vand.u32 %v1138, 2147483648
        %v1280 = vor.u32 1.1754944e-38, %v1279
        %v1281 = vsel %vm1278, %v1280, %v1276
        %v1282 = vmul.f32 1.0, %v1281
        %v1283 = vrcp.pop %v1139
        %v1284 = vmul.f32 %v1139, %v1283
        %v1285 = vsub.f32 1.0, %v1284
        %v1286 = vmul.f32 %v1283, %v1285
        %v1287 = vadd.f32 %v1283, %v1286
        %vm1288 = vweird.f32 %v1139
        %vm1289 = vweird.f32 %v1283
        %vm1290 = vmor %vm1288, %vm1289
        %v1291 = vsel %vm1290, %v1283, %v1287
        %v1292 = vand.u32 2147483647, %v1139
        %vm1293 = vcmp.eq.f32.partialorder %v1292, 8.507059e+37
        %v1294 = vand.u32 %v1139, 2147483648
        %v1295 = vor.u32 1.1754944e-38, %v1294
        %v1296 = vsel %vm1293, %v1295, %v1291
        %v1297 = vmul.f32 1.0, %v1296
        %v1298 = vrcp.pop %v1140
        %v1299 = vmul.f32 %v1140, %v1298
        %v1300 = vsub.f32 1.0, %v1299
        %v1301 = vmul.f32 %v1298, %v1300
        %v1302 = vadd.f32 %v1298, %v1301
        %vm1303 = vweird.f32 %v1140
        %vm1304 = vweird.f32 %v1298
        %vm1305 = vmor %vm1303, %vm1304
        %v1306 = vsel %vm1305, %v1298, %v1302
        %v1307 = vand.u32 2147483647, %v1140
        %vm1308 = vcmp.eq.f32.partialorder %v1307, 8.507059e+37
        %v1309 = vand.u32 %v1140, 2147483648
        %v1310 = vor.u32 1.1754944e-38, %v1309
        %v1311 = vsel %vm1308, %v1310, %v1306
        %v1312 = vmul.f32 1.0, %v1311
        %v1313 = vrcp.pop %v1141
        %v1314 = vmul.f32 %v1141, %v1313
        %v1315 = vsub.f32 1.0, %v1314
        %v1316 = vmul.f32 %v1313, %v1315
        %v1317 = vadd.f32 %v1313, %v1316
        %vm1318 = vweird.f32 %v1141
        %vm1319 = vweird.f32 %v1313
        %vm1320 = vmor %vm1318, %vm1319
        %v1321 = vsel %vm1320, %v1313, %v1317
        %v1322 = vand.u32 2147483647, %v1141
        %vm1323 = vcmp.eq.f32.partialorder %v1322, 8.507059e+37
        %v1324 = vand.u32 %v1141, 2147483648
        %v1325 = vor.u32 1.1754944e-38, %v1324
        %v1326 = vsel %vm1323, %v1325, %v1321
        %v1327 = vmul.f32 1.0, %v1326
        %v1328 = vrcp.pop %v1142
        %v1329 = vmul.f32 %v1142, %v1328
        %v1330 = vsub.f32 1.0, %v1329
        %v1331 = vmul.f32 %v1328, %v1330
        %v1332 = vadd.f32 %v1328, %v1331
        %vm1333 = vweird.f32 %v1142
        %vm1334 = vweird.f32 %v1328
        %vm1335 = vmor %vm1333, %vm1334
        %v1336 = vsel %vm1335, %v1328, %v1332
        %v1337 = vand.u32 2147483647, %v1142
        %vm1338 = vcmp.eq.f32.partialorder %v1337, 8.507059e+37
        %v1339 = vand.u32 %v1142, 2147483648
        %v1340 = vor.u32 1.1754944e-38, %v1339
        %v1341 = vsel %vm1338, %v1340, %v1336
        %v1342 = vmul.f32 1.0, %v1341
        %v1343 = vrcp.pop %v1143
        %v1344 = vmul.f32 %v1143, %v1343
        %v1345 = vsub.f32 1.0, %v1344
        %v1346 = vmul.f32 %v1343, %v1345
        %v1347 = vadd.f32 %v1343, %v1346
        %vm1348 = vweird.f32 %v1143
        %vm1349 = vweird.f32 %v1343
        %vm1350 = vmor %vm1348, %vm1349
        %v1351 = vsel %vm1350, %v1343, %v1347
        %v1352 = vand.u32 2147483647, %v1143
        %vm1353 = vcmp.eq.f32.partialorder %v1352, 8.507059e+37
        %v1354 = vand.u32 %v1143, 2147483648
        %v1355 = vor.u32 1.1754944e-38, %v1354
        %v1356 = vsel %vm1353, %v1355, %v1351
        %v1357 = vmul.f32 1.0, %v1356
        %v1358 = vrcp.pop %v1144
        %v1359 = vmul.f32 %v1144, %v1358
        %v1360 = vsub.f32 1.0, %v1359
        %v1361 = vmul.f32 %v1358, %v1360
        %v1362 = vadd.f32 %v1358, %v1361
        %vm1363 = vweird.f32 %v1144
        %vm1364 = vweird.f32 %v1358
        %vm1365 = vmor %vm1363, %vm1364
        %v1366 = vsel %vm1365, %v1358, %v1362
        %v1367 = vand.u32 2147483647, %v1144
        %vm1368 = vcmp.eq.f32.partialorder %v1367, 8.507059e+37
        %v1369 = vand.u32 %v1144, 2147483648
        %v1370 = vor.u32 1.1754944e-38, %v1369
        %v1371 = vsel %vm1368, %v1370, %v1366
        %v1372 = vmul.f32 1.0, %v1371
        %v1373 = vrcp.pop %v1145
        %v1374 = vmul.f32 %v1145, %v1373
        %v1375 = vsub.f32 1.0, %v1374
        %v1376 = vmul.f32 %v1373, %v1375
        %v1377 = vadd.f32 %v1373, %v1376
        %vm1378 = vweird.f32 %v1145
        %vm1379 = vweird.f32 %v1373
        %vm1380 = vmor %vm1378, %vm1379
        %v1381 = vsel %vm1380, %v1373, %v1377
        %v1382 = vand.u32 2147483647, %v1145
        %vm1383 = vcmp.eq.f32.partialorder %v1382, 8.507059e+37
        %v1384 = vand.u32 %v1145, 2147483648
        %v1385 = vor.u32 1.1754944e-38, %v1384
        %v1386 = vsel %vm1383, %v1385, %v1381
        %v1387 = vmul.f32 1.0, %v1386
        %v1388 = vrcp.pop %v1146
        %v1389 = vmul.f32 %v1146, %v1388
        %v1390 = vsub.f32 1.0, %v1389
        %v1391 = vmul.f32 %v1388, %v1390
        %v1392 = vadd.f32 %v1388, %v1391
        %vm1393 = vweird.f32 %v1146
        %vm1394 = vweird.f32 %v1388
        %vm1395 = vmor %vm1393, %vm1394
        %v1396 = vsel %vm1395, %v1388, %v1392
        %v1397 = vand.u32 2147483647, %v1146
        %vm1398 = vcmp.eq.f32.partialorder %v1397, 8.507059e+37
        %v1399 = vand.u32 %v1146, 2147483648
        %v1400 = vor.u32 1.1754944e-38, %v1399
        %v1401 = vsel %vm1398, %v1400, %v1396
        %v1402 = vmul.f32 1.0, %v1401
        %v1403 = vrcp.pop %v1147
        %v1404 = vmul.f32 %v1147, %v1403
        %v1405 = vsub.f32 1.0, %v1404
        %v1406 = vmul.f32 %v1403, %v1405
        %v1407 = vadd.f32 %v1403, %v1406
        %vm1408 = vweird.f32 %v1147
        %vm1409 = vweird.f32 %v1403
        %vm1410 = vmor %vm1408, %vm1409
        %v1411 = vsel %vm1410, %v1403, %v1407
        %v1412 = vand.u32 2147483647, %v1147
        %vm1413 = vcmp.eq.f32.partialorder %v1412, 8.507059e+37
        %v1414 = vand.u32 %v1147, 2147483648
        %v1415 = vor.u32 1.1754944e-38, %v1414
        %v1416 = vsel %vm1413, %v1415, %v1411
        %v1417 = vmul.f32 1.0, %v1416
        %v1418 = vrcp.pop %v1148
        %v1419 = vmul.f32 %v1148, %v1418
        %v1420 = vsub.f32 1.0, %v1419
        %v1421 = vmul.f32 %v1418, %v1420
        %v1422 = vadd.f32 %v1418, %v1421
        %vm1423 = vweird.f32 %v1148
        %vm1424 = vweird.f32 %v1418
        %vm1425 = vmor %vm1423, %vm1424
        %v1426 = vsel %vm1425, %v1418, %v1422
        %v1427 = vand.u32 2147483647, %v1148
        %vm1428 = vcmp.eq.f32.partialorder %v1427, 8.507059e+37
        %v1429 = vand.u32 %v1148, 2147483648
        %v1430 = vor.u32 1.1754944e-38, %v1429
        %v1431 = vsel %vm1428, %v1430, %v1426
        %v1432 = vmul.f32 1.0, %v1431
        %v1433 = vrcp.pop %v1149
        %v1434 = vmul.f32 %v1149, %v1433
        %v1435 = vsub.f32 1.0, %v1434
        %v1436 = vmul.f32 %v1433, %v1435
        %v1437 = vadd.f32 %v1433, %v1436
        %vm1438 = vweird.f32 %v1149
        %vm1439 = vweird.f32 %v1433
        %vm1440 = vmor %vm1438, %vm1439
        %v1441 = vsel %vm1440, %v1433, %v1437
        %v1442 = vand.u32 2147483647, %v1149
        %vm1443 = vcmp.eq.f32.partialorder %v1442, 8.507059e+37
        %v1444 = vand.u32 %v1149, 2147483648
        %v1445 = vor.u32 1.1754944e-38, %v1444
        %v1446 = vsel %vm1443, %v1445, %v1441
        %v1447 = vmul.f32 1.0, %v1446
        %v1448 = vrcp.pop %v1150
        %v1449 = vmul.f32 %v1150, %v1448
        %v1450 = vsub.f32 1.0, %v1449
        %v1451 = vmul.f32 %v1448, %v1450
        %v1452 = vadd.f32 %v1448, %v1451
        %vm1453 = vweird.f32 %v1150
        %vm1454 = vweird.f32 %v1448
        %vm1455 = vmor %vm1453, %vm1454
        %v1456 = vsel %vm1455, %v1448, %v1452
        %v1457 = vand.u32 2147483647, %v1150
        %vm1458 = vcmp.eq.f32.partialorder %v1457, 8.507059e+37
        %v1459 = vand.u32 %v1150, 2147483648
        %v1460 = vor.u32 1.1754944e-38, %v1459
        %v1461 = vsel %vm1458, %v1460, %v1456
        %v1462 = vmul.f32 1.0, %v1461
        %v1463 = vrcp.pop %v1151
        %v1464 = vmul.f32 %v1151, %v1463
        %v1465 = vsub.f32 1.0, %v1464
        %v1466 = vmul.f32 %v1463, %v1465
        %v1467 = vadd.f32 %v1463, %v1466
        %vm1468 = vweird.f32 %v1151
        %vm1469 = vweird.f32 %v1463
        %vm1470 = vmor %vm1468, %vm1469
        %v1471 = vsel %vm1470, %v1463, %v1467
        %v1472 = vand.u32 2147483647, %v1151
        %vm1473 = vcmp.eq.f32.partialorder %v1472, 8.507059e+37
        %v1474 = vand.u32 %v1151, 2147483648
        %v1475 = vor.u32 1.1754944e-38, %v1474
        %v1476 = vsel %vm1473, %v1475, %v1471
        %v1477 = vmul.f32 1.0, %v1476
        %v1478 = vrcp.pop %v1152
        %v1479 = vmul.f32 %v1152, %v1478
        %v1480 = vsub.f32 1.0, %v1479
        %v1481 = vmul.f32 %v1478, %v1480
        %v1482 = vadd.f32 %v1478, %v1481
        %vm1483 = vweird.f32 %v1152
        %vm1484 = vweird.f32 %v1478
        %vm1485 = vmor %vm1483, %vm1484
        %v1486 = vsel %vm1485, %v1478, %v1482
        %v1487 = vand.u32 2147483647, %v1152
        %vm1488 = vcmp.eq.f32.partialorder %v1487, 8.507059e+37
        %v1489 = vand.u32 %v1152, 2147483648
        %v1490 = vor.u32 1.1754944e-38, %v1489
        %v1491 = vsel %vm1488, %v1490, %v1486
        %v1492 = vmul.f32 1.0, %v1491
        %v1493 = vrcp.pop %v1153
        %v1494 = vmul.f32 %v1153, %v1493
        %v1495 = vsub.f32 1.0, %v1494
        %v1496 = vmul.f32 %v1493, %v1495
        %v1497 = vadd.f32 %v1493, %v1496
        %vm1498 = vweird.f32 %v1153
        %vm1499 = vweird.f32 %v1493
        %vm1500 = vmor %vm1498, %vm1499
        %v1501 = vsel %vm1500, %v1493, %v1497
        %v1502 = vand.u32 2147483647, %v1153
        %vm1503 = vcmp.eq.f32.partialorder %v1502, 8.507059e+37
        %v1504 = vand.u32 %v1153, 2147483648
        %v1505 = vor.u32 1.1754944e-38, %v1504
        %v1506 = vsel %vm1503, %v1505, %v1501
        %v1507 = vmul.f32 1.0, %v1506
        %v1508 = vrcp.pop %v1154
        %v1509 = vmul.f32 %v1154, %v1508
        %v1510 = vsub.f32 1.0, %v1509
        %v1511 = vmul.f32 %v1508, %v1510
        %v1512 = vadd.f32 %v1508, %v1511
        %vm1513 = vweird.f32 %v1154
        %vm1514 = vweird.f32 %v1508
        %vm1515 = vmor %vm1513, %vm1514
        %v1516 = vsel %vm1515, %v1508, %v1512
        %v1517 = vand.u32 2147483647, %v1154
        %vm1518 = vcmp.eq.f32.partialorder %v1517, 8.507059e+37
        %v1519 = vand.u32 %v1154, 2147483648
        %v1520 = vor.u32 1.1754944e-38, %v1519
        %v1521 = vsel %vm1518, %v1520, %v1516
        %v1522 = vmul.f32 1.0, %v1521
        %v1523 = vrcp.pop %v1155
        %v1524 = vmul.f32 %v1155, %v1523
        %v1525 = vsub.f32 1.0, %v1524
        %v1526 = vmul.f32 %v1523, %v1525
        %v1527 = vadd.f32 %v1523, %v1526
        %vm1528 = vweird.f32 %v1155
        %vm1529 = vweird.f32 %v1523
        %vm1530 = vmor %vm1528, %vm1529
        %v1531 = vsel %vm1530, %v1523, %v1527
        %v1532 = vand.u32 2147483647, %v1155
        %vm1533 = vcmp.eq.f32.partialorder %v1532, 8.507059e+37
        %v1534 = vand.u32 %v1155, 2147483648
        %v1535 = vor.u32 1.1754944e-38, %v1534
        %v1536 = vsel %vm1533, %v1535, %v1531
        %v1537 = vmul.f32 1.0, %v1536
        %v1538 = vrcp.pop %v1156
        %v1539 = vmul.f32 %v1156, %v1538
        %v1540 = vsub.f32 1.0, %v1539
        %v1541 = vmul.f32 %v1538, %v1540
        %v1542 = vadd.f32 %v1538, %v1541
        %vm1543 = vweird.f32 %v1156
        %vm1544 = vweird.f32 %v1538
        %vm1545 = vmor %vm1543, %vm1544
        %v1546 = vsel %vm1545, %v1538, %v1542
        %v1547 = vand.u32 2147483647, %v1156
        %vm1548 = vcmp.eq.f32.partialorder %v1547, 8.507059e+37
        %v1549 = vand.u32 %v1156, 2147483648
        %v1550 = vor.u32 1.1754944e-38, %v1549
        %v1551 = vsel %vm1548, %v1550, %v1546
        %v1552 = vmul.f32 1.0, %v1551
        %v1553 = vrcp.pop %v1157
        %v1554 = vmul.f32 %v1157, %v1553
        %v1555 = vsub.f32 1.0, %v1554
        %v1556 = vmul.f32 %v1553, %v1555
        %v1557 = vadd.f32 %v1553, %v1556
        %vm1558 = vweird.f32 %v1157
        %vm1559 = vweird.f32 %v1553
        %vm1560 = vmor %vm1558, %vm1559
        %v1561 = vsel %vm1560, %v1553, %v1557
        %v1562 = vand.u32 2147483647, %v1157
        %vm1563 = vcmp.eq.f32.partialorder %v1562, 8.507059e+37
        %v1564 = vand.u32 %v1157, 2147483648
        %v1565 = vor.u32 1.1754944e-38, %v1564
        %v1566 = vsel %vm1563, %v1565, %v1561
        %v1567 = vmul.f32 1.0, %v1566
        %v1568 = vrcp.pop %v1158
        %v1569 = vmul.f32 %v1158, %v1568
        %v1570 = vsub.f32 1.0, %v1569
        %v1571 = vmul.f32 %v1568, %v1570
        %v1572 = vadd.f32 %v1568, %v1571
        %vm1573 = vweird.f32 %v1158
        %vm1574 = vweird.f32 %v1568
        %vm1575 = vmor %vm1573, %vm1574
        %v1576 = vsel %vm1575, %v1568, %v1572
        %v1577 = vand.u32 2147483647, %v1158
        %vm1578 = vcmp.eq.f32.partialorder %v1577, 8.507059e+37
        %v1579 = vand.u32 %v1158, 2147483648
        %v1580 = vor.u32 1.1754944e-38, %v1579
        %v1581 = vsel %vm1578, %v1580, %v1576
        %v1582 = vmul.f32 1.0, %v1581
        %v1583 = vrcp.pop %v1159
        %v1584 = vmul.f32 %v1159, %v1583
        %v1585 = vsub.f32 1.0, %v1584
        %v1586 = vmul.f32 %v1583, %v1585
        %v1587 = vadd.f32 %v1583, %v1586
        %vm1588 = vweird.f32 %v1159
        %vm1589 = vweird.f32 %v1583
        %vm1590 = vmor %vm1588, %vm1589
        %v1591 = vsel %vm1590, %v1583, %v1587
        %v1592 = vand.u32 2147483647, %v1159
        %vm1593 = vcmp.eq.f32.partialorder %v1592, 8.507059e+37
        %v1594 = vand.u32 %v1159, 2147483648
        %v1595 = vor.u32 1.1754944e-38, %v1594
        %v1596 = vsel %vm1593, %v1595, %v1591
        %v1597 = vmul.f32 1.0, %v1596
        %v1598 = vrcp.pop %v1160
        %v1599 = vmul.f32 %v1160, %v1598
        %v1600 = vsub.f32 1.0, %v1599
        %v1601 = vmul.f32 %v1598, %v1600
        %v1602 = vadd.f32 %v1598, %v1601
        %vm1603 = vweird.f32 %v1160
        %vm1604 = vweird.f32 %v1598
        %vm1605 = vmor %vm1603, %vm1604
        %v1606 = vsel %vm1605, %v1598, %v1602
        %v1607 = vand.u32 2147483647, %v1160
        %vm1608 = vcmp.eq.f32.partialorder %v1607, 8.507059e+37
        %v1609 = vand.u32 %v1160, 2147483648
        %v1610 = vor.u32 1.1754944e-38, %v1609
        %v1611 = vsel %vm1608, %v1610, %v1606
        %v1612 = vmul.f32 1.0, %v1611
        %v1613 = vrcp.pop %v1161
        %v1614 = vmul.f32 %v1161, %v1613
        %v1615 = vsub.f32 1.0, %v1614
        %v1616 = vmul.f32 %v1613, %v1615
        %v1617 = vadd.f32 %v1613, %v1616
        %vm1618 = vweird.f32 %v1161
        %vm1619 = vweird.f32 %v1613
        %vm1620 = vmor %vm1618, %vm1619
        %v1621 = vsel %vm1620, %v1613, %v1617
        %v1622 = vand.u32 2147483647, %v1161
        %vm1623 = vcmp.eq.f32.partialorder %v1622, 8.507059e+37
        %v1624 = vand.u32 %v1161, 2147483648
        %v1625 = vor.u32 1.1754944e-38, %v1624
        %v1626 = vsel %vm1623, %v1625, %v1621
        %v1627 = vmul.f32 1.0, %v1626
        %v1628 = vrcp.pop %v1162
        %v1629 = vmul.f32 %v1162, %v1628
        %v1630 = vsub.f32 1.0, %v1629
        %v1631 = vmul.f32 %v1628, %v1630
        %v1632 = vadd.f32 %v1628, %v1631
        %vm1633 = vweird.f32 %v1162
        %vm1634 = vweird.f32 %v1628
        %vm1635 = vmor %vm1633, %vm1634
        %v1636 = vsel %vm1635, %v1628, %v1632
        %v1637 = vand.u32 2147483647, %v1162
        %vm1638 = vcmp.eq.f32.partialorder %v1637, 8.507059e+37
        %v1639 = vand.u32 %v1162, 2147483648
        %v1640 = vor.u32 1.1754944e-38, %v1639
        %v1641 = vsel %vm1638, %v1640, %v1636
        %v1642 = vmul.f32 1.0, %v1641
        %v1643 = vmul.f32 %v1003, %v1177
        %v1644 = vmul.f32 %v1004, %v1192
        %v1645 = vmul.f32 %v1005, %v1207
        %v1646 = vmul.f32 %v1006, %v1222
        %v1647 = vmul.f32 %v1007, %v1237
        %v1648 = vmul.f32 %v1008, %v1252
        %v1649 = vmul.f32 %v1009, %v1267
        %v1650 = vmul.f32 %v1010, %v1282
        %v1651 = vmul.f32 %v1011, %v1297
        %v1652 = vmul.f32 %v1012, %v1312
        %v1653 = vmul.f32 %v1013, %v1327
        %v1654 = vmul.f32 %v1014, %v1342
        %v1655 = vmul.f32 %v1015, %v1357
        %v1656 = vmul.f32 %v1016, %v1372
        %v1657 = vmul.f32 %v1017, %v1387
        %v1658 = vmul.f32 %v1018, %v1402
        %v1659 = vmul.f32 %v1019, %v1417
        %v1660 = vmul.f32 %v1020, %v1432
        %v1661 = vmul.f32 %v1021, %v1447
        %v1662 = vmul.f32 %v1022, %v1462
        %v1663 = vmul.f32 %v1023, %v1477
        %v1664 = vmul.f32 %v1024, %v1492
        %v1665 = vmul.f32 %v1025, %v1507
        %v1666 = vmul.f32 %v1026, %v1522
        %v1667 = vmul.f32 %v1027, %v1537
        %v1668 = vmul.f32 %v1028, %v1552
        %v1669 = vmul.f32 %v1029, %v1567
        %v1670 = vmul.f32 %v1030, %v1582
        %v1671 = vmul.f32 %v1031, %v1597
        %v1672 = vmul.f32 %v1032, %v1612
        %v1673 = vmul.f32 %v1033, %v1627
        %v1674 = vmul.f32 %v1034, %v1642
        %v1675 = vld [vmem:[%s7] sm:$0x1]
        %vm1708 = vcmask 1040384
        %v1709 = vrot.slane %v1643, 7
        %v1710 = vrot.slane %v1644, 7
        %v1711 = vsel %vm1708, %v1709, %v1710
        %v1712 = vrot.slane %v1645, 7
        %v1713 = vsel %vm1708, %v1710, %v1712
        %v1714 = vrot.slane %v1646, 7
        %v1715 = vsel %vm1708, %v1712, %v1714
        %v1716 = vrot.slane %v1647, 7
        %v1717 = vsel %vm1708, %v1714, %v1716
        %v1718 = vrot.slane %v1648, 7
        %v1719 = vsel %vm1708, %v1716, %v1718
        %v1720 = vrot.slane %v1649, 7
        %v1721 = vsel %vm1708, %v1718, %v1720
        %v1722 = vrot.slane %v1650, 7
        %v1723 = vsel %vm1708, %v1720, %v1722
        %v1724 = vrot.slane %v1651, 7
        %v1725 = vsel %vm1708, %v1722, %v1724
        %v1726 = vrot.slane %v1652, 7
        %v1727 = vsel %vm1708, %v1724, %v1726
        %v1728 = vrot.slane %v1653, 7
        %v1729 = vsel %vm1708, %v1726, %v1728
        %v1730 = vrot.slane %v1654, 7
        %v1731 = vsel %vm1708, %v1728, %v1730
        %v1732 = vrot.slane %v1655, 7
        %v1733 = vsel %vm1708, %v1730, %v1732
        %v1734 = vrot.slane %v1656, 7
        %v1735 = vsel %vm1708, %v1732, %v1734
        %v1736 = vrot.slane %v1657, 7
        %v1737 = vsel %vm1708, %v1734, %v1736
        %v1738 = vrot.slane %v1658, 7
        %v1739 = vsel %vm1708, %v1736, %v1738
        %v1740 = vrot.slane %v1659, 7
        %v1741 = vrot.slane %v1660, 7
        %v1742 = vsel %vm1708, %v1740, %v1741
        %v1743 = vrot.slane %v1661, 7
        %v1744 = vsel %vm1708, %v1741, %v1743
        %v1745 = vrot.slane %v1662, 7
        %v1746 = vsel %vm1708, %v1743, %v1745
        %v1747 = vrot.slane %v1663, 7
        %v1748 = vsel %vm1708, %v1745, %v1747
        %v1749 = vrot.slane %v1664, 7
        %v1750 = vsel %vm1708, %v1747, %v1749
        %v1751 = vrot.slane %v1665, 7
        %v1752 = vsel %vm1708, %v1749, %v1751
        %v1753 = vrot.slane %v1666, 7
        %v1754 = vsel %vm1708, %v1751, %v1753
        %v1755 = vrot.slane %v1667, 7
        %v1756 = vsel %vm1708, %v1753, %v1755
        %v1757 = vrot.slane %v1668, 7
        %v1758 = vsel %vm1708, %v1755, %v1757
        %v1759 = vrot.slane %v1669, 7
        %v1760 = vsel %vm1708, %v1757, %v1759
        %v1761 = vrot.slane %v1670, 7
        %v1762 = vsel %vm1708, %v1759, %v1761
        %v1763 = vrot.slane %v1671, 7
        %v1764 = vsel %vm1708, %v1761, %v1763
        %v1765 = vrot.slane %v1672, 7
        %v1766 = vsel %vm1708, %v1763, %v1765
        %v1767 = vrot.slane %v1673, 7
        %v1768 = vsel %vm1708, %v1765, %v1767
        %v1769 = vrot.slane %v1674, 7
        %v1770 = vsel %vm1708, %v1767, %v1769
        %v1803 = vsel %vm1708, 0.0, %v1709
        %v1804 = vsel %vm1708, 0.0, %v1740
        %vm1805 = vcmask 1046528
        %v1806 = vrot.slane %v1643, 1
        %v1807 = vrot.slane %v1644, 1
        %v1808 = vsel %vm1805, %v1806, %v1807
        %v1809 = vrot.slane %v1645, 1
        %v1810 = vsel %vm1805, %v1807, %v1809
        %v1811 = vrot.slane %v1646, 1
        %v1812 = vsel %vm1805, %v1809, %v1811
        %v1813 = vrot.slane %v1647, 1
        %v1814 = vsel %vm1805, %v1811, %v1813
        %v1815 = vrot.slane %v1648, 1
        %v1816 = vsel %vm1805, %v1813, %v1815
        %v1817 = vrot.slane %v1649, 1
        %v1818 = vsel %vm1805, %v1815, %v1817
        %v1819 = vrot.slane %v1650, 1
        %v1820 = vsel %vm1805, %v1817, %v1819
        %v1821 = vrot.slane %v1651, 1
        %v1822 = vsel %vm1805, %v1819, %v1821
        %v1823 = vrot.slane %v1652, 1
        %v1824 = vsel %vm1805, %v1821, %v1823
        %v1825 = vrot.slane %v1653, 1
        %v1826 = vsel %vm1805, %v1823, %v1825
        %v1827 = vrot.slane %v1654, 1
        %v1828 = vsel %vm1805, %v1825, %v1827
        %v1829 = vrot.slane %v1655, 1
        %v1830 = vsel %vm1805, %v1827, %v1829
        %v1831 = vrot.slane %v1656, 1
        %v1832 = vsel %vm1805, %v1829, %v1831
        %v1833 = vrot.slane %v1657, 1
        %v1834 = vsel %vm1805, %v1831, %v1833
        %v1835 = vrot.slane %v1658, 1
        %v1836 = vsel %vm1805, %v1833, %v1835
        %v1837 = vrot.slane %v1659, 1
        %v1838 = vrot.slane %v1660, 1
        %v1839 = vsel %vm1805, %v1837, %v1838
        %v1840 = vrot.slane %v1661, 1
        %v1841 = vsel %vm1805, %v1838, %v1840
        %v1842 = vrot.slane %v1662, 1
        %v1843 = vsel %vm1805, %v1840, %v1842
        %v1844 = vrot.slane %v1663, 1
        %v1845 = vsel %vm1805, %v1842, %v1844
        %v1846 = vrot.slane %v1664, 1
        %v1847 = vsel %vm1805, %v1844, %v1846
        %v1848 = vrot.slane %v1665, 1
        %v1849 = vsel %vm1805, %v1846, %v1848
        %v1850 = vrot.slane %v1666, 1
        %v1851 = vsel %vm1805, %v1848, %v1850
        %v1852 = vrot.slane %v1667, 1
        %v1853 = vsel %vm1805, %v1850, %v1852
        %v1854 = vrot.slane %v1668, 1
        %v1855 = vsel %vm1805, %v1852, %v1854
        %v1856 = vrot.slane %v1669, 1
        %v1857 = vsel %vm1805, %v1854, %v1856
        %v1858 = vrot.slane %v1670, 1
        %v1859 = vsel %vm1805, %v1856, %v1858
        %v1860 = vrot.slane %v1671, 1
        %v1861 = vsel %vm1805, %v1858, %v1860
        %v1862 = vrot.slane %v1672, 1
        %v1863 = vsel %vm1805, %v1860, %v1862
        %v1864 = vrot.slane %v1673, 1
        %v1865 = vsel %vm1805, %v1862, %v1864
        %v1866 = vrot.slane %v1674, 1
        %v1867 = vsel %vm1805, %v1864, %v1866
        %v1900 = vsel %vm1805, %v1835, 0.0
        %v1901 = vsel %vm1805, %v1866, 0.0
        %v1902 = vpack.c.bf16 %v1644, %v1643
        %v1903 = vpack.c.bf16 %v1646, %v1645
        %v1904 = vpack.c.bf16 %v1648, %v1647
        %v1905 = vpack.c.bf16 %v1650, %v1649
        %v1906 = vpack.c.bf16 %v1652, %v1651
        %v1907 = vpack.c.bf16 %v1654, %v1653
        %v1908 = vpack.c.bf16 %v1656, %v1655
        %v1909 = vpack.c.bf16 %v1658, %v1657
        %v1910 = vpack.c.bf16 %v1660, %v1659
        %v1911 = vpack.c.bf16 %v1662, %v1661
        %v1912 = vpack.c.bf16 %v1664, %v1663
        %v1913 = vpack.c.bf16 %v1666, %v1665
        %v1914 = vpack.c.bf16 %v1668, %v1667
        %v1915 = vpack.c.bf16 %v1670, %v1669
        %v1916 = vpack.c.bf16 %v1672, %v1671
        %v1917 = vpack.c.bf16 %v1674, %v1673
        %v1918 = vpack.c.bf16 %v1711, %v1803
        %v1919 = vpack.c.bf16 %v1715, %v1713
        %v1920 = vpack.c.bf16 %v1719, %v1717
        %v1921 = vpack.c.bf16 %v1723, %v1721
        %v1922 = vpack.c.bf16 %v1727, %v1725
        %v1923 = vpack.c.bf16 %v1731, %v1729
        %v1924 = vpack.c.bf16 %v1735, %v1733
        %v1925 = vpack.c.bf16 %v1739, %v1737
        %v1926 = vpack.c.bf16 %v1742, %v1804
        %v1927 = vpack.c.bf16 %v1746, %v1744
        %v1928 = vpack.c.bf16 %v1750, %v1748
        %v1929 = vpack.c.bf16 %v1754, %v1752
        %v1930 = vpack.c.bf16 %v1758, %v1756
        %v1931 = vpack.c.bf16 %v1762, %v1760
        %v1932 = vpack.c.bf16 %v1766, %v1764
        %v1933 = vpack.c.bf16 %v1770, %v1768
        %v1934 = vpack.c.bf16 %v1810, %v1808
        %v1935 = vpack.c.bf16 %v1814, %v1812
        %v1936 = vpack.c.bf16 %v1818, %v1816
        %v1937 = vpack.c.bf16 %v1822, %v1820
        %v1938 = vpack.c.bf16 %v1826, %v1824
        %v1939 = vpack.c.bf16 %v1830, %v1828
        %v1940 = vpack.c.bf16 %v1834, %v1832
        %v1941 = vpack.c.bf16 %v1900, %v1836
        %v1942 = vpack.c.bf16 %v1841, %v1839
        %v1943 = vpack.c.bf16 %v1845, %v1843
        %v1944 = vpack.c.bf16 %v1849, %v1847
        %v1945 = vpack.c.bf16 %v1853, %v1851
        %v1946 = vpack.c.bf16 %v1857, %v1855
        %v1947 = vpack.c.bf16 %v1861, %v1859
        %v1948 = vpack.c.bf16 %v1865, %v1863
        %v1949 = vpack.c.bf16 %v1901, %v1867
        %v1950 = vld [vmem:[%s6] sm:$0xf]
        %v1951 = vld [vmem:[%s6 + $0x4] sm:$0xf]
        %v1952 = vld [vmem:[%s6 + $0x8] sm:$0xf]
        %v1953 = vld [vmem:[%s6 + $0xc] sm:$0xf]
        %v1954 = vld [vmem:[%s6 + $0x10] sm:$0xf]
        %v1955 = vld [vmem:[%s6 + $0x14] sm:$0xf]
        %v1956 = vld [vmem:[%s6 + $0x18] sm:$0xf]
        %v1957 = vld [vmem:[%s6 + $0x1c] sm:$0xf]
        %s1958 = scalar_lea.vmem %s6, 32
        %v1959 = vld [vmem:[%s1958] sm:$0xf]
        %v1960 = vld [vmem:[%s1958 + $0x4] sm:$0xf]
        %v1961 = vld [vmem:[%s1958 + $0x8] sm:$0xf]
        %v1962 = vld [vmem:[%s1958 + $0xc] sm:$0xf]
        %v1963 = vld [vmem:[%s1958 + $0x10] sm:$0xf]
        %v1964 = vld [vmem:[%s1958 + $0x14] sm:$0xf]
        %v1965 = vld [vmem:[%s1958 + $0x18] sm:$0xf]
        %v1966 = vld [vmem:[%s1958 + $0x1c] sm:$0xf]
        %v1975 = vunpack.c.l.b16 %v1959
        %v1976 = vunpack.c.l.b16 %v1960
        %v1977 = vunpack.c.l.b16 %v1961
        %v1978 = vunpack.c.l.b16 %v1962
        %v1979 = vunpack.c.l.b16 %v1963
        %v1980 = vunpack.c.l.b16 %v1964
        %v1981 = vunpack.c.l.b16 %v1965
        %v1982 = vunpack.c.l.b16 %v1966
        %v1983 = vpack.c.b16 %v1976, %v1975
        %v1984 = vpack.c.b16 %v1978, %v1977
        %v1985 = vpack.c.b16 %v1980, %v1979
        %v1986 = vpack.c.b16 %v1982, %v1981
        %v1992 = vsel %vm590, %v1902, 0
        %v1995 = vsel %vm590, %v1903, 0
        %v1998 = vsel %vm590, %v1904, 0
        %v2001 = vsel %vm590, %v1905, 0
        %v2004 = vsel %vm590, %v1906, 0
        %v2007 = vsel %vm590, %v1907, 0
        %v2010 = vsel %vm590, %v1908, 0
        %v2013 = vsel %vm590, %v1909, 0
        %v2016 = vsel %vm590, %v1910, 0
        %v2019 = vsel %vm590, %v1911, 0
        %v2022 = vsel %vm590, %v1912, 0
        %v2025 = vsel %vm590, %v1913, 0
        %v2028 = vsel %vm590, %v1914, 0
        %v2031 = vsel %vm590, %v1915, 0
        %v2034 = vsel %vm590, %v1916, 0
        %v2037 = vsel %vm590, %v1917, 0
        %2039 = vmatpush.bf16.msra.mxu0 0
        %2040 = vmatpush.bf16.msra.mxu0 0
        %2041 = vmatpush.bf16.msra.mxu0 0
        %2042 = vmatpush.bf16.msra.mxu0 0
        %2043 = vmatpush.bf16.msra.mxu0 %v1986
        %2044 = vmatpush.bf16.msra.mxu0 %v1985
        %2045 = vmatpush.bf16.msra.mxu0 %v1984
        %2046 = vmatpush.bf16.msra.mxu0 %v1983
        %2047 = vmatmul.bf16.gmra.mxu0 %v1992
        %v2048 = vpop.f32.mrf.mxu0
        %v2049 = vadd.f32 0.0, %v2048
        %v2050 = vpop.f32.mrf.mxu0
        %v2051 = vadd.f32 0.0, %v2050
        %2052 = vmatmul.bf16.gmra.mxu0 %v1995
        %v2053 = vpop.f32.mrf.mxu0
        %v2054 = vadd.f32 0.0, %v2053
        %v2055 = vpop.f32.mrf.mxu0
        %v2056 = vadd.f32 0.0, %v2055
        %2057 = vmatmul.bf16.gmra.mxu0 %v1998
        %v2058 = vpop.f32.mrf.mxu0
        %v2059 = vadd.f32 0.0, %v2058
        %v2060 = vpop.f32.mrf.mxu0
        %v2061 = vadd.f32 0.0, %v2060
        %2062 = vmatmul.bf16.gmra.mxu0 %v2001
        %v2063 = vpop.f32.mrf.mxu0
        %v2064 = vadd.f32 0.0, %v2063
        %v2065 = vpop.f32.mrf.mxu0
        %v2066 = vadd.f32 0.0, %v2065
        %2067 = vmatmul.bf16.gmra.mxu0 %v2004
        %v2068 = vpop.f32.mrf.mxu0
        %v2069 = vadd.f32 0.0, %v2068
        %v2070 = vpop.f32.mrf.mxu0
        %v2071 = vadd.f32 0.0, %v2070
        %2072 = vmatmul.bf16.gmra.mxu0 %v2007
        %v2073 = vpop.f32.mrf.mxu0
        %v2074 = vadd.f32 0.0, %v2073
        %v2075 = vpop.f32.mrf.mxu0
        %v2076 = vadd.f32 0.0, %v2075
        %2077 = vmatmul.bf16.gmra.mxu0 %v2010
        %v2078 = vpop.f32.mrf.mxu0
        %v2079 = vadd.f32 0.0, %v2078
        %v2080 = vpop.f32.mrf.mxu0
        %v2081 = vadd.f32 0.0, %v2080
        %2082 = vmatmul.bf16.gmra.mxu0 %v2013
        %v2083 = vpop.f32.mrf.mxu0
        %v2084 = vadd.f32 0.0, %v2083
        %v2085 = vpop.f32.mrf.mxu0
        %v2086 = vadd.f32 0.0, %v2085
        %2087 = vmatmul.bf16.gmra.mxu0 %v2016
        %v2088 = vpop.f32.mrf.mxu0
        %v2089 = vadd.f32 0.0, %v2088
        %v2090 = vpop.f32.mrf.mxu0
        %v2091 = vadd.f32 0.0, %v2090
        %2092 = vmatmul.bf16.gmra.mxu0 %v2019
        %v2093 = vpop.f32.mrf.mxu0
        %v2094 = vadd.f32 0.0, %v2093
        %v2095 = vpop.f32.mrf.mxu0
        %v2096 = vadd.f32 0.0, %v2095
        %2097 = vmatmul.bf16.gmra.mxu0 %v2022
        %v2098 = vpop.f32.mrf.mxu0
        %v2099 = vadd.f32 0.0, %v2098
        %v2100 = vpop.f32.mrf.mxu0
        %v2101 = vadd.f32 0.0, %v2100
        %2102 = vmatmul.bf16.gmra.mxu0 %v2025
        %v2103 = vpop.f32.mrf.mxu0
        %v2104 = vadd.f32 0.0, %v2103
        %v2105 = vpop.f32.mrf.mxu0
        %v2106 = vadd.f32 0.0, %v2105
        %2107 = vmatmul.bf16.gmra.mxu0 %v2028
        %v2108 = vpop.f32.mrf.mxu0
        %v2109 = vadd.f32 0.0, %v2108
        %v2110 = vpop.f32.mrf.mxu0
        %v2111 = vadd.f32 0.0, %v2110
        %2112 = vmatmul.bf16.gmra.mxu0 %v2031
        %v2113 = vpop.f32.mrf.mxu0
        %v2114 = vadd.f32 0.0, %v2113
        %v2115 = vpop.f32.mrf.mxu0
        %v2116 = vadd.f32 0.0, %v2115
        %2117 = vmatmul.bf16.gmra.mxu0 %v2034
        %v2118 = vpop.f32.mrf.mxu0
        %v2119 = vadd.f32 0.0, %v2118
        %v2120 = vpop.f32.mrf.mxu0
        %v2121 = vadd.f32 0.0, %v2120
        %2122 = vmatmul.bf16.gmra.mxu0 %v2037
        %v2123 = vpop.f32.mrf.mxu0
        %v2124 = vadd.f32 0.0, %v2123
        %v2125 = vpop.f32.mrf.mxu0
        %v2126 = vadd.f32 0.0, %v2125
        %2127 = vdwg.mxu0
        %v2136 = vunpack.c.l.b16 %v1950
        %v2137 = vunpack.c.l.b16 %v1951
        %v2138 = vunpack.c.l.b16 %v1952
        %v2139 = vunpack.c.l.b16 %v1953
        %v2140 = vunpack.c.l.b16 %v1954
        %v2141 = vunpack.c.l.b16 %v1955
        %v2142 = vunpack.c.l.b16 %v1956
        %v2143 = vunpack.c.l.b16 %v1957
        %v2144 = vpack.c.b16 %v2137, %v2136
        %v2145 = vpack.c.b16 %v2139, %v2138
        %v2146 = vpack.c.b16 %v2141, %v2140
        %v2147 = vpack.c.b16 %v2143, %v2142
        %v2153 = vsel %vm590, %v1918, 0
        %v2156 = vsel %vm590, %v1919, 0
        %v2159 = vsel %vm590, %v1920, 0
        %v2162 = vsel %vm590, %v1921, 0
        %v2165 = vsel %vm590, %v1922, 0
        %v2168 = vsel %vm590, %v1923, 0
        %v2171 = vsel %vm590, %v1924, 0
        %v2174 = vsel %vm590, %v1925, 0
        %v2177 = vsel %vm590, %v1926, 0
        %v2180 = vsel %vm590, %v1927, 0
        %v2183 = vsel %vm590, %v1928, 0
        %v2186 = vsel %vm590, %v1929, 0
        %v2189 = vsel %vm590, %v1930, 0
        %v2192 = vsel %vm590, %v1931, 0
        %v2195 = vsel %vm590, %v1932, 0
        %v2198 = vsel %vm590, %v1933, 0
        %2200 = vmatpush.bf16.msra.mxu0 0
        %2201 = vmatpush.bf16.msra.mxu0 0
        %2202 = vmatpush.bf16.msra.mxu0 0
        %2203 = vmatpush.bf16.msra.mxu0 0
        %2204 = vmatpush.bf16.msra.mxu0 %v2147
        %2205 = vmatpush.bf16.msra.mxu0 %v2146
        %2206 = vmatpush.bf16.msra.mxu0 %v2145
        %2207 = vmatpush.bf16.msra.mxu0 %v2144
        %2208 = vmatmul.bf16.gmra.mxu0 %v2153
        %v2209 = vpop.f32.mrf.mxu0
        %v2210 = vadd.f32 %v2049, %v2209
        %v2211 = vpop.f32.mrf.mxu0
        %v2212 = vadd.f32 %v2051, %v2211
        %2213 = vmatmul.bf16.gmra.mxu0 %v2156
        %v2214 = vpop.f32.mrf.mxu0
        %v2215 = vadd.f32 %v2054, %v2214
        %v2216 = vpop.f32.mrf.mxu0
        %v2217 = vadd.f32 %v2056, %v2216
        %2218 = vmatmul.bf16.gmra.mxu0 %v2159
        %v2219 = vpop.f32.mrf.mxu0
        %v2220 = vadd.f32 %v2059, %v2219
        %v2221 = vpop.f32.mrf.mxu0
        %v2222 = vadd.f32 %v2061, %v2221
        %2223 = vmatmul.bf16.gmra.mxu0 %v2162
        %v2224 = vpop.f32.mrf.mxu0
        %v2225 = vadd.f32 %v2064, %v2224
        %v2226 = vpop.f32.mrf.mxu0
        %v2227 = vadd.f32 %v2066, %v2226
        %2228 = vmatmul.bf16.gmra.mxu0 %v2165
        %v2229 = vpop.f32.mrf.mxu0
        %v2230 = vadd.f32 %v2069, %v2229
        %v2231 = vpop.f32.mrf.mxu0
        %v2232 = vadd.f32 %v2071, %v2231
        %2233 = vmatmul.bf16.gmra.mxu0 %v2168
        %v2234 = vpop.f32.mrf.mxu0
        %v2235 = vadd.f32 %v2074, %v2234
        %v2236 = vpop.f32.mrf.mxu0
        %v2237 = vadd.f32 %v2076, %v2236
        %2238 = vmatmul.bf16.gmra.mxu0 %v2171
        %v2239 = vpop.f32.mrf.mxu0
        %v2240 = vadd.f32 %v2079, %v2239
        %v2241 = vpop.f32.mrf.mxu0
        %v2242 = vadd.f32 %v2081, %v2241
        %2243 = vmatmul.bf16.gmra.mxu0 %v2174
        %v2244 = vpop.f32.mrf.mxu0
        %v2245 = vadd.f32 %v2084, %v2244
        %v2246 = vpop.f32.mrf.mxu0
        %v2247 = vadd.f32 %v2086, %v2246
        %2248 = vmatmul.bf16.gmra.mxu0 %v2177
        %v2249 = vpop.f32.mrf.mxu0
        %v2250 = vadd.f32 %v2089, %v2249
        %v2251 = vpop.f32.mrf.mxu0
        %v2252 = vadd.f32 %v2091, %v2251
        %2253 = vmatmul.bf16.gmra.mxu0 %v2180
        %v2254 = vpop.f32.mrf.mxu0
        %v2255 = vadd.f32 %v2094, %v2254
        %v2256 = vpop.f32.mrf.mxu0
        %v2257 = vadd.f32 %v2096, %v2256
        %2258 = vmatmul.bf16.gmra.mxu0 %v2183
        %v2259 = vpop.f32.mrf.mxu0
        %v2260 = vadd.f32 %v2099, %v2259
        %v2261 = vpop.f32.mrf.mxu0
        %v2262 = vadd.f32 %v2101, %v2261
        %2263 = vmatmul.bf16.gmra.mxu0 %v2186
        %v2264 = vpop.f32.mrf.mxu0
        %v2265 = vadd.f32 %v2104, %v2264
        %v2266 = vpop.f32.mrf.mxu0
        %v2267 = vadd.f32 %v2106, %v2266
        %2268 = vmatmul.bf16.gmra.mxu0 %v2189
        %v2269 = vpop.f32.mrf.mxu0
        %v2270 = vadd.f32 %v2109, %v2269
        %v2271 = vpop.f32.mrf.mxu0
        %v2272 = vadd.f32 %v2111, %v2271
        %2273 = vmatmul.bf16.gmra.mxu0 %v2192
        %v2274 = vpop.f32.mrf.mxu0
        %v2275 = vadd.f32 %v2114, %v2274
        %v2276 = vpop.f32.mrf.mxu0
        %v2277 = vadd.f32 %v2116, %v2276
        %2278 = vmatmul.bf16.gmra.mxu0 %v2195
        %v2279 = vpop.f32.mrf.mxu0
        %v2280 = vadd.f32 %v2119, %v2279
        %v2281 = vpop.f32.mrf.mxu0
        %v2282 = vadd.f32 %v2121, %v2281
        %2283 = vmatmul.bf16.gmra.mxu0 %v2198
        %v2284 = vpop.f32.mrf.mxu0
        %v2285 = vadd.f32 %v2124, %v2284
        %v2286 = vpop.f32.mrf.mxu0
        %v2287 = vadd.f32 %v2126, %v2286
        %2288 = vdwg.mxu0
        %s2289 = scalar_lea.vmem %s6, 64
        %v2290 = vld [vmem:[%s2289] sm:$0xf]
        %v2291 = vld [vmem:[%s2289 + $0x4] sm:$0xf]
        %v2292 = vld [vmem:[%s2289 + $0x8] sm:$0xf]
        %v2293 = vld [vmem:[%s2289 + $0xc] sm:$0xf]
        %v2294 = vld [vmem:[%s2289 + $0x10] sm:$0xf]
        %v2295 = vld [vmem:[%s2289 + $0x14] sm:$0xf]
        %v2296 = vld [vmem:[%s2289 + $0x18] sm:$0xf]
        %v2297 = vld [vmem:[%s2289 + $0x1c] sm:$0xf]
        %v2306 = vunpack.c.l.b16 %v2290
        %v2307 = vunpack.c.l.b16 %v2291
        %v2308 = vunpack.c.l.b16 %v2292
        %v2309 = vunpack.c.l.b16 %v2293
        %v2310 = vunpack.c.l.b16 %v2294
        %v2311 = vunpack.c.l.b16 %v2295
        %v2312 = vunpack.c.l.b16 %v2296
        %v2313 = vunpack.c.l.b16 %v2297
        %v2314 = vpack.c.b16 %v2307, %v2306
        %v2315 = vpack.c.b16 %v2309, %v2308
        %v2316 = vpack.c.b16 %v2311, %v2310
        %v2317 = vpack.c.b16 %v2313, %v2312
        %v2323 = vsel %vm590, %v1934, 0
        %v2326 = vsel %vm590, %v1935, 0
        %v2329 = vsel %vm590, %v1936, 0
        %v2332 = vsel %vm590, %v1937, 0
        %v2335 = vsel %vm590, %v1938, 0
        %v2338 = vsel %vm590, %v1939, 0
        %v2341 = vsel %vm590, %v1940, 0
        %v2344 = vsel %vm590, %v1941, 0
        %v2347 = vsel %vm590, %v1942, 0
        %v2350 = vsel %vm590, %v1943, 0
        %v2353 = vsel %vm590, %v1944, 0
        %v2356 = vsel %vm590, %v1945, 0
        %v2359 = vsel %vm590, %v1946, 0
        %v2362 = vsel %vm590, %v1947, 0
        %v2365 = vsel %vm590, %v1948, 0
        %v2368 = vsel %vm590, %v1949, 0
        %2370 = vmatpush.bf16.msra.mxu0 0
        %2371 = vmatpush.bf16.msra.mxu0 0
        %2372 = vmatpush.bf16.msra.mxu0 0
        %2373 = vmatpush.bf16.msra.mxu0 0
        %2374 = vmatpush.bf16.msra.mxu0 %v2317
        %2375 = vmatpush.bf16.msra.mxu0 %v2316
        %2376 = vmatpush.bf16.msra.mxu0 %v2315
        %2377 = vmatpush.bf16.msra.mxu0 %v2314
        %2378 = vmatmul.bf16.gmra.mxu0 %v2323
        %v2379 = vpop.f32.mrf.mxu0
        %v2380 = vadd.f32 0.0, %v2379
        %v2381 = vpop.f32.mrf.mxu0
        %v2382 = vadd.f32 0.0, %v2381
        %2383 = vmatmul.bf16.gmra.mxu0 %v2326
        %v2384 = vpop.f32.mrf.mxu0
        %v2385 = vadd.f32 0.0, %v2384
        %v2386 = vpop.f32.mrf.mxu0
        %v2387 = vadd.f32 0.0, %v2386
        %2388 = vmatmul.bf16.gmra.mxu0 %v2329
        %v2389 = vpop.f32.mrf.mxu0
        %v2390 = vadd.f32 0.0, %v2389
        %v2391 = vpop.f32.mrf.mxu0
        %v2392 = vadd.f32 0.0, %v2391
        %2393 = vmatmul.bf16.gmra.mxu0 %v2332
        %v2394 = vpop.f32.mrf.mxu0
        %v2395 = vadd.f32 0.0, %v2394
        %v2396 = vpop.f32.mrf.mxu0
        %v2397 = vadd.f32 0.0, %v2396
        %2398 = vmatmul.bf16.gmra.mxu0 %v2335
        %v2399 = vpop.f32.mrf.mxu0
        %v2400 = vadd.f32 0.0, %v2399
        %v2401 = vpop.f32.mrf.mxu0
        %v2402 = vadd.f32 0.0, %v2401
        %2403 = vmatmul.bf16.gmra.mxu0 %v2338
        %v2404 = vpop.f32.mrf.mxu0
        %v2405 = vadd.f32 0.0, %v2404
        %v2406 = vpop.f32.mrf.mxu0
        %v2407 = vadd.f32 0.0, %v2406
        %2408 = vmatmul.bf16.gmra.mxu0 %v2341
        %v2409 = vpop.f32.mrf.mxu0
        %v2410 = vadd.f32 0.0, %v2409
        %v2411 = vpop.f32.mrf.mxu0
        %v2412 = vadd.f32 0.0, %v2411
        %2413 = vmatmul.bf16.gmra.mxu0 %v2344
        %v2414 = vpop.f32.mrf.mxu0
        %v2415 = vadd.f32 0.0, %v2414
        %v2416 = vpop.f32.mrf.mxu0
        %v2417 = vadd.f32 0.0, %v2416
        %2418 = vmatmul.bf16.gmra.mxu0 %v2347
        %v2419 = vpop.f32.mrf.mxu0
        %v2420 = vadd.f32 0.0, %v2419
        %v2421 = vpop.f32.mrf.mxu0
        %v2422 = vadd.f32 0.0, %v2421
        %2423 = vmatmul.bf16.gmra.mxu0 %v2350
        %v2424 = vpop.f32.mrf.mxu0
        %v2425 = vadd.f32 0.0, %v2424
        %v2426 = vpop.f32.mrf.mxu0
        %v2427 = vadd.f32 0.0, %v2426
        %2428 = vmatmul.bf16.gmra.mxu0 %v2353
        %v2429 = vpop.f32.mrf.mxu0
        %v2430 = vadd.f32 0.0, %v2429
        %v2431 = vpop.f32.mrf.mxu0
        %v2432 = vadd.f32 0.0, %v2431
        %2433 = vmatmul.bf16.gmra.mxu0 %v2356
        %v2434 = vpop.f32.mrf.mxu0
        %v2435 = vadd.f32 0.0, %v2434
        %v2436 = vpop.f32.mrf.mxu0
        %v2437 = vadd.f32 0.0, %v2436
        %2438 = vmatmul.bf16.gmra.mxu0 %v2359
        %v2439 = vpop.f32.mrf.mxu0
        %v2440 = vadd.f32 0.0, %v2439
        %v2441 = vpop.f32.mrf.mxu0
        %v2442 = vadd.f32 0.0, %v2441
        %2443 = vmatmul.bf16.gmra.mxu0 %v2362
        %v2444 = vpop.f32.mrf.mxu0
        %v2445 = vadd.f32 0.0, %v2444
        %v2446 = vpop.f32.mrf.mxu0
        %v2447 = vadd.f32 0.0, %v2446
        %2448 = vmatmul.bf16.gmra.mxu0 %v2365
        %v2449 = vpop.f32.mrf.mxu0
        %v2450 = vadd.f32 0.0, %v2449
        %v2451 = vpop.f32.mrf.mxu0
        %v2452 = vadd.f32 0.0, %v2451
        %2453 = vmatmul.bf16.gmra.mxu0 %v2368
        %v2454 = vpop.f32.mrf.mxu0
        %v2455 = vadd.f32 0.0, %v2454
        %v2456 = vpop.f32.mrf.mxu0
        %v2457 = vadd.f32 0.0, %v2456
        %2458 = vdwg.mxu0
        %v2459 = vadd.f32 %v2210, %v2380
        %v2460 = vadd.f32 %v2212, %v2382
        %v2461 = vadd.f32 %v2215, %v2385
        %v2462 = vadd.f32 %v2217, %v2387
        %v2463 = vadd.f32 %v2220, %v2390
        %v2464 = vadd.f32 %v2222, %v2392
        %v2465 = vadd.f32 %v2225, %v2395
        %v2466 = vadd.f32 %v2227, %v2397
        %v2467 = vadd.f32 %v2230, %v2400
        %v2468 = vadd.f32 %v2232, %v2402
        %v2469 = vadd.f32 %v2235, %v2405
        %v2470 = vadd.f32 %v2237, %v2407
        %v2471 = vadd.f32 %v2240, %v2410
        %v2472 = vadd.f32 %v2242, %v2412
        %v2473 = vadd.f32 %v2245, %v2415
        %v2474 = vadd.f32 %v2247, %v2417
        %v2475 = vadd.f32 %v2250, %v2420
        %v2476 = vadd.f32 %v2252, %v2422
        %v2477 = vadd.f32 %v2255, %v2425
        %v2478 = vadd.f32 %v2257, %v2427
        %v2479 = vadd.f32 %v2260, %v2430
        %v2480 = vadd.f32 %v2262, %v2432
        %v2481 = vadd.f32 %v2265, %v2435
        %v2482 = vadd.f32 %v2267, %v2437
        %v2483 = vadd.f32 %v2270, %v2440
        %v2484 = vadd.f32 %v2272, %v2442
        %v2485 = vadd.f32 %v2275, %v2445
        %v2486 = vadd.f32 %v2277, %v2447
        %v2487 = vadd.f32 %v2280, %v2450
        %v2488 = vadd.f32 %v2282, %v2452
        %v2489 = vadd.f32 %v2285, %v2455
        %v2490 = vadd.f32 %v2287, %v2457
        %v2492 = vperm.slane %v1675, 0
        %v2494 = vadd.f32 %v2459, %v2492
        %v2495 = vadd.f32 %v2460, %v2492
        %v2496 = vadd.f32 %v2461, %v2492
        %v2497 = vadd.f32 %v2462, %v2492
        %v2498 = vadd.f32 %v2463, %v2492
        %v2499 = vadd.f32 %v2464, %v2492
        %v2500 = vadd.f32 %v2465, %v2492
        %v2501 = vadd.f32 %v2466, %v2492
        %v2502 = vadd.f32 %v2467, %v2492
        %v2503 = vadd.f32 %v2468, %v2492
        %v2504 = vadd.f32 %v2469, %v2492
        %v2505 = vadd.f32 %v2470, %v2492
        %v2506 = vadd.f32 %v2471, %v2492
        %v2507 = vadd.f32 %v2472, %v2492
        %v2508 = vadd.f32 %v2473, %v2492
        %v2509 = vadd.f32 %v2474, %v2492
        %v2510 = vadd.f32 %v2475, %v2492
        %v2511 = vadd.f32 %v2476, %v2492
        %v2512 = vadd.f32 %v2477, %v2492
        %v2513 = vadd.f32 %v2478, %v2492
        %v2514 = vadd.f32 %v2479, %v2492
        %v2515 = vadd.f32 %v2480, %v2492
        %v2516 = vadd.f32 %v2481, %v2492
        %v2517 = vadd.f32 %v2482, %v2492
        %v2518 = vadd.f32 %v2483, %v2492
        %v2519 = vadd.f32 %v2484, %v2492
        %v2520 = vadd.f32 %v2485, %v2492
        %v2521 = vadd.f32 %v2486, %v2492
        %v2522 = vadd.f32 %v2487, %v2492
        %v2523 = vadd.f32 %v2488, %v2492
        %v2524 = vadd.f32 %v2489, %v2492
        %v2525 = vadd.f32 %v2490, %v2492
        %v2526 = vld [vmem:[%s541] sm:$0x3]
        %v2528 = vrot.slane %v2526, 1
        %v2529 = vperm.slane %v2526, 0
        %v2530 = vperm.slane %v2528, 0
        %v2533 = vadd.f32 %v2494, %v2529
        %v2534 = vadd.f32 %v2495, %v2529
        %v2535 = vadd.f32 %v2496, %v2529
        %v2536 = vadd.f32 %v2497, %v2529
        %v2537 = vadd.f32 %v2498, %v2529
        %v2538 = vadd.f32 %v2499, %v2529
        %v2539 = vadd.f32 %v2500, %v2529
        %v2540 = vadd.f32 %v2501, %v2529
        %v2541 = vadd.f32 %v2502, %v2529
        %v2542 = vadd.f32 %v2503, %v2529
        %v2543 = vadd.f32 %v2504, %v2529
        %v2544 = vadd.f32 %v2505, %v2529
        %v2545 = vadd.f32 %v2506, %v2529
        %v2546 = vadd.f32 %v2507, %v2529
        %v2547 = vadd.f32 %v2508, %v2529
        %v2548 = vadd.f32 %v2509, %v2529
        %v2549 = vadd.f32 %v2510, %v2530
        %v2550 = vadd.f32 %v2511, %v2530
        %v2551 = vadd.f32 %v2512, %v2530
        %v2552 = vadd.f32 %v2513, %v2530
        %v2553 = vadd.f32 %v2514, %v2530
        %v2554 = vadd.f32 %v2515, %v2530
        %v2555 = vadd.f32 %v2516, %v2530
        %v2556 = vadd.f32 %v2517, %v2530
        %v2557 = vadd.f32 %v2518, %v2530
        %v2558 = vadd.f32 %v2519, %v2530
        %v2559 = vadd.f32 %v2520, %v2530
        %v2560 = vadd.f32 %v2521, %v2530
        %v2561 = vadd.f32 %v2522, %v2530
        %v2562 = vadd.f32 %v2523, %v2530
        %v2563 = vadd.f32 %v2524, %v2530
        %v2564 = vadd.f32 %v2525, %v2530
        %v2565 = vld [vmem:[%s8] sm:$0xff]
        %v2566 = vld [vmem:[%s8 + $0x8] sm:$0xff]
        %v2567 = vld [vmem:[%s8 + $0x10] sm:$0xff]
        %v2568 = vld [vmem:[%s8 + $0x18] sm:$0xff]
        %v2569 = vld [vmem:[%s8 + $0x20] sm:$0xff]
        %v2570 = vld [vmem:[%s8 + $0x28] sm:$0xff]
        %v2571 = vld [vmem:[%s8 + $0x30] sm:$0xff]
        %v2572 = vld [vmem:[%s8 + $0x38] sm:$0xff]
        %v2573 = vld [vmem:[%s8 + $0x40] sm:$0xff]
        %v2574 = vld [vmem:[%s8 + $0x48] sm:$0xff]
        %v2575 = vld [vmem:[%s8 + $0x50] sm:$0xff]
        %v2576 = vld [vmem:[%s8 + $0x58] sm:$0xff]
        %v2577 = vld [vmem:[%s8 + $0x60] sm:$0xff]
        %v2578 = vld [vmem:[%s8 + $0x68] sm:$0xff]
        %v2579 = vld [vmem:[%s8 + $0x70] sm:$0xff]
        %v2580 = vld [vmem:[%s8 + $0x78] sm:$0xff]
        %v2581 = vld [vmem:[%s9] sm:$0xff]
        %v2582 = vld [vmem:[%s9 + $0x8] sm:$0xff]
        %v2583 = vld [vmem:[%s9 + $0x10] sm:$0xff]
        %v2584 = vld [vmem:[%s9 + $0x18] sm:$0xff]
        %v2585 = vld [vmem:[%s10] sm:$0x1]
        %v2586 = vld [vmem:[%s11] sm:$0x1]
        %v2587 = vadd.f32 %v2533, %v2534
        %v2588 = vadd.f32 %v2587, %v2535
        %v2589 = vadd.f32 %v2588, %v2536
        %v2590 = vadd.f32 %v2589, %v2537
        %v2591 = vadd.f32 %v2590, %v2538
        %v2592 = vadd.f32 %v2591, %v2539
        %v2593 = vadd.f32 %v2592, %v2540
        %v2594 = vadd.f32 %v2593, %v2541
        %v2595 = vadd.f32 %v2594, %v2542
        %v2596 = vadd.f32 %v2595, %v2543
        %v2597 = vadd.f32 %v2596, %v2544
        %v2598 = vadd.f32 %v2597, %v2545
        %v2599 = vadd.f32 %v2598, %v2546
        %v2600 = vadd.f32 %v2599, %v2547
        %v2601 = vadd.f32 %v2600, %v2548
        %v2602 = vrot.slane %v2601, 4
        %v2603 = vadd.f32 %v2601, %v2602
        %v2604 = vrot.slane %v2603, 2
        %v2605 = vadd.f32 %v2603, %v2604
        %v2606 = vrot.slane %v2605, 1
        %v2607 = vadd.f32 %v2605, %v2606
        %v2608 = vadd.f32 %v2549, %v2550
        %v2609 = vadd.f32 %v2608, %v2551
        %v2610 = vadd.f32 %v2609, %v2552
        %v2611 = vadd.f32 %v2610, %v2553
        %v2612 = vadd.f32 %v2611, %v2554
        %v2613 = vadd.f32 %v2612, %v2555
        %v2614 = vadd.f32 %v2613, %v2556
        %v2615 = vadd.f32 %v2614, %v2557
        %v2616 = vadd.f32 %v2615, %v2558
        %v2617 = vadd.f32 %v2616, %v2559
        %v2618 = vadd.f32 %v2617, %v2560
        %v2619 = vadd.f32 %v2618, %v2561
        %v2620 = vadd.f32 %v2619, %v2562
        %v2621 = vadd.f32 %v2620, %v2563
        %v2622 = vadd.f32 %v2621, %v2564
        %v2623 = vrot.slane %v2622, 4
        %v2624 = vadd.f32 %v2622, %v2623
        %v2625 = vrot.slane %v2624, 2
        %v2626 = vadd.f32 %v2624, %v2625
        %v2627 = vrot.slane %v2626, 1
        %v2628 = vadd.f32 %v2626, %v2627
        %v2631 = vsel %vm667, %v2628, %v2607
        %2633 = vmatpush.msra.mxu0 %v2580
        %2634 = vmatpush.msra.mxu0 %v2579
        %2635 = vmatpush.msra.mxu0 %v2578
        %2636 = vmatpush.msra.mxu0 %v2577
        %2637 = vmatpush.msra.mxu0 %v2576
        %2638 = vmatpush.msra.mxu0 %v2575
        %2639 = vmatpush.msra.mxu0 %v2574
        %2640 = vmatpush.msra.mxu0 %v2573
        %2641 = vmatpush.msra.mxu0 %v2572
        %2642 = vmatpush.msra.mxu0 %v2571
        %2643 = vmatpush.msra.mxu0 %v2570
        %2644 = vmatpush.msra.mxu0 %v2569
        %2645 = vmatpush.msra.mxu0 %v2568
        %2646 = vmatpush.msra.mxu0 %v2567
        %2647 = vmatpush.msra.mxu0 %v2566
        %2648 = vmatpush.msra.mxu0 %v2565
        %2649 = vmatmul.f32.gmra.mxu0 %v2631
        %v2650 = vpop.f32.mrf.mxu0
        %v2651 = vadd.f32 0.0, %v2650
        %2652 = vdwg.mxu0
        %v2653 = vrcp.pop 512.0
        %v2654 = vmul.f32 512.0, %v2653
        %v2655 = vsub.f32 1.0, %v2654
        %v2656 = vmul.f32 %v2653, %v2655
        %v2657 = vadd.f32 %v2653, %v2656
        %vm2658 = vweird.f32 %v2653
        %v2659 = vsel %vm2658, %v2653, %v2657
        %v2660 = vmul.f32 %v2651, %v2659
        %v2662 = vsel %vm699, %v2660, 0
        %2664 = vmatpush.msra.mxu0 0.0
        %2665 = vmatpush.msra.mxu0 0.0
        %2666 = vmatpush.msra.mxu0 0.0
        %2667 = vmatpush.msra.mxu0 0.0
        %2668 = vmatpush.msra.mxu0 0.0
        %2669 = vmatpush.msra.mxu0 0.0
        %2670 = vmatpush.msra.mxu0 0.0
        %2671 = vmatpush.msra.mxu0 0.0
        %2672 = vmatpush.msra.mxu0 0.0
        %2673 = vmatpush.msra.mxu0 0.0
        %2674 = vmatpush.msra.mxu0 0.0
        %2675 = vmatpush.msra.mxu0 0.0
        %2676 = vmatpush.msra.mxu0 %v2584
        %2677 = vmatpush.msra.mxu0 %v2583
        %2678 = vmatpush.msra.mxu0 %v2582
        %2679 = vmatpush.msra.mxu0 %v2581
        %2680 = vmatmul.f32.gmra.mxu0 %v2662
        %v2681 = vpop.f32.mrf.mxu0
        %v2682 = vadd.f32 0.0, %v2681
        %2683 = vdwg.mxu0
        %v2685 = vrot.slane %v2682, 1
        %v2686 = vperm.slane %v2682, 0
        %v2687 = vperm.slane %v2685, 0
        %v2690 = vsub.f32 %v2533, %v2686
        %v2691 = vsub.f32 %v2534, %v2686
        %v2692 = vsub.f32 %v2535, %v2686
        %v2693 = vsub.f32 %v2536, %v2686
        %v2694 = vsub.f32 %v2537, %v2686
        %v2695 = vsub.f32 %v2538, %v2686
        %v2696 = vsub.f32 %v2539, %v2686
        %v2697 = vsub.f32 %v2540, %v2686
        %v2698 = vsub.f32 %v2541, %v2686
        %v2699 = vsub.f32 %v2542, %v2686
        %v2700 = vsub.f32 %v2543, %v2686
        %v2701 = vsub.f32 %v2544, %v2686
        %v2702 = vsub.f32 %v2545, %v2686
        %v2703 = vsub.f32 %v2546, %v2686
        %v2704 = vsub.f32 %v2547, %v2686
        %v2705 = vsub.f32 %v2548, %v2686
        %v2706 = vsub.f32 %v2549, %v2687
        %v2707 = vsub.f32 %v2550, %v2687
        %v2708 = vsub.f32 %v2551, %v2687
        %v2709 = vsub.f32 %v2552, %v2687
        %v2710 = vsub.f32 %v2553, %v2687
        %v2711 = vsub.f32 %v2554, %v2687
        %v2712 = vsub.f32 %v2555, %v2687
        %v2713 = vsub.f32 %v2556, %v2687
        %v2714 = vsub.f32 %v2557, %v2687
        %v2715 = vsub.f32 %v2558, %v2687
        %v2716 = vsub.f32 %v2559, %v2687
        %v2717 = vsub.f32 %v2560, %v2687
        %v2718 = vsub.f32 %v2561, %v2687
        %v2719 = vsub.f32 %v2562, %v2687
        %v2720 = vsub.f32 %v2563, %v2687
        %v2721 = vsub.f32 %v2564, %v2687
        %v2722 = vmul.f32 %v2690, %v2690
        %v2723 = vmul.f32 %v2691, %v2691
        %v2724 = vmul.f32 %v2692, %v2692
        %v2725 = vmul.f32 %v2693, %v2693
        %v2726 = vmul.f32 %v2694, %v2694
        %v2727 = vmul.f32 %v2695, %v2695
        %v2728 = vmul.f32 %v2696, %v2696
        %v2729 = vmul.f32 %v2697, %v2697
        %v2730 = vmul.f32 %v2698, %v2698
        %v2731 = vmul.f32 %v2699, %v2699
        %v2732 = vmul.f32 %v2700, %v2700
        %v2733 = vmul.f32 %v2701, %v2701
        %v2734 = vmul.f32 %v2702, %v2702
        %v2735 = vmul.f32 %v2703, %v2703
        %v2736 = vmul.f32 %v2704, %v2704
        %v2737 = vmul.f32 %v2705, %v2705
        %v2738 = vmul.f32 %v2706, %v2706
        %v2739 = vmul.f32 %v2707, %v2707
        %v2740 = vmul.f32 %v2708, %v2708
        %v2741 = vmul.f32 %v2709, %v2709
        %v2742 = vmul.f32 %v2710, %v2710
        %v2743 = vmul.f32 %v2711, %v2711
        %v2744 = vmul.f32 %v2712, %v2712
        %v2745 = vmul.f32 %v2713, %v2713
        %v2746 = vmul.f32 %v2714, %v2714
        %v2747 = vmul.f32 %v2715, %v2715
        %v2748 = vmul.f32 %v2716, %v2716
        %v2749 = vmul.f32 %v2717, %v2717
        %v2750 = vmul.f32 %v2718, %v2718
        %v2751 = vmul.f32 %v2719, %v2719
        %v2752 = vmul.f32 %v2720, %v2720
        %v2753 = vmul.f32 %v2721, %v2721
        %v2754 = vadd.f32 %v2722, %v2723
        %v2755 = vadd.f32 %v2754, %v2724
        %v2756 = vadd.f32 %v2755, %v2725
        %v2757 = vadd.f32 %v2756, %v2726
        %v2758 = vadd.f32 %v2757, %v2727
        %v2759 = vadd.f32 %v2758, %v2728
        %v2760 = vadd.f32 %v2759, %v2729
        %v2761 = vadd.f32 %v2760, %v2730
        %v2762 = vadd.f32 %v2761, %v2731
        %v2763 = vadd.f32 %v2762, %v2732
        %v2764 = vadd.f32 %v2763, %v2733
        %v2765 = vadd.f32 %v2764, %v2734
        %v2766 = vadd.f32 %v2765, %v2735
        %v2767 = vadd.f32 %v2766, %v2736
        %v2768 = vadd.f32 %v2767, %v2737
        %v2769 = vrot.slane %v2768, 4
        %v2770 = vadd.f32 %v2768, %v2769
        %v2771 = vrot.slane %v2770, 2
        %v2772 = vadd.f32 %v2770, %v2771
        %v2773 = vrot.slane %v2772, 1
        %v2774 = vadd.f32 %v2772, %v2773
        %v2775 = vadd.f32 %v2738, %v2739
        %v2776 = vadd.f32 %v2775, %v2740
        %v2777 = vadd.f32 %v2776, %v2741
        %v2778 = vadd.f32 %v2777, %v2742
        %v2779 = vadd.f32 %v2778, %v2743
        %v2780 = vadd.f32 %v2779, %v2744
        %v2781 = vadd.f32 %v2780, %v2745
        %v2782 = vadd.f32 %v2781, %v2746
        %v2783 = vadd.f32 %v2782, %v2747
        %v2784 = vadd.f32 %v2783, %v2748
        %v2785 = vadd.f32 %v2784, %v2749
        %v2786 = vadd.f32 %v2785, %v2750
        %v2787 = vadd.f32 %v2786, %v2751
        %v2788 = vadd.f32 %v2787, %v2752
        %v2789 = vadd.f32 %v2788, %v2753
        %v2790 = vrot.slane %v2789, 4
        %v2791 = vadd.f32 %v2789, %v2790
        %v2792 = vrot.slane %v2791, 2
        %v2793 = vadd.f32 %v2791, %v2792
        %v2794 = vrot.slane %v2793, 1
        %v2795 = vadd.f32 %v2793, %v2794
        %v2798 = vsel %vm667, %v2795, %v2774
        %2800 = vmatpush.msra.mxu0 %v2580
        %2801 = vmatpush.msra.mxu0 %v2579
        %2802 = vmatpush.msra.mxu0 %v2578
        %2803 = vmatpush.msra.mxu0 %v2577
        %2804 = vmatpush.msra.mxu0 %v2576
        %2805 = vmatpush.msra.mxu0 %v2575
        %2806 = vmatpush.msra.mxu0 %v2574
        %2807 = vmatpush.msra.mxu0 %v2573
        %2808 = vmatpush.msra.mxu0 %v2572
        %2809 = vmatpush.msra.mxu0 %v2571
        %2810 = vmatpush.msra.mxu0 %v2570
        %2811 = vmatpush.msra.mxu0 %v2569
        %2812 = vmatpush.msra.mxu0 %v2568
        %2813 = vmatpush.msra.mxu0 %v2567
        %2814 = vmatpush.msra.mxu0 %v2566
        %2815 = vmatpush.msra.mxu0 %v2565
        %2816 = vmatmul.f32.gmra.mxu0 %v2798
        %v2817 = vpop.f32.mrf.mxu0
        %v2818 = vadd.f32 0.0, %v2817
        %2819 = vdwg.mxu0
        %v2820 = vmul.f32 %v2818, %v2659
        %v2821 = vadd.f32 %v2820, 1e-05
        %v2822 = vrsqrt.pop %v2821
        %v2823 = vmul.f32 %v2822, %v2821
        %v2824 = vmul.f32 %v2823, %v2822
        %v2825 = vmul.f32 0.5, %v2824
        %v2826 = vsub.f32 1.5, %v2825
        %v2827 = vmul.f32 %v2822, %v2826
        %vm2828 = vweird.f32 %v2821
        %vm2829 = vweird.f32 %v2822
        %vm2830 = vmor %vm2828, %vm2829
        %v2831 = vsel %vm2830, %v2822, %v2827
        %v2833 = vsel %vm699, %v2831, 0
        %2835 = vmatpush.msra.mxu0 0.0
        %2836 = vmatpush.msra.mxu0 0.0
        %2837 = vmatpush.msra.mxu0 0.0
        %2838 = vmatpush.msra.mxu0 0.0
        %2839 = vmatpush.msra.mxu0 0.0
        %2840 = vmatpush.msra.mxu0 0.0
        %2841 = vmatpush.msra.mxu0 0.0
        %2842 = vmatpush.msra.mxu0 0.0
        %2843 = vmatpush.msra.mxu0 0.0
        %2844 = vmatpush.msra.mxu0 0.0
        %2845 = vmatpush.msra.mxu0 0.0
        %2846 = vmatpush.msra.mxu0 0.0
        %2847 = vmatpush.msra.mxu0 %v2584
        %2848 = vmatpush.msra.mxu0 %v2583
        %2849 = vmatpush.msra.mxu0 %v2582
        %2850 = vmatpush.msra.mxu0 %v2581
        %2851 = vmatmul.f32.gmra.mxu0 %v2833
        %v2852 = vpop.f32.mrf.mxu0
        %v2853 = vadd.f32 0.0, %v2852
        %2854 = vdwg.mxu0
        %v2856 = vrot.slane %v2853, 1
        %v2857 = vperm.slane %v2853, 0
        %v2858 = vperm.slane %v2856, 0
        %v2861 = vmul.f32 %v2690, %v2857
        %v2862 = vmul.f32 %v2691, %v2857
        %v2863 = vmul.f32 %v2692, %v2857
        %v2864 = vmul.f32 %v2693, %v2857
        %v2865 = vmul.f32 %v2694, %v2857
        %v2866 = vmul.f32 %v2695, %v2857
        %v2867 = vmul.f32 %v2696, %v2857
        %v2868 = vmul.f32 %v2697, %v2857
        %v2869 = vmul.f32 %v2698, %v2857
        %v2870 = vmul.f32 %v2699, %v2857
        %v2871 = vmul.f32 %v2700, %v2857
        %v2872 = vmul.f32 %v2701, %v2857
        %v2873 = vmul.f32 %v2702, %v2857
        %v2874 = vmul.f32 %v2703, %v2857
        %v2875 = vmul.f32 %v2704, %v2857
        %v2876 = vmul.f32 %v2705, %v2857
        %v2877 = vmul.f32 %v2706, %v2858
        %v2878 = vmul.f32 %v2707, %v2858
        %v2879 = vmul.f32 %v2708, %v2858
        %v2880 = vmul.f32 %v2709, %v2858
        %v2881 = vmul.f32 %v2710, %v2858
        %v2882 = vmul.f32 %v2711, %v2858
        %v2883 = vmul.f32 %v2712, %v2858
        %v2884 = vmul.f32 %v2713, %v2858
        %v2885 = vmul.f32 %v2714, %v2858
        %v2886 = vmul.f32 %v2715, %v2858
        %v2887 = vmul.f32 %v2716, %v2858
        %v2888 = vmul.f32 %v2717, %v2858
        %v2889 = vmul.f32 %v2718, %v2858
        %v2890 = vmul.f32 %v2719, %v2858
        %v2891 = vmul.f32 %v2720, %v2858
        %v2892 = vmul.f32 %v2721, %v2858
        %v2894 = vperm.slane %v2585, 0
        %v2896 = vmul.f32 %v2861, %v2894
        %v2897 = vmul.f32 %v2862, %v2894
        %v2898 = vmul.f32 %v2863, %v2894
        %v2899 = vmul.f32 %v2864, %v2894
        %v2900 = vmul.f32 %v2865, %v2894
        %v2901 = vmul.f32 %v2866, %v2894
        %v2902 = vmul.f32 %v2867, %v2894
        %v2903 = vmul.f32 %v2868, %v2894
        %v2904 = vmul.f32 %v2869, %v2894
        %v2905 = vmul.f32 %v2870, %v2894
        %v2906 = vmul.f32 %v2871, %v2894
        %v2907 = vmul.f32 %v2872, %v2894
        %v2908 = vmul.f32 %v2873, %v2894
        %v2909 = vmul.f32 %v2874, %v2894
        %v2910 = vmul.f32 %v2875, %v2894
        %v2911 = vmul.f32 %v2876, %v2894
        %v2912 = vmul.f32 %v2877, %v2894
        %v2913 = vmul.f32 %v2878, %v2894
        %v2914 = vmul.f32 %v2879, %v2894
        %v2915 = vmul.f32 %v2880, %v2894
        %v2916 = vmul.f32 %v2881, %v2894
        %v2917 = vmul.f32 %v2882, %v2894
        %v2918 = vmul.f32 %v2883, %v2894
        %v2919 = vmul.f32 %v2884, %v2894
        %v2920 = vmul.f32 %v2885, %v2894
        %v2921 = vmul.f32 %v2886, %v2894
        %v2922 = vmul.f32 %v2887, %v2894
        %v2923 = vmul.f32 %v2888, %v2894
        %v2924 = vmul.f32 %v2889, %v2894
        %v2925 = vmul.f32 %v2890, %v2894
        %v2926 = vmul.f32 %v2891, %v2894
        %v2927 = vmul.f32 %v2892, %v2894
        %v2929 = vperm.slane %v2586, 0
        %v2931 = vadd.f32 %v2896, %v2929
        %v2932 = vadd.f32 %v2897, %v2929
        %v2933 = vadd.f32 %v2898, %v2929
        %v2934 = vadd.f32 %v2899, %v2929
        %v2935 = vadd.f32 %v2900, %v2929
        %v2936 = vadd.f32 %v2901, %v2929
        %v2937 = vadd.f32 %v2902, %v2929
        %v2938 = vadd.f32 %v2903, %v2929
        %v2939 = vadd.f32 %v2904, %v2929
        %v2940 = vadd.f32 %v2905, %v2929
        %v2941 = vadd.f32 %v2906, %v2929
        %v2942 = vadd.f32 %v2907, %v2929
        %v2943 = vadd.f32 %v2908, %v2929
        %v2944 = vadd.f32 %v2909, %v2929
        %v2945 = vadd.f32 %v2910, %v2929
        %v2946 = vadd.f32 %v2911, %v2929
        %v2947 = vadd.f32 %v2912, %v2929
        %v2948 = vadd.f32 %v2913, %v2929
        %v2949 = vadd.f32 %v2914, %v2929
        %v2950 = vadd.f32 %v2915, %v2929
        %v2951 = vadd.f32 %v2916, %v2929
        %v2952 = vadd.f32 %v2917, %v2929
        %v2953 = vadd.f32 %v2918, %v2929
        %v2954 = vadd.f32 %v2919, %v2929
        %v2955 = vadd.f32 %v2920, %v2929
        %v2956 = vadd.f32 %v2921, %v2929
        %v2957 = vadd.f32 %v2922, %v2929
        %v2958 = vadd.f32 %v2923, %v2929
        %v2959 = vadd.f32 %v2924, %v2929
        %v2960 = vadd.f32 %v2925, %v2929
        %v2961 = vadd.f32 %v2926, %v2929
        %v2962 = vadd.f32 %v2927, %v2929
        %v2963 = vxor.u32 %v2931, 2147483648
        %v2964 = vxor.u32 %v2932, 2147483648
        %v2965 = vxor.u32 %v2933, 2147483648
        %v2966 = vxor.u32 %v2934, 2147483648
        %v2967 = vxor.u32 %v2935, 2147483648
        %v2968 = vxor.u32 %v2936, 2147483648
        %v2969 = vxor.u32 %v2937, 2147483648
        %v2970 = vxor.u32 %v2938, 2147483648
        %v2971 = vxor.u32 %v2939, 2147483648
        %v2972 = vxor.u32 %v2940, 2147483648
        %v2973 = vxor.u32 %v2941, 2147483648
        %v2974 = vxor.u32 %v2942, 2147483648
        %v2975 = vxor.u32 %v2943, 2147483648
        %v2976 = vxor.u32 %v2944, 2147483648
        %v2977 = vxor.u32 %v2945, 2147483648
        %v2978 = vxor.u32 %v2946, 2147483648
        %v2979 = vxor.u32 %v2947, 2147483648
        %v2980 = vxor.u32 %v2948, 2147483648
        %v2981 = vxor.u32 %v2949, 2147483648
        %v2982 = vxor.u32 %v2950, 2147483648
        %v2983 = vxor.u32 %v2951, 2147483648
        %v2984 = vxor.u32 %v2952, 2147483648
        %v2985 = vxor.u32 %v2953, 2147483648
        %v2986 = vxor.u32 %v2954, 2147483648
        %v2987 = vxor.u32 %v2955, 2147483648
        %v2988 = vxor.u32 %v2956, 2147483648
        %v2989 = vxor.u32 %v2957, 2147483648
        %v2990 = vxor.u32 %v2958, 2147483648
        %v2991 = vxor.u32 %v2959, 2147483648
        %v2992 = vxor.u32 %v2960, 2147483648
        %v2993 = vxor.u32 %v2961, 2147483648
        %v2994 = vxor.u32 %v2962, 2147483648
        %v2995 = vmul.f32 %v2963, 1.442695
        %v2996 = vpow.pop %v2995
        %v2997 = vmul.f32 %v2964, 1.442695
        %v2998 = vpow.pop %v2997
        %v2999 = vmul.f32 %v2965, 1.442695
        %v3000 = vpow.pop %v2999
        %v3001 = vmul.f32 %v2966, 1.442695
        %v3002 = vpow.pop %v3001
        %v3003 = vmul.f32 %v2967, 1.442695
        %v3004 = vpow.pop %v3003
        %v3005 = vmul.f32 %v2968, 1.442695
        %v3006 = vpow.pop %v3005
        %v3007 = vmul.f32 %v2969, 1.442695
        %v3008 = vpow.pop %v3007
        %v3009 = vmul.f32 %v2970, 1.442695
        %v3010 = vpow.pop %v3009
        %v3011 = vmul.f32 %v2971, 1.442695
        %v3012 = vpow.pop %v3011
        %v3013 = vmul.f32 %v2972, 1.442695
        %v3014 = vpow.pop %v3013
        %v3015 = vmul.f32 %v2973, 1.442695
        %v3016 = vpow.pop %v3015
        %v3017 = vmul.f32 %v2974, 1.442695
        %v3018 = vpow.pop %v3017
        %v3019 = vmul.f32 %v2975, 1.442695
        %v3020 = vpow.pop %v3019
        %v3021 = vmul.f32 %v2976, 1.442695
        %v3022 = vpow.pop %v3021
        %v3023 = vmul.f32 %v2977, 1.442695
        %v3024 = vpow.pop %v3023
        %v3025 = vmul.f32 %v2978, 1.442695
        %v3026 = vpow.pop %v3025
        %v3027 = vmul.f32 %v2979, 1.442695
        %v3028 = vpow.pop %v3027
        %v3029 = vmul.f32 %v2980, 1.442695
        %v3030 = vpow.pop %v3029
        %v3031 = vmul.f32 %v2981, 1.442695
        %v3032 = vpow.pop %v3031
        %v3033 = vmul.f32 %v2982, 1.442695
        %v3034 = vpow.pop %v3033
        %v3035 = vmul.f32 %v2983, 1.442695
        %v3036 = vpow.pop %v3035
        %v3037 = vmul.f32 %v2984, 1.442695
        %v3038 = vpow.pop %v3037
        %v3039 = vmul.f32 %v2985, 1.442695
        %v3040 = vpow.pop %v3039
        %v3041 = vmul.f32 %v2986, 1.442695
        %v3042 = vpow.pop %v3041
        %v3043 = vmul.f32 %v2987, 1.442695
        %v3044 = vpow.pop %v3043
        %v3045 = vmul.f32 %v2988, 1.442695
        %v3046 = vpow.pop %v3045
        %v3047 = vmul.f32 %v2989, 1.442695
        %v3048 = vpow.pop %v3047
        %v3049 = vmul.f32 %v2990, 1.442695
        %v3050 = vpow.pop %v3049
        %v3051 = vmul.f32 %v2991, 1.442695
        %v3052 = vpow.pop %v3051
        %v3053 = vmul.f32 %v2992, 1.442695
        %v3054 = vpow.pop %v3053
        %v3055 = vmul.f32 %v2993, 1.442695
        %v3056 = vpow.pop %v3055
        %v3057 = vmul.f32 %v2994, 1.442695
        %v3058 = vpow.pop %v3057
        %v3059 = vadd.f32 %v2996, 1.0
        %v3060 = vadd.f32 %v2998, 1.0
        %v3061 = vadd.f32 %v3000, 1.0
        %v3062 = vadd.f32 %v3002, 1.0
        %v3063 = vadd.f32 %v3004, 1.0
        %v3064 = vadd.f32 %v3006, 1.0
        %v3065 = vadd.f32 %v3008, 1.0
        %v3066 = vadd.f32 %v3010, 1.0
        %v3067 = vadd.f32 %v3012, 1.0
        %v3068 = vadd.f32 %v3014, 1.0
        %v3069 = vadd.f32 %v3016, 1.0
        %v3070 = vadd.f32 %v3018, 1.0
        %v3071 = vadd.f32 %v3020, 1.0
        %v3072 = vadd.f32 %v3022, 1.0
        %v3073 = vadd.f32 %v3024, 1.0
        %v3074 = vadd.f32 %v3026, 1.0
        %v3075 = vadd.f32 %v3028, 1.0
        %v3076 = vadd.f32 %v3030, 1.0
        %v3077 = vadd.f32 %v3032, 1.0
        %v3078 = vadd.f32 %v3034, 1.0
        %v3079 = vadd.f32 %v3036, 1.0
        %v3080 = vadd.f32 %v3038, 1.0
        %v3081 = vadd.f32 %v3040, 1.0
        %v3082 = vadd.f32 %v3042, 1.0
        %v3083 = vadd.f32 %v3044, 1.0
        %v3084 = vadd.f32 %v3046, 1.0
        %v3085 = vadd.f32 %v3048, 1.0
        %v3086 = vadd.f32 %v3050, 1.0
        %v3087 = vadd.f32 %v3052, 1.0
        %v3088 = vadd.f32 %v3054, 1.0
        %v3089 = vadd.f32 %v3056, 1.0
        %v3090 = vadd.f32 %v3058, 1.0
        %v3091 = vrcp.pop %v3059
        %v3092 = vmul.f32 %v3059, %v3091
        %v3093 = vsub.f32 1.0, %v3092
        %v3094 = vmul.f32 %v3091, %v3093
        %v3095 = vadd.f32 %v3091, %v3094
        %vm3096 = vweird.f32 %v3059
        %vm3097 = vweird.f32 %v3091
        %vm3098 = vmor %vm3096, %vm3097
        %v3099 = vsel %vm3098, %v3091, %v3095
        %v3100 = vand.u32 2147483647, %v3059
        %vm3101 = vcmp.eq.f32.partialorder %v3100, 8.507059e+37
        %v3102 = vand.u32 %v3059, 2147483648
        %v3103 = vor.u32 1.1754944e-38, %v3102
        %v3104 = vsel %vm3101, %v3103, %v3099
        %v3105 = vmul.f32 1.0, %v3104
        %v3106 = vrcp.pop %v3060
        %v3107 = vmul.f32 %v3060, %v3106
        %v3108 = vsub.f32 1.0, %v3107
        %v3109 = vmul.f32 %v3106, %v3108
        %v3110 = vadd.f32 %v3106, %v3109
        %vm3111 = vweird.f32 %v3060
        %vm3112 = vweird.f32 %v3106
        %vm3113 = vmor %vm3111, %vm3112
        %v3114 = vsel %vm3113, %v3106, %v3110
        %v3115 = vand.u32 2147483647, %v3060
        %vm3116 = vcmp.eq.f32.partialorder %v3115, 8.507059e+37
        %v3117 = vand.u32 %v3060, 2147483648
        %v3118 = vor.u32 1.1754944e-38, %v3117
        %v3119 = vsel %vm3116, %v3118, %v3114
        %v3120 = vmul.f32 1.0, %v3119
        %v3121 = vrcp.pop %v3061
        %v3122 = vmul.f32 %v3061, %v3121
        %v3123 = vsub.f32 1.0, %v3122
        %v3124 = vmul.f32 %v3121, %v3123
        %v3125 = vadd.f32 %v3121, %v3124
        %vm3126 = vweird.f32 %v3061
        %vm3127 = vweird.f32 %v3121
        %vm3128 = vmor %vm3126, %vm3127
        %v3129 = vsel %vm3128, %v3121, %v3125
        %v3130 = vand.u32 2147483647, %v3061
        %vm3131 = vcmp.eq.f32.partialorder %v3130, 8.507059e+37
        %v3132 = vand.u32 %v3061, 2147483648
        %v3133 = vor.u32 1.1754944e-38, %v3132
        %v3134 = vsel %vm3131, %v3133, %v3129
        %v3135 = vmul.f32 1.0, %v3134
        %v3136 = vrcp.pop %v3062
        %v3137 = vmul.f32 %v3062, %v3136
        %v3138 = vsub.f32 1.0, %v3137
        %v3139 = vmul.f32 %v3136, %v3138
        %v3140 = vadd.f32 %v3136, %v3139
        %vm3141 = vweird.f32 %v3062
        %vm3142 = vweird.f32 %v3136
        %vm3143 = vmor %vm3141, %vm3142
        %v3144 = vsel %vm3143, %v3136, %v3140
        %v3145 = vand.u32 2147483647, %v3062
        %vm3146 = vcmp.eq.f32.partialorder %v3145, 8.507059e+37
        %v3147 = vand.u32 %v3062, 2147483648
        %v3148 = vor.u32 1.1754944e-38, %v3147
        %v3149 = vsel %vm3146, %v3148, %v3144
        %v3150 = vmul.f32 1.0, %v3149
        %v3151 = vrcp.pop %v3063
        %v3152 = vmul.f32 %v3063, %v3151
        %v3153 = vsub.f32 1.0, %v3152
        %v3154 = vmul.f32 %v3151, %v3153
        %v3155 = vadd.f32 %v3151, %v3154
        %vm3156 = vweird.f32 %v3063
        %vm3157 = vweird.f32 %v3151
        %vm3158 = vmor %vm3156, %vm3157
        %v3159 = vsel %vm3158, %v3151, %v3155
        %v3160 = vand.u32 2147483647, %v3063
        %vm3161 = vcmp.eq.f32.partialorder %v3160, 8.507059e+37
        %v3162 = vand.u32 %v3063, 2147483648
        %v3163 = vor.u32 1.1754944e-38, %v3162
        %v3164 = vsel %vm3161, %v3163, %v3159
        %v3165 = vmul.f32 1.0, %v3164
        %v3166 = vrcp.pop %v3064
        %v3167 = vmul.f32 %v3064, %v3166
        %v3168 = vsub.f32 1.0, %v3167
        %v3169 = vmul.f32 %v3166, %v3168
        %v3170 = vadd.f32 %v3166, %v3169
        %vm3171 = vweird.f32 %v3064
        %vm3172 = vweird.f32 %v3166
        %vm3173 = vmor %vm3171, %vm3172
        %v3174 = vsel %vm3173, %v3166, %v3170
        %v3175 = vand.u32 2147483647, %v3064
        %vm3176 = vcmp.eq.f32.partialorder %v3175, 8.507059e+37
        %v3177 = vand.u32 %v3064, 2147483648
        %v3178 = vor.u32 1.1754944e-38, %v3177
        %v3179 = vsel %vm3176, %v3178, %v3174
        %v3180 = vmul.f32 1.0, %v3179
        %v3181 = vrcp.pop %v3065
        %v3182 = vmul.f32 %v3065, %v3181
        %v3183 = vsub.f32 1.0, %v3182
        %v3184 = vmul.f32 %v3181, %v3183
        %v3185 = vadd.f32 %v3181, %v3184
        %vm3186 = vweird.f32 %v3065
        %vm3187 = vweird.f32 %v3181
        %vm3188 = vmor %vm3186, %vm3187
        %v3189 = vsel %vm3188, %v3181, %v3185
        %v3190 = vand.u32 2147483647, %v3065
        %vm3191 = vcmp.eq.f32.partialorder %v3190, 8.507059e+37
        %v3192 = vand.u32 %v3065, 2147483648
        %v3193 = vor.u32 1.1754944e-38, %v3192
        %v3194 = vsel %vm3191, %v3193, %v3189
        %v3195 = vmul.f32 1.0, %v3194
        %v3196 = vrcp.pop %v3066
        %v3197 = vmul.f32 %v3066, %v3196
        %v3198 = vsub.f32 1.0, %v3197
        %v3199 = vmul.f32 %v3196, %v3198
        %v3200 = vadd.f32 %v3196, %v3199
        %vm3201 = vweird.f32 %v3066
        %vm3202 = vweird.f32 %v3196
        %vm3203 = vmor %vm3201, %vm3202
        %v3204 = vsel %vm3203, %v3196, %v3200
        %v3205 = vand.u32 2147483647, %v3066
        %vm3206 = vcmp.eq.f32.partialorder %v3205, 8.507059e+37
        %v3207 = vand.u32 %v3066, 2147483648
        %v3208 = vor.u32 1.1754944e-38, %v3207
        %v3209 = vsel %vm3206, %v3208, %v3204
        %v3210 = vmul.f32 1.0, %v3209
        %v3211 = vrcp.pop %v3067
        %v3212 = vmul.f32 %v3067, %v3211
        %v3213 = vsub.f32 1.0, %v3212
        %v3214 = vmul.f32 %v3211, %v3213
        %v3215 = vadd.f32 %v3211, %v3214
        %vm3216 = vweird.f32 %v3067
        %vm3217 = vweird.f32 %v3211
        %vm3218 = vmor %vm3216, %vm3217
        %v3219 = vsel %vm3218, %v3211, %v3215
        %v3220 = vand.u32 2147483647, %v3067
        %vm3221 = vcmp.eq.f32.partialorder %v3220, 8.507059e+37
        %v3222 = vand.u32 %v3067, 2147483648
        %v3223 = vor.u32 1.1754944e-38, %v3222
        %v3224 = vsel %vm3221, %v3223, %v3219
        %v3225 = vmul.f32 1.0, %v3224
        %v3226 = vrcp.pop %v3068
        %v3227 = vmul.f32 %v3068, %v3226
        %v3228 = vsub.f32 1.0, %v3227
        %v3229 = vmul.f32 %v3226, %v3228
        %v3230 = vadd.f32 %v3226, %v3229
        %vm3231 = vweird.f32 %v3068
        %vm3232 = vweird.f32 %v3226
        %vm3233 = vmor %vm3231, %vm3232
        %v3234 = vsel %vm3233, %v3226, %v3230
        %v3235 = vand.u32 2147483647, %v3068
        %vm3236 = vcmp.eq.f32.partialorder %v3235, 8.507059e+37
        %v3237 = vand.u32 %v3068, 2147483648
        %v3238 = vor.u32 1.1754944e-38, %v3237
        %v3239 = vsel %vm3236, %v3238, %v3234
        %v3240 = vmul.f32 1.0, %v3239
        %v3241 = vrcp.pop %v3069
        %v3242 = vmul.f32 %v3069, %v3241
        %v3243 = vsub.f32 1.0, %v3242
        %v3244 = vmul.f32 %v3241, %v3243
        %v3245 = vadd.f32 %v3241, %v3244
        %vm3246 = vweird.f32 %v3069
        %vm3247 = vweird.f32 %v3241
        %vm3248 = vmor %vm3246, %vm3247
        %v3249 = vsel %vm3248, %v3241, %v3245
        %v3250 = vand.u32 2147483647, %v3069
        %vm3251 = vcmp.eq.f32.partialorder %v3250, 8.507059e+37
        %v3252 = vand.u32 %v3069, 2147483648
        %v3253 = vor.u32 1.1754944e-38, %v3252
        %v3254 = vsel %vm3251, %v3253, %v3249
        %v3255 = vmul.f32 1.0, %v3254
        %v3256 = vrcp.pop %v3070
        %v3257 = vmul.f32 %v3070, %v3256
        %v3258 = vsub.f32 1.0, %v3257
        %v3259 = vmul.f32 %v3256, %v3258
        %v3260 = vadd.f32 %v3256, %v3259
        %vm3261 = vweird.f32 %v3070
        %vm3262 = vweird.f32 %v3256
        %vm3263 = vmor %vm3261, %vm3262
        %v3264 = vsel %vm3263, %v3256, %v3260
        %v3265 = vand.u32 2147483647, %v3070
        %vm3266 = vcmp.eq.f32.partialorder %v3265, 8.507059e+37
        %v3267 = vand.u32 %v3070, 2147483648
        %v3268 = vor.u32 1.1754944e-38, %v3267
        %v3269 = vsel %vm3266, %v3268, %v3264
        %v3270 = vmul.f32 1.0, %v3269
        %v3271 = vrcp.pop %v3071
        %v3272 = vmul.f32 %v3071, %v3271
        %v3273 = vsub.f32 1.0, %v3272
        %v3274 = vmul.f32 %v3271, %v3273
        %v3275 = vadd.f32 %v3271, %v3274
        %vm3276 = vweird.f32 %v3071
        %vm3277 = vweird.f32 %v3271
        %vm3278 = vmor %vm3276, %vm3277
        %v3279 = vsel %vm3278, %v3271, %v3275
        %v3280 = vand.u32 2147483647, %v3071
        %vm3281 = vcmp.eq.f32.partialorder %v3280, 8.507059e+37
        %v3282 = vand.u32 %v3071, 2147483648
        %v3283 = vor.u32 1.1754944e-38, %v3282
        %v3284 = vsel %vm3281, %v3283, %v3279
        %v3285 = vmul.f32 1.0, %v3284
        %v3286 = vrcp.pop %v3072
        %v3287 = vmul.f32 %v3072, %v3286
        %v3288 = vsub.f32 1.0, %v3287
        %v3289 = vmul.f32 %v3286, %v3288
        %v3290 = vadd.f32 %v3286, %v3289
        %vm3291 = vweird.f32 %v3072
        %vm3292 = vweird.f32 %v3286
        %vm3293 = vmor %vm3291, %vm3292
        %v3294 = vsel %vm3293, %v3286, %v3290
        %v3295 = vand.u32 2147483647, %v3072
        %vm3296 = vcmp.eq.f32.partialorder %v3295, 8.507059e+37
        %v3297 = vand.u32 %v3072, 2147483648
        %v3298 = vor.u32 1.1754944e-38, %v3297
        %v3299 = vsel %vm3296, %v3298, %v3294
        %v3300 = vmul.f32 1.0, %v3299
        %v3301 = vrcp.pop %v3073
        %v3302 = vmul.f32 %v3073, %v3301
        %v3303 = vsub.f32 1.0, %v3302
        %v3304 = vmul.f32 %v3301, %v3303
        %v3305 = vadd.f32 %v3301, %v3304
        %vm3306 = vweird.f32 %v3073
        %vm3307 = vweird.f32 %v3301
        %vm3308 = vmor %vm3306, %vm3307
        %v3309 = vsel %vm3308, %v3301, %v3305
        %v3310 = vand.u32 2147483647, %v3073
        %vm3311 = vcmp.eq.f32.partialorder %v3310, 8.507059e+37
        %v3312 = vand.u32 %v3073, 2147483648
        %v3313 = vor.u32 1.1754944e-38, %v3312
        %v3314 = vsel %vm3311, %v3313, %v3309
        %v3315 = vmul.f32 1.0, %v3314
        %v3316 = vrcp.pop %v3074
        %v3317 = vmul.f32 %v3074, %v3316
        %v3318 = vsub.f32 1.0, %v3317
        %v3319 = vmul.f32 %v3316, %v3318
        %v3320 = vadd.f32 %v3316, %v3319
        %vm3321 = vweird.f32 %v3074
        %vm3322 = vweird.f32 %v3316
        %vm3323 = vmor %vm3321, %vm3322
        %v3324 = vsel %vm3323, %v3316, %v3320
        %v3325 = vand.u32 2147483647, %v3074
        %vm3326 = vcmp.eq.f32.partialorder %v3325, 8.507059e+37
        %v3327 = vand.u32 %v3074, 2147483648
        %v3328 = vor.u32 1.1754944e-38, %v3327
        %v3329 = vsel %vm3326, %v3328, %v3324
        %v3330 = vmul.f32 1.0, %v3329
        %v3331 = vrcp.pop %v3075
        %v3332 = vmul.f32 %v3075, %v3331
        %v3333 = vsub.f32 1.0, %v3332
        %v3334 = vmul.f32 %v3331, %v3333
        %v3335 = vadd.f32 %v3331, %v3334
        %vm3336 = vweird.f32 %v3075
        %vm3337 = vweird.f32 %v3331
        %vm3338 = vmor %vm3336, %vm3337
        %v3339 = vsel %vm3338, %v3331, %v3335
        %v3340 = vand.u32 2147483647, %v3075
        %vm3341 = vcmp.eq.f32.partialorder %v3340, 8.507059e+37
        %v3342 = vand.u32 %v3075, 2147483648
        %v3343 = vor.u32 1.1754944e-38, %v3342
        %v3344 = vsel %vm3341, %v3343, %v3339
        %v3345 = vmul.f32 1.0, %v3344
        %v3346 = vrcp.pop %v3076
        %v3347 = vmul.f32 %v3076, %v3346
        %v3348 = vsub.f32 1.0, %v3347
        %v3349 = vmul.f32 %v3346, %v3348
        %v3350 = vadd.f32 %v3346, %v3349
        %vm3351 = vweird.f32 %v3076
        %vm3352 = vweird.f32 %v3346
        %vm3353 = vmor %vm3351, %vm3352
        %v3354 = vsel %vm3353, %v3346, %v3350
        %v3355 = vand.u32 2147483647, %v3076
        %vm3356 = vcmp.eq.f32.partialorder %v3355, 8.507059e+37
        %v3357 = vand.u32 %v3076, 2147483648
        %v3358 = vor.u32 1.1754944e-38, %v3357
        %v3359 = vsel %vm3356, %v3358, %v3354
        %v3360 = vmul.f32 1.0, %v3359
        %v3361 = vrcp.pop %v3077
        %v3362 = vmul.f32 %v3077, %v3361
        %v3363 = vsub.f32 1.0, %v3362
        %v3364 = vmul.f32 %v3361, %v3363
        %v3365 = vadd.f32 %v3361, %v3364
        %vm3366 = vweird.f32 %v3077
        %vm3367 = vweird.f32 %v3361
        %vm3368 = vmor %vm3366, %vm3367
        %v3369 = vsel %vm3368, %v3361, %v3365
        %v3370 = vand.u32 2147483647, %v3077
        %vm3371 = vcmp.eq.f32.partialorder %v3370, 8.507059e+37
        %v3372 = vand.u32 %v3077, 2147483648
        %v3373 = vor.u32 1.1754944e-38, %v3372
        %v3374 = vsel %vm3371, %v3373, %v3369
        %v3375 = vmul.f32 1.0, %v3374
        %v3376 = vrcp.pop %v3078
        %v3377 = vmul.f32 %v3078, %v3376
        %v3378 = vsub.f32 1.0, %v3377
        %v3379 = vmul.f32 %v3376, %v3378
        %v3380 = vadd.f32 %v3376, %v3379
        %vm3381 = vweird.f32 %v3078
        %vm3382 = vweird.f32 %v3376
        %vm3383 = vmor %vm3381, %vm3382
        %v3384 = vsel %vm3383, %v3376, %v3380
        %v3385 = vand.u32 2147483647, %v3078
        %vm3386 = vcmp.eq.f32.partialorder %v3385, 8.507059e+37
        %v3387 = vand.u32 %v3078, 2147483648
        %v3388 = vor.u32 1.1754944e-38, %v3387
        %v3389 = vsel %vm3386, %v3388, %v3384
        %v3390 = vmul.f32 1.0, %v3389
        %v3391 = vrcp.pop %v3079
        %v3392 = vmul.f32 %v3079, %v3391
        %v3393 = vsub.f32 1.0, %v3392
        %v3394 = vmul.f32 %v3391, %v3393
        %v3395 = vadd.f32 %v3391, %v3394
        %vm3396 = vweird.f32 %v3079
        %vm3397 = vweird.f32 %v3391
        %vm3398 = vmor %vm3396, %vm3397
        %v3399 = vsel %vm3398, %v3391, %v3395
        %v3400 = vand.u32 2147483647, %v3079
        %vm3401 = vcmp.eq.f32.partialorder %v3400, 8.507059e+37
        %v3402 = vand.u32 %v3079, 2147483648
        %v3403 = vor.u32 1.1754944e-38, %v3402
        %v3404 = vsel %vm3401, %v3403, %v3399
        %v3405 = vmul.f32 1.0, %v3404
        %v3406 = vrcp.pop %v3080
        %v3407 = vmul.f32 %v3080, %v3406
        %v3408 = vsub.f32 1.0, %v3407
        %v3409 = vmul.f32 %v3406, %v3408
        %v3410 = vadd.f32 %v3406, %v3409
        %vm3411 = vweird.f32 %v3080
        %vm3412 = vweird.f32 %v3406
        %vm3413 = vmor %vm3411, %vm3412
        %v3414 = vsel %vm3413, %v3406, %v3410
        %v3415 = vand.u32 2147483647, %v3080
        %vm3416 = vcmp.eq.f32.partialorder %v3415, 8.507059e+37
        %v3417 = vand.u32 %v3080, 2147483648
        %v3418 = vor.u32 1.1754944e-38, %v3417
        %v3419 = vsel %vm3416, %v3418, %v3414
        %v3420 = vmul.f32 1.0, %v3419
        %v3421 = vrcp.pop %v3081
        %v3422 = vmul.f32 %v3081, %v3421
        %v3423 = vsub.f32 1.0, %v3422
        %v3424 = vmul.f32 %v3421, %v3423
        %v3425 = vadd.f32 %v3421, %v3424
        %vm3426 = vweird.f32 %v3081
        %vm3427 = vweird.f32 %v3421
        %vm3428 = vmor %vm3426, %vm3427
        %v3429 = vsel %vm3428, %v3421, %v3425
        %v3430 = vand.u32 2147483647, %v3081
        %vm3431 = vcmp.eq.f32.partialorder %v3430, 8.507059e+37
        %v3432 = vand.u32 %v3081, 2147483648
        %v3433 = vor.u32 1.1754944e-38, %v3432
        %v3434 = vsel %vm3431, %v3433, %v3429
        %v3435 = vmul.f32 1.0, %v3434
        %v3436 = vrcp.pop %v3082
        %v3437 = vmul.f32 %v3082, %v3436
        %v3438 = vsub.f32 1.0, %v3437
        %v3439 = vmul.f32 %v3436, %v3438
        %v3440 = vadd.f32 %v3436, %v3439
        %vm3441 = vweird.f32 %v3082
        %vm3442 = vweird.f32 %v3436
        %vm3443 = vmor %vm3441, %vm3442
        %v3444 = vsel %vm3443, %v3436, %v3440
        %v3445 = vand.u32 2147483647, %v3082
        %vm3446 = vcmp.eq.f32.partialorder %v3445, 8.507059e+37
        %v3447 = vand.u32 %v3082, 2147483648
        %v3448 = vor.u32 1.1754944e-38, %v3447
        %v3449 = vsel %vm3446, %v3448, %v3444
        %v3450 = vmul.f32 1.0, %v3449
        %v3451 = vrcp.pop %v3083
        %v3452 = vmul.f32 %v3083, %v3451
        %v3453 = vsub.f32 1.0, %v3452
        %v3454 = vmul.f32 %v3451, %v3453
        %v3455 = vadd.f32 %v3451, %v3454
        %vm3456 = vweird.f32 %v3083
        %vm3457 = vweird.f32 %v3451
        %vm3458 = vmor %vm3456, %vm3457
        %v3459 = vsel %vm3458, %v3451, %v3455
        %v3460 = vand.u32 2147483647, %v3083
        %vm3461 = vcmp.eq.f32.partialorder %v3460, 8.507059e+37
        %v3462 = vand.u32 %v3083, 2147483648
        %v3463 = vor.u32 1.1754944e-38, %v3462
        %v3464 = vsel %vm3461, %v3463, %v3459
        %v3465 = vmul.f32 1.0, %v3464
        %v3466 = vrcp.pop %v3084
        %v3467 = vmul.f32 %v3084, %v3466
        %v3468 = vsub.f32 1.0, %v3467
        %v3469 = vmul.f32 %v3466, %v3468
        %v3470 = vadd.f32 %v3466, %v3469
        %vm3471 = vweird.f32 %v3084
        %vm3472 = vweird.f32 %v3466
        %vm3473 = vmor %vm3471, %vm3472
        %v3474 = vsel %vm3473, %v3466, %v3470
        %v3475 = vand.u32 2147483647, %v3084
        %vm3476 = vcmp.eq.f32.partialorder %v3475, 8.507059e+37
        %v3477 = vand.u32 %v3084, 2147483648
        %v3478 = vor.u32 1.1754944e-38, %v3477
        %v3479 = vsel %vm3476, %v3478, %v3474
        %v3480 = vmul.f32 1.0, %v3479
        %v3481 = vrcp.pop %v3085
        %v3482 = vmul.f32 %v3085, %v3481
        %v3483 = vsub.f32 1.0, %v3482
        %v3484 = vmul.f32 %v3481, %v3483
        %v3485 = vadd.f32 %v3481, %v3484
        %vm3486 = vweird.f32 %v3085
        %vm3487 = vweird.f32 %v3481
        %vm3488 = vmor %vm3486, %vm3487
        %v3489 = vsel %vm3488, %v3481, %v3485
        %v3490 = vand.u32 2147483647, %v3085
        %vm3491 = vcmp.eq.f32.partialorder %v3490, 8.507059e+37
        %v3492 = vand.u32 %v3085, 2147483648
        %v3493 = vor.u32 1.1754944e-38, %v3492
        %v3494 = vsel %vm3491, %v3493, %v3489
        %v3495 = vmul.f32 1.0, %v3494
        %v3496 = vrcp.pop %v3086
        %v3497 = vmul.f32 %v3086, %v3496
        %v3498 = vsub.f32 1.0, %v3497
        %v3499 = vmul.f32 %v3496, %v3498
        %v3500 = vadd.f32 %v3496, %v3499
        %vm3501 = vweird.f32 %v3086
        %vm3502 = vweird.f32 %v3496
        %vm3503 = vmor %vm3501, %vm3502
        %v3504 = vsel %vm3503, %v3496, %v3500
        %v3505 = vand.u32 2147483647, %v3086
        %vm3506 = vcmp.eq.f32.partialorder %v3505, 8.507059e+37
        %v3507 = vand.u32 %v3086, 2147483648
        %v3508 = vor.u32 1.1754944e-38, %v3507
        %v3509 = vsel %vm3506, %v3508, %v3504
        %v3510 = vmul.f32 1.0, %v3509
        %v3511 = vrcp.pop %v3087
        %v3512 = vmul.f32 %v3087, %v3511
        %v3513 = vsub.f32 1.0, %v3512
        %v3514 = vmul.f32 %v3511, %v3513
        %v3515 = vadd.f32 %v3511, %v3514
        %vm3516 = vweird.f32 %v3087
        %vm3517 = vweird.f32 %v3511
        %vm3518 = vmor %vm3516, %vm3517
        %v3519 = vsel %vm3518, %v3511, %v3515
        %v3520 = vand.u32 2147483647, %v3087
        %vm3521 = vcmp.eq.f32.partialorder %v3520, 8.507059e+37
        %v3522 = vand.u32 %v3087, 2147483648
        %v3523 = vor.u32 1.1754944e-38, %v3522
        %v3524 = vsel %vm3521, %v3523, %v3519
        %v3525 = vmul.f32 1.0, %v3524
        %v3526 = vrcp.pop %v3088
        %v3527 = vmul.f32 %v3088, %v3526
        %v3528 = vsub.f32 1.0, %v3527
        %v3529 = vmul.f32 %v3526, %v3528
        %v3530 = vadd.f32 %v3526, %v3529
        %vm3531 = vweird.f32 %v3088
        %vm3532 = vweird.f32 %v3526
        %vm3533 = vmor %vm3531, %vm3532
        %v3534 = vsel %vm3533, %v3526, %v3530
        %v3535 = vand.u32 2147483647, %v3088
        %vm3536 = vcmp.eq.f32.partialorder %v3535, 8.507059e+37
        %v3537 = vand.u32 %v3088, 2147483648
        %v3538 = vor.u32 1.1754944e-38, %v3537
        %v3539 = vsel %vm3536, %v3538, %v3534
        %v3540 = vmul.f32 1.0, %v3539
        %v3541 = vrcp.pop %v3089
        %v3542 = vmul.f32 %v3089, %v3541
        %v3543 = vsub.f32 1.0, %v3542
        %v3544 = vmul.f32 %v3541, %v3543
        %v3545 = vadd.f32 %v3541, %v3544
        %vm3546 = vweird.f32 %v3089
        %vm3547 = vweird.f32 %v3541
        %vm3548 = vmor %vm3546, %vm3547
        %v3549 = vsel %vm3548, %v3541, %v3545
        %v3550 = vand.u32 2147483647, %v3089
        %vm3551 = vcmp.eq.f32.partialorder %v3550, 8.507059e+37
        %v3552 = vand.u32 %v3089, 2147483648
        %v3553 = vor.u32 1.1754944e-38, %v3552
        %v3554 = vsel %vm3551, %v3553, %v3549
        %v3555 = vmul.f32 1.0, %v3554
        %v3556 = vrcp.pop %v3090
        %v3557 = vmul.f32 %v3090, %v3556
        %v3558 = vsub.f32 1.0, %v3557
        %v3559 = vmul.f32 %v3556, %v3558
        %v3560 = vadd.f32 %v3556, %v3559
        %vm3561 = vweird.f32 %v3090
        %vm3562 = vweird.f32 %v3556
        %vm3563 = vmor %vm3561, %vm3562
        %v3564 = vsel %vm3563, %v3556, %v3560
        %v3565 = vand.u32 2147483647, %v3090
        %vm3566 = vcmp.eq.f32.partialorder %v3565, 8.507059e+37
        %v3567 = vand.u32 %v3090, 2147483648
        %v3568 = vor.u32 1.1754944e-38, %v3567
        %v3569 = vsel %vm3566, %v3568, %v3564
        %v3570 = vmul.f32 1.0, %v3569
        %v3571 = vmul.f32 %v2931, %v3105
        %v3572 = vmul.f32 %v2932, %v3120
        %v3573 = vmul.f32 %v2933, %v3135
        %v3574 = vmul.f32 %v2934, %v3150
        %v3575 = vmul.f32 %v2935, %v3165
        %v3576 = vmul.f32 %v2936, %v3180
        %v3577 = vmul.f32 %v2937, %v3195
        %v3578 = vmul.f32 %v2938, %v3210
        %v3579 = vmul.f32 %v2939, %v3225
        %v3580 = vmul.f32 %v2940, %v3240
        %v3581 = vmul.f32 %v2941, %v3255
        %v3582 = vmul.f32 %v2942, %v3270
        %v3583 = vmul.f32 %v2943, %v3285
        %v3584 = vmul.f32 %v2944, %v3300
        %v3585 = vmul.f32 %v2945, %v3315
        %v3586 = vmul.f32 %v2946, %v3330
        %v3587 = vmul.f32 %v2947, %v3345
        %v3588 = vmul.f32 %v2948, %v3360
        %v3589 = vmul.f32 %v2949, %v3375
        %v3590 = vmul.f32 %v2950, %v3390
        %v3591 = vmul.f32 %v2951, %v3405
        %v3592 = vmul.f32 %v2952, %v3420
        %v3593 = vmul.f32 %v2953, %v3435
        %v3594 = vmul.f32 %v2954, %v3450
        %v3595 = vmul.f32 %v2955, %v3465
        %v3596 = vmul.f32 %v2956, %v3480
        %v3597 = vmul.f32 %v2957, %v3495
        %v3598 = vmul.f32 %v2958, %v3510
        %v3599 = vmul.f32 %v2959, %v3525
        %v3600 = vmul.f32 %v2960, %v3540
        %v3601 = vmul.f32 %v2961, %v3555
        %v3602 = vmul.f32 %v2962, %v3570
        %v3603 = vld [vmem:[%s13] sm:$0x1]
        %v3636 = vrot.slane %v3571, 7
        %v3637 = vrot.slane %v3572, 7
        %v3638 = vsel %vm1708, %v3636, %v3637
        %v3639 = vrot.slane %v3573, 7
        %v3640 = vsel %vm1708, %v3637, %v3639
        %v3641 = vrot.slane %v3574, 7
        %v3642 = vsel %vm1708, %v3639, %v3641
        %v3643 = vrot.slane %v3575, 7
        %v3644 = vsel %vm1708, %v3641, %v3643
        %v3645 = vrot.slane %v3576, 7
        %v3646 = vsel %vm1708, %v3643, %v3645
        %v3647 = vrot.slane %v3577, 7
        %v3648 = vsel %vm1708, %v3645, %v3647
        %v3649 = vrot.slane %v3578, 7
        %v3650 = vsel %vm1708, %v3647, %v3649
        %v3651 = vrot.slane %v3579, 7
        %v3652 = vsel %vm1708, %v3649, %v3651
        %v3653 = vrot.slane %v3580, 7
        %v3654 = vsel %vm1708, %v3651, %v3653
        %v3655 = vrot.slane %v3581, 7
        %v3656 = vsel %vm1708, %v3653, %v3655
        %v3657 = vrot.slane %v3582, 7
        %v3658 = vsel %vm1708, %v3655, %v3657
        %v3659 = vrot.slane %v3583, 7
        %v3660 = vsel %vm1708, %v3657, %v3659
        %v3661 = vrot.slane %v3584, 7
        %v3662 = vsel %vm1708, %v3659, %v3661
        %v3663 = vrot.slane %v3585, 7
        %v3664 = vsel %vm1708, %v3661, %v3663
        %v3665 = vrot.slane %v3586, 7
        %v3666 = vsel %vm1708, %v3663, %v3665
        %v3667 = vrot.slane %v3587, 7
        %v3668 = vrot.slane %v3588, 7
        %v3669 = vsel %vm1708, %v3667, %v3668
        %v3670 = vrot.slane %v3589, 7
        %v3671 = vsel %vm1708, %v3668, %v3670
        %v3672 = vrot.slane %v3590, 7
        %v3673 = vsel %vm1708, %v3670, %v3672
        %v3674 = vrot.slane %v3591, 7
        %v3675 = vsel %vm1708, %v3672, %v3674
        %v3676 = vrot.slane %v3592, 7
        %v3677 = vsel %vm1708, %v3674, %v3676
        %v3678 = vrot.slane %v3593, 7
        %v3679 = vsel %vm1708, %v3676, %v3678
        %v3680 = vrot.slane %v3594, 7
        %v3681 = vsel %vm1708, %v3678, %v3680
        %v3682 = vrot.slane %v3595, 7
        %v3683 = vsel %vm1708, %v3680, %v3682
        %v3684 = vrot.slane %v3596, 7
        %v3685 = vsel %vm1708, %v3682, %v3684
        %v3686 = vrot.slane %v3597, 7
        %v3687 = vsel %vm1708, %v3684, %v3686
        %v3688 = vrot.slane %v3598, 7
        %v3689 = vsel %vm1708, %v3686, %v3688
        %v3690 = vrot.slane %v3599, 7
        %v3691 = vsel %vm1708, %v3688, %v3690
        %v3692 = vrot.slane %v3600, 7
        %v3693 = vsel %vm1708, %v3690, %v3692
        %v3694 = vrot.slane %v3601, 7
        %v3695 = vsel %vm1708, %v3692, %v3694
        %v3696 = vrot.slane %v3602, 7
        %v3697 = vsel %vm1708, %v3694, %v3696
        %v3730 = vsel %vm1708, 0.0, %v3636
        %v3731 = vsel %vm1708, 0.0, %v3667
        %v3732 = vrot.slane %v3571, 1
        %v3733 = vrot.slane %v3572, 1
        %v3734 = vsel %vm1805, %v3732, %v3733
        %v3735 = vrot.slane %v3573, 1
        %v3736 = vsel %vm1805, %v3733, %v3735
        %v3737 = vrot.slane %v3574, 1
        %v3738 = vsel %vm1805, %v3735, %v3737
        %v3739 = vrot.slane %v3575, 1
        %v3740 = vsel %vm1805, %v3737, %v3739
        %v3741 = vrot.slane %v3576, 1
        %v3742 = vsel %vm1805, %v3739, %v3741
        %v3743 = vrot.slane %v3577, 1
        %v3744 = vsel %vm1805, %v3741, %v3743
        %v3745 = vrot.slane %v3578, 1
        %v3746 = vsel %vm1805, %v3743, %v3745
        %v3747 = vrot.slane %v3579, 1
        %v3748 = vsel %vm1805, %v3745, %v3747
        %v3749 = vrot.slane %v3580, 1
        %v3750 = vsel %vm1805, %v3747, %v3749
        %v3751 = vrot.slane %v3581, 1
        %v3752 = vsel %vm1805, %v3749, %v3751
        %v3753 = vrot.slane %v3582, 1
        %v3754 = vsel %vm1805, %v3751, %v3753
        %v3755 = vrot.slane %v3583, 1
        %v3756 = vsel %vm1805, %v3753, %v3755
        %v3757 = vrot.slane %v3584, 1
        %v3758 = vsel %vm1805, %v3755, %v3757
        %v3759 = vrot.slane %v3585, 1
        %v3760 = vsel %vm1805, %v3757, %v3759
        %v3761 = vrot.slane %v3586, 1
        %v3762 = vsel %vm1805, %v3759, %v3761
        %v3763 = vrot.slane %v3587, 1
        %v3764 = vrot.slane %v3588, 1
        %v3765 = vsel %vm1805, %v3763, %v3764
        %v3766 = vrot.slane %v3589, 1
        %v3767 = vsel %vm1805, %v3764, %v3766
        %v3768 = vrot.slane %v3590, 1
        %v3769 = vsel %vm1805, %v3766, %v3768
        %v3770 = vrot.slane %v3591, 1
        %v3771 = vsel %vm1805, %v3768, %v3770
        %v3772 = vrot.slane %v3592, 1
        %v3773 = vsel %vm1805, %v3770, %v3772
        %v3774 = vrot.slane %v3593, 1
        %v3775 = vsel %vm1805, %v3772, %v3774
        %v3776 = vrot.slane %v3594, 1
        %v3777 = vsel %vm1805, %v3774, %v3776
        %v3778 = vrot.slane %v3595, 1
        %v3779 = vsel %vm1805, %v3776, %v3778
        %v3780 = vrot.slane %v3596, 1
        %v3781 = vsel %vm1805, %v3778, %v3780
        %v3782 = vrot.slane %v3597, 1
        %v3783 = vsel %vm1805, %v3780, %v3782
        %v3784 = vrot.slane %v3598, 1
        %v3785 = vsel %vm1805, %v3782, %v3784
        %v3786 = vrot.slane %v3599, 1
        %v3787 = vsel %vm1805, %v3784, %v3786
        %v3788 = vrot.slane %v3600, 1
        %v3789 = vsel %vm1805, %v3786, %v3788
        %v3790 = vrot.slane %v3601, 1
        %v3791 = vsel %vm1805, %v3788, %v3790
        %v3792 = vrot.slane %v3602, 1
        %v3793 = vsel %vm1805, %v3790, %v3792
        %v3826 = vsel %vm1805, %v3761, 0.0
        %v3827 = vsel %vm1805, %v3792, 0.0
        %v3828 = vpack.c.bf16 %v3572, %v3571
        %v3829 = vpack.c.bf16 %v3574, %v3573
        %v3830 = vpack.c.bf16 %v3576, %v3575
        %v3831 = vpack.c.bf16 %v3578, %v3577
        %v3832 = vpack.c.bf16 %v3580, %v3579
        %v3833 = vpack.c.bf16 %v3582, %v3581
        %v3834 = vpack.c.bf16 %v3584, %v3583
        %v3835 = vpack.c.bf16 %v3586, %v3585
        %v3836 = vpack.c.bf16 %v3588, %v3587
        %v3837 = vpack.c.bf16 %v3590, %v3589
        %v3838 = vpack.c.bf16 %v3592, %v3591
        %v3839 = vpack.c.bf16 %v3594, %v3593
        %v3840 = vpack.c.bf16 %v3596, %v3595
        %v3841 = vpack.c.bf16 %v3598, %v3597
        %v3842 = vpack.c.bf16 %v3600, %v3599
        %v3843 = vpack.c.bf16 %v3602, %v3601
        %v3844 = vpack.c.bf16 %v3638, %v3730
        %v3845 = vpack.c.bf16 %v3642, %v3640
        %v3846 = vpack.c.bf16 %v3646, %v3644
        %v3847 = vpack.c.bf16 %v3650, %v3648
        %v3848 = vpack.c.bf16 %v3654, %v3652
        %v3849 = vpack.c.bf16 %v3658, %v3656
        %v3850 = vpack.c.bf16 %v3662, %v3660
        %v3851 = vpack.c.bf16 %v3666, %v3664
        %v3852 = vpack.c.bf16 %v3669, %v3731
        %v3853 = vpack.c.bf16 %v3673, %v3671
        %v3854 = vpack.c.bf16 %v3677, %v3675
        %v3855 = vpack.c.bf16 %v3681, %v3679
        %v3856 = vpack.c.bf16 %v3685, %v3683
        %v3857 = vpack.c.bf16 %v3689, %v3687
        %v3858 = vpack.c.bf16 %v3693, %v3691
        %v3859 = vpack.c.bf16 %v3697, %v3695
        %v3860 = vpack.c.bf16 %v3736, %v3734
        %v3861 = vpack.c.bf16 %v3740, %v3738
        %v3862 = vpack.c.bf16 %v3744, %v3742
        %v3863 = vpack.c.bf16 %v3748, %v3746
        %v3864 = vpack.c.bf16 %v3752, %v3750
        %v3865 = vpack.c.bf16 %v3756, %v3754
        %v3866 = vpack.c.bf16 %v3760, %v3758
        %v3867 = vpack.c.bf16 %v3826, %v3762
        %v3868 = vpack.c.bf16 %v3767, %v3765
        %v3869 = vpack.c.bf16 %v3771, %v3769
        %v3870 = vpack.c.bf16 %v3775, %v3773
        %v3871 = vpack.c.bf16 %v3779, %v3777
        %v3872 = vpack.c.bf16 %v3783, %v3781
        %v3873 = vpack.c.bf16 %v3787, %v3785
        %v3874 = vpack.c.bf16 %v3791, %v3789
        %v3875 = vpack.c.bf16 %v3827, %v3793
        %v3876 = vld [vmem:[%s12] sm:$0xf]
        %v3877 = vld [vmem:[%s12 + $0x4] sm:$0xf]
        %v3878 = vld [vmem:[%s12 + $0x8] sm:$0xf]
        %v3879 = vld [vmem:[%s12 + $0xc] sm:$0xf]
        %v3880 = vld [vmem:[%s12 + $0x10] sm:$0xf]
        %v3881 = vld [vmem:[%s12 + $0x14] sm:$0xf]
        %v3882 = vld [vmem:[%s12 + $0x18] sm:$0xf]
        %v3883 = vld [vmem:[%s12 + $0x1c] sm:$0xf]
        %v3884 = vld [vmem:[%s12 + $0x20] sm:$0xf]
        %v3885 = vld [vmem:[%s12 + $0x24] sm:$0xf]
        %v3886 = vld [vmem:[%s12 + $0x28] sm:$0xf]
        %v3887 = vld [vmem:[%s12 + $0x2c] sm:$0xf]
        %v3888 = vld [vmem:[%s12 + $0x30] sm:$0xf]
        %v3889 = vld [vmem:[%s12 + $0x34] sm:$0xf]
        %v3890 = vld [vmem:[%s12 + $0x38] sm:$0xf]
        %v3891 = vld [vmem:[%s12 + $0x3c] sm:$0xf]
        %s3892 = scalar_lea.vmem %s12, 64
        %v3893 = vld [vmem:[%s3892] sm:$0xf]
        %v3894 = vld [vmem:[%s3892 + $0x4] sm:$0xf]
        %v3895 = vld [vmem:[%s3892 + $0x8] sm:$0xf]
        %v3896 = vld [vmem:[%s3892 + $0xc] sm:$0xf]
        %v3897 = vld [vmem:[%s3892 + $0x10] sm:$0xf]
        %v3898 = vld [vmem:[%s3892 + $0x14] sm:$0xf]
        %v3899 = vld [vmem:[%s3892 + $0x18] sm:$0xf]
        %v3900 = vld [vmem:[%s3892 + $0x1c] sm:$0xf]
        %v3901 = vld [vmem:[%s3892 + $0x20] sm:$0xf]
        %v3902 = vld [vmem:[%s3892 + $0x24] sm:$0xf]
        %v3903 = vld [vmem:[%s3892 + $0x28] sm:$0xf]
        %v3904 = vld [vmem:[%s3892 + $0x2c] sm:$0xf]
        %v3905 = vld [vmem:[%s3892 + $0x30] sm:$0xf]
        %v3906 = vld [vmem:[%s3892 + $0x34] sm:$0xf]
        %v3907 = vld [vmem:[%s3892 + $0x38] sm:$0xf]
        %v3908 = vld [vmem:[%s3892 + $0x3c] sm:$0xf]
        %v3925 = vunpack.c.l.b16 %v3893
        %v3926 = vunpack.c.l.b16 %v3894
        %v3927 = vunpack.c.l.b16 %v3895
        %v3928 = vunpack.c.l.b16 %v3896
        %v3929 = vunpack.c.l.b16 %v3897
        %v3930 = vunpack.c.l.b16 %v3898
        %v3931 = vunpack.c.l.b16 %v3899
        %v3932 = vunpack.c.l.b16 %v3900
        %v3933 = vunpack.c.l.b16 %v3901
        %v3934 = vunpack.c.l.b16 %v3902
        %v3935 = vunpack.c.l.b16 %v3903
        %v3936 = vunpack.c.l.b16 %v3904
        %v3937 = vunpack.c.l.b16 %v3905
        %v3938 = vunpack.c.l.b16 %v3906
        %v3939 = vunpack.c.l.b16 %v3907
        %v3940 = vunpack.c.l.b16 %v3908
        %v3941 = vpack.c.b16 %v3926, %v3925
        %v3942 = vpack.c.b16 %v3928, %v3927
        %v3943 = vpack.c.b16 %v3930, %v3929
        %v3944 = vpack.c.b16 %v3932, %v3931
        %v3945 = vpack.c.b16 %v3934, %v3933
        %v3946 = vpack.c.b16 %v3936, %v3935
        %v3947 = vpack.c.b16 %v3938, %v3937
        %v3948 = vpack.c.b16 %v3940, %v3939
        %3957 = vmatpush.bf16.msra.mxu0 %v3948
        %3958 = vmatpush.bf16.msra.mxu0 %v3947
        %3959 = vmatpush.bf16.msra.mxu0 %v3946
        %3960 = vmatpush.bf16.msra.mxu0 %v3945
        %3961 = vmatpush.bf16.msra.mxu0 %v3944
        %3962 = vmatpush.bf16.msra.mxu0 %v3943
        %3963 = vmatpush.bf16.msra.mxu0 %v3942
        %3964 = vmatpush.bf16.msra.mxu0 %v3941
        %3965 = vmatmul.bf16.gmra.mxu0 %v3828
        %v3966 = vpop.f32.mrf.mxu0
        %v3967 = vadd.f32 0.0, %v3966
        %v3968 = vpop.f32.mrf.mxu0
        %v3969 = vadd.f32 0.0, %v3968
        %3970 = vmatmul.bf16.gmra.mxu0 %v3829
        %v3971 = vpop.f32.mrf.mxu0
        %v3972 = vadd.f32 0.0, %v3971
        %v3973 = vpop.f32.mrf.mxu0
        %v3974 = vadd.f32 0.0, %v3973
        %3975 = vmatmul.bf16.gmra.mxu0 %v3830
        %v3976 = vpop.f32.mrf.mxu0
        %v3977 = vadd.f32 0.0, %v3976
        %v3978 = vpop.f32.mrf.mxu0
        %v3979 = vadd.f32 0.0, %v3978
        %3980 = vmatmul.bf16.gmra.mxu0 %v3831
        %v3981 = vpop.f32.mrf.mxu0
        %v3982 = vadd.f32 0.0, %v3981
        %v3983 = vpop.f32.mrf.mxu0
        %v3984 = vadd.f32 0.0, %v3983
        %3985 = vmatmul.bf16.gmra.mxu0 %v3832
        %v3986 = vpop.f32.mrf.mxu0
        %v3987 = vadd.f32 0.0, %v3986
        %v3988 = vpop.f32.mrf.mxu0
        %v3989 = vadd.f32 0.0, %v3988
        %3990 = vmatmul.bf16.gmra.mxu0 %v3833
        %v3991 = vpop.f32.mrf.mxu0
        %v3992 = vadd.f32 0.0, %v3991
        %v3993 = vpop.f32.mrf.mxu0
        %v3994 = vadd.f32 0.0, %v3993
        %3995 = vmatmul.bf16.gmra.mxu0 %v3834
        %v3996 = vpop.f32.mrf.mxu0
        %v3997 = vadd.f32 0.0, %v3996
        %v3998 = vpop.f32.mrf.mxu0
        %v3999 = vadd.f32 0.0, %v3998
        %4000 = vmatmul.bf16.gmra.mxu0 %v3835
        %v4001 = vpop.f32.mrf.mxu0
        %v4002 = vadd.f32 0.0, %v4001
        %v4003 = vpop.f32.mrf.mxu0
        %v4004 = vadd.f32 0.0, %v4003
        %4005 = vmatmul.bf16.gmra.mxu0 %v3836
        %v4006 = vpop.f32.mrf.mxu0
        %v4007 = vadd.f32 0.0, %v4006
        %v4008 = vpop.f32.mrf.mxu0
        %v4009 = vadd.f32 0.0, %v4008
        %4010 = vmatmul.bf16.gmra.mxu0 %v3837
        %v4011 = vpop.f32.mrf.mxu0
        %v4012 = vadd.f32 0.0, %v4011
        %v4013 = vpop.f32.mrf.mxu0
        %v4014 = vadd.f32 0.0, %v4013
        %4015 = vmatmul.bf16.gmra.mxu0 %v3838
        %v4016 = vpop.f32.mrf.mxu0
        %v4017 = vadd.f32 0.0, %v4016
        %v4018 = vpop.f32.mrf.mxu0
        %v4019 = vadd.f32 0.0, %v4018
        %4020 = vmatmul.bf16.gmra.mxu0 %v3839
        %v4021 = vpop.f32.mrf.mxu0
        %v4022 = vadd.f32 0.0, %v4021
        %v4023 = vpop.f32.mrf.mxu0
        %v4024 = vadd.f32 0.0, %v4023
        %4025 = vmatmul.bf16.gmra.mxu0 %v3840
        %v4026 = vpop.f32.mrf.mxu0
        %v4027 = vadd.f32 0.0, %v4026
        %v4028 = vpop.f32.mrf.mxu0
        %v4029 = vadd.f32 0.0, %v4028
        %4030 = vmatmul.bf16.gmra.mxu0 %v3841
        %v4031 = vpop.f32.mrf.mxu0
        %v4032 = vadd.f32 0.0, %v4031
        %v4033 = vpop.f32.mrf.mxu0
        %v4034 = vadd.f32 0.0, %v4033
        %4035 = vmatmul.bf16.gmra.mxu0 %v3842
        %v4036 = vpop.f32.mrf.mxu0
        %v4037 = vadd.f32 0.0, %v4036
        %v4038 = vpop.f32.mrf.mxu0
        %v4039 = vadd.f32 0.0, %v4038
        %4040 = vmatmul.bf16.gmra.mxu0 %v3843
        %v4041 = vpop.f32.mrf.mxu0
        %v4042 = vadd.f32 0.0, %v4041
        %v4043 = vpop.f32.mrf.mxu0
        %v4044 = vadd.f32 0.0, %v4043
        %4045 = vdwg.mxu0
        %v4062 = vunpack.c.l.b16 %v3876
        %v4063 = vunpack.c.l.b16 %v3877
        %v4064 = vunpack.c.l.b16 %v3878
        %v4065 = vunpack.c.l.b16 %v3879
        %v4066 = vunpack.c.l.b16 %v3880
        %v4067 = vunpack.c.l.b16 %v3881
        %v4068 = vunpack.c.l.b16 %v3882
        %v4069 = vunpack.c.l.b16 %v3883
        %v4070 = vunpack.c.l.b16 %v3884
        %v4071 = vunpack.c.l.b16 %v3885
        %v4072 = vunpack.c.l.b16 %v3886
        %v4073 = vunpack.c.l.b16 %v3887
        %v4074 = vunpack.c.l.b16 %v3888
        %v4075 = vunpack.c.l.b16 %v3889
        %v4076 = vunpack.c.l.b16 %v3890
        %v4077 = vunpack.c.l.b16 %v3891
        %v4078 = vpack.c.b16 %v4063, %v4062
        %v4079 = vpack.c.b16 %v4065, %v4064
        %v4080 = vpack.c.b16 %v4067, %v4066
        %v4081 = vpack.c.b16 %v4069, %v4068
        %v4082 = vpack.c.b16 %v4071, %v4070
        %v4083 = vpack.c.b16 %v4073, %v4072
        %v4084 = vpack.c.b16 %v4075, %v4074
        %v4085 = vpack.c.b16 %v4077, %v4076
        %4094 = vmatpush.bf16.msra.mxu0 %v4085
        %4095 = vmatpush.bf16.msra.mxu0 %v4084
        %4096 = vmatpush.bf16.msra.mxu0 %v4083
        %4097 = vmatpush.bf16.msra.mxu0 %v4082
        %4098 = vmatpush.bf16.msra.mxu0 %v4081
        %4099 = vmatpush.bf16.msra.mxu0 %v4080
        %4100 = vmatpush.bf16.msra.mxu0 %v4079
        %4101 = vmatpush.bf16.msra.mxu0 %v4078
        %4102 = vmatmul.bf16.gmra.mxu0 %v3844
        %v4103 = vpop.f32.mrf.mxu0
        %v4104 = vadd.f32 %v3967, %v4103
        %v4105 = vpop.f32.mrf.mxu0
        %v4106 = vadd.f32 %v3969, %v4105
        %4107 = vmatmul.bf16.gmra.mxu0 %v3845
        %v4108 = vpop.f32.mrf.mxu0
        %v4109 = vadd.f32 %v3972, %v4108
        %v4110 = vpop.f32.mrf.mxu0
        %v4111 = vadd.f32 %v3974, %v4110
        %4112 = vmatmul.bf16.gmra.mxu0 %v3846
        %v4113 = vpop.f32.mrf.mxu0
        %v4114 = vadd.f32 %v3977, %v4113
        %v4115 = vpop.f32.mrf.mxu0
        %v4116 = vadd.f32 %v3979, %v4115
        %4117 = vmatmul.bf16.gmra.mxu0 %v3847
        %v4118 = vpop.f32.mrf.mxu0
        %v4119 = vadd.f32 %v3982, %v4118
        %v4120 = vpop.f32.mrf.mxu0
        %v4121 = vadd.f32 %v3984, %v4120
        %4122 = vmatmul.bf16.gmra.mxu0 %v3848
        %v4123 = vpop.f32.mrf.mxu0
        %v4124 = vadd.f32 %v3987, %v4123
        %v4125 = vpop.f32.mrf.mxu0
        %v4126 = vadd.f32 %v3989, %v4125
        %4127 = vmatmul.bf16.gmra.mxu0 %v3849
        %v4128 = vpop.f32.mrf.mxu0
        %v4129 = vadd.f32 %v3992, %v4128
        %v4130 = vpop.f32.mrf.mxu0
        %v4131 = vadd.f32 %v3994, %v4130
        %4132 = vmatmul.bf16.gmra.mxu0 %v3850
        %v4133 = vpop.f32.mrf.mxu0
        %v4134 = vadd.f32 %v3997, %v4133
        %v4135 = vpop.f32.mrf.mxu0
        %v4136 = vadd.f32 %v3999, %v4135
        %4137 = vmatmul.bf16.gmra.mxu0 %v3851
        %v4138 = vpop.f32.mrf.mxu0
        %v4139 = vadd.f32 %v4002, %v4138
        %v4140 = vpop.f32.mrf.mxu0
        %v4141 = vadd.f32 %v4004, %v4140
        %4142 = vmatmul.bf16.gmra.mxu0 %v3852
        %v4143 = vpop.f32.mrf.mxu0
        %v4144 = vadd.f32 %v4007, %v4143
        %v4145 = vpop.f32.mrf.mxu0
        %v4146 = vadd.f32 %v4009, %v4145
        %4147 = vmatmul.bf16.gmra.mxu0 %v3853
        %v4148 = vpop.f32.mrf.mxu0
        %v4149 = vadd.f32 %v4012, %v4148
        %v4150 = vpop.f32.mrf.mxu0
        %v4151 = vadd.f32 %v4014, %v4150
        %4152 = vmatmul.bf16.gmra.mxu0 %v3854
        %v4153 = vpop.f32.mrf.mxu0
        %v4154 = vadd.f32 %v4017, %v4153
        %v4155 = vpop.f32.mrf.mxu0
        %v4156 = vadd.f32 %v4019, %v4155
        %4157 = vmatmul.bf16.gmra.mxu0 %v3855
        %v4158 = vpop.f32.mrf.mxu0
        %v4159 = vadd.f32 %v4022, %v4158
        %v4160 = vpop.f32.mrf.mxu0
        %v4161 = vadd.f32 %v4024, %v4160
        %4162 = vmatmul.bf16.gmra.mxu0 %v3856
        %v4163 = vpop.f32.mrf.mxu0
        %v4164 = vadd.f32 %v4027, %v4163
        %v4165 = vpop.f32.mrf.mxu0
        %v4166 = vadd.f32 %v4029, %v4165
        %4167 = vmatmul.bf16.gmra.mxu0 %v3857
        %v4168 = vpop.f32.mrf.mxu0
        %v4169 = vadd.f32 %v4032, %v4168
        %v4170 = vpop.f32.mrf.mxu0
        %v4171 = vadd.f32 %v4034, %v4170
        %4172 = vmatmul.bf16.gmra.mxu0 %v3858
        %v4173 = vpop.f32.mrf.mxu0
        %v4174 = vadd.f32 %v4037, %v4173
        %v4175 = vpop.f32.mrf.mxu0
        %v4176 = vadd.f32 %v4039, %v4175
        %4177 = vmatmul.bf16.gmra.mxu0 %v3859
        %v4178 = vpop.f32.mrf.mxu0
        %v4179 = vadd.f32 %v4042, %v4178
        %v4180 = vpop.f32.mrf.mxu0
        %v4181 = vadd.f32 %v4044, %v4180
        %4182 = vdwg.mxu0
        %s4183 = scalar_lea.vmem %s12, 128
        %v4184 = vld [vmem:[%s4183] sm:$0xf]
        %v4185 = vld [vmem:[%s4183 + $0x4] sm:$0xf]
        %v4186 = vld [vmem:[%s4183 + $0x8] sm:$0xf]
        %v4187 = vld [vmem:[%s4183 + $0xc] sm:$0xf]
        %v4188 = vld [vmem:[%s4183 + $0x10] sm:$0xf]
        %v4189 = vld [vmem:[%s4183 + $0x14] sm:$0xf]
        %v4190 = vld [vmem:[%s4183 + $0x18] sm:$0xf]
        %v4191 = vld [vmem:[%s4183 + $0x1c] sm:$0xf]
        %v4192 = vld [vmem:[%s4183 + $0x20] sm:$0xf]
        %v4193 = vld [vmem:[%s4183 + $0x24] sm:$0xf]
        %v4194 = vld [vmem:[%s4183 + $0x28] sm:$0xf]
        %v4195 = vld [vmem:[%s4183 + $0x2c] sm:$0xf]
        %v4196 = vld [vmem:[%s4183 + $0x30] sm:$0xf]
        %v4197 = vld [vmem:[%s4183 + $0x34] sm:$0xf]
        %v4198 = vld [vmem:[%s4183 + $0x38] sm:$0xf]
        %v4199 = vld [vmem:[%s4183 + $0x3c] sm:$0xf]
        %v4216 = vunpack.c.l.b16 %v4184
        %v4217 = vunpack.c.l.b16 %v4185
        %v4218 = vunpack.c.l.b16 %v4186
        %v4219 = vunpack.c.l.b16 %v4187
        %v4220 = vunpack.c.l.b16 %v4188
        %v4221 = vunpack.c.l.b16 %v4189
        %v4222 = vunpack.c.l.b16 %v4190
        %v4223 = vunpack.c.l.b16 %v4191
        %v4224 = vunpack.c.l.b16 %v4192
        %v4225 = vunpack.c.l.b16 %v4193
        %v4226 = vunpack.c.l.b16 %v4194
        %v4227 = vunpack.c.l.b16 %v4195
        %v4228 = vunpack.c.l.b16 %v4196
        %v4229 = vunpack.c.l.b16 %v4197
        %v4230 = vunpack.c.l.b16 %v4198
        %v4231 = vunpack.c.l.b16 %v4199
        %v4232 = vpack.c.b16 %v4217, %v4216
        %v4233 = vpack.c.b16 %v4219, %v4218
        %v4234 = vpack.c.b16 %v4221, %v4220
        %v4235 = vpack.c.b16 %v4223, %v4222
        %v4236 = vpack.c.b16 %v4225, %v4224
        %v4237 = vpack.c.b16 %v4227, %v4226
        %v4238 = vpack.c.b16 %v4229, %v4228
        %v4239 = vpack.c.b16 %v4231, %v4230
        %4248 = vmatpush.bf16.msra.mxu0 %v4239
        %4249 = vmatpush.bf16.msra.mxu0 %v4238
        %4250 = vmatpush.bf16.msra.mxu0 %v4237
        %4251 = vmatpush.bf16.msra.mxu0 %v4236
        %4252 = vmatpush.bf16.msra.mxu0 %v4235
        %4253 = vmatpush.bf16.msra.mxu0 %v4234
        %4254 = vmatpush.bf16.msra.mxu0 %v4233
        %4255 = vmatpush.bf16.msra.mxu0 %v4232
        %4256 = vmatmul.bf16.gmra.mxu0 %v3860
        %v4257 = vpop.f32.mrf.mxu0
        %v4258 = vadd.f32 0.0, %v4257
        %v4259 = vpop.f32.mrf.mxu0
        %v4260 = vadd.f32 0.0, %v4259
        %4261 = vmatmul.bf16.gmra.mxu0 %v3861
        %v4262 = vpop.f32.mrf.mxu0
        %v4263 = vadd.f32 0.0, %v4262
        %v4264 = vpop.f32.mrf.mxu0
        %v4265 = vadd.f32 0.0, %v4264
        %4266 = vmatmul.bf16.gmra.mxu0 %v3862
        %v4267 = vpop.f32.mrf.mxu0
        %v4268 = vadd.f32 0.0, %v4267
        %v4269 = vpop.f32.mrf.mxu0
        %v4270 = vadd.f32 0.0, %v4269
        %4271 = vmatmul.bf16.gmra.mxu0 %v3863
        %v4272 = vpop.f32.mrf.mxu0
        %v4273 = vadd.f32 0.0, %v4272
        %v4274 = vpop.f32.mrf.mxu0
        %v4275 = vadd.f32 0.0, %v4274
        %4276 = vmatmul.bf16.gmra.mxu0 %v3864
        %v4277 = vpop.f32.mrf.mxu0
        %v4278 = vadd.f32 0.0, %v4277
        %v4279 = vpop.f32.mrf.mxu0
        %v4280 = vadd.f32 0.0, %v4279
        %4281 = vmatmul.bf16.gmra.mxu0 %v3865
        %v4282 = vpop.f32.mrf.mxu0
        %v4283 = vadd.f32 0.0, %v4282
        %v4284 = vpop.f32.mrf.mxu0
        %v4285 = vadd.f32 0.0, %v4284
        %4286 = vmatmul.bf16.gmra.mxu0 %v3866
        %v4287 = vpop.f32.mrf.mxu0
        %v4288 = vadd.f32 0.0, %v4287
        %v4289 = vpop.f32.mrf.mxu0
        %v4290 = vadd.f32 0.0, %v4289
        %4291 = vmatmul.bf16.gmra.mxu0 %v3867
        %v4292 = vpop.f32.mrf.mxu0
        %v4293 = vadd.f32 0.0, %v4292
        %v4294 = vpop.f32.mrf.mxu0
        %v4295 = vadd.f32 0.0, %v4294
        %4296 = vmatmul.bf16.gmra.mxu0 %v3868
        %v4297 = vpop.f32.mrf.mxu0
        %v4298 = vadd.f32 0.0, %v4297
        %v4299 = vpop.f32.mrf.mxu0
        %v4300 = vadd.f32 0.0, %v4299
        %4301 = vmatmul.bf16.gmra.mxu0 %v3869
        %v4302 = vpop.f32.mrf.mxu0
        %v4303 = vadd.f32 0.0, %v4302
        %v4304 = vpop.f32.mrf.mxu0
        %v4305 = vadd.f32 0.0, %v4304
        %4306 = vmatmul.bf16.gmra.mxu0 %v3870
        %v4307 = vpop.f32.mrf.mxu0
        %v4308 = vadd.f32 0.0, %v4307
        %v4309 = vpop.f32.mrf.mxu0
        %v4310 = vadd.f32 0.0, %v4309
        %4311 = vmatmul.bf16.gmra.mxu0 %v3871
        %v4312 = vpop.f32.mrf.mxu0
        %v4313 = vadd.f32 0.0, %v4312
        %v4314 = vpop.f32.mrf.mxu0
        %v4315 = vadd.f32 0.0, %v4314
        %4316 = vmatmul.bf16.gmra.mxu0 %v3872
        %v4317 = vpop.f32.mrf.mxu0
        %v4318 = vadd.f32 0.0, %v4317
        %v4319 = vpop.f32.mrf.mxu0
        %v4320 = vadd.f32 0.0, %v4319
        %4321 = vmatmul.bf16.gmra.mxu0 %v3873
        %v4322 = vpop.f32.mrf.mxu0
        %v4323 = vadd.f32 0.0, %v4322
        %v4324 = vpop.f32.mrf.mxu0
        %v4325 = vadd.f32 0.0, %v4324
        %4326 = vmatmul.bf16.gmra.mxu0 %v3874
        %v4327 = vpop.f32.mrf.mxu0
        %v4328 = vadd.f32 0.0, %v4327
        %v4329 = vpop.f32.mrf.mxu0
        %v4330 = vadd.f32 0.0, %v4329
        %4331 = vmatmul.bf16.gmra.mxu0 %v3875
        %v4332 = vpop.f32.mrf.mxu0
        %v4333 = vadd.f32 0.0, %v4332
        %v4334 = vpop.f32.mrf.mxu0
        %v4335 = vadd.f32 0.0, %v4334
        %4336 = vdwg.mxu0
        %v4337 = vadd.f32 %v4104, %v4258
        %v4338 = vadd.f32 %v4106, %v4260
        %v4339 = vadd.f32 %v4109, %v4263
        %v4340 = vadd.f32 %v4111, %v4265
        %v4341 = vadd.f32 %v4114, %v4268
        %v4342 = vadd.f32 %v4116, %v4270
        %v4343 = vadd.f32 %v4119, %v4273
        %v4344 = vadd.f32 %v4121, %v4275
        %v4345 = vadd.f32 %v4124, %v4278
        %v4346 = vadd.f32 %v4126, %v4280
        %v4347 = vadd.f32 %v4129, %v4283
        %v4348 = vadd.f32 %v4131, %v4285
        %v4349 = vadd.f32 %v4134, %v4288
        %v4350 = vadd.f32 %v4136, %v4290
        %v4351 = vadd.f32 %v4139, %v4293
        %v4352 = vadd.f32 %v4141, %v4295
        %v4353 = vadd.f32 %v4144, %v4298
        %v4354 = vadd.f32 %v4146, %v4300
        %v4355 = vadd.f32 %v4149, %v4303
        %v4356 = vadd.f32 %v4151, %v4305
        %v4357 = vadd.f32 %v4154, %v4308
        %v4358 = vadd.f32 %v4156, %v4310
        %v4359 = vadd.f32 %v4159, %v4313
        %v4360 = vadd.f32 %v4161, %v4315
        %v4361 = vadd.f32 %v4164, %v4318
        %v4362 = vadd.f32 %v4166, %v4320
        %v4363 = vadd.f32 %v4169, %v4323
        %v4364 = vadd.f32 %v4171, %v4325
        %v4365 = vadd.f32 %v4174, %v4328
        %v4366 = vadd.f32 %v4176, %v4330
        %v4367 = vadd.f32 %v4179, %v4333
        %v4368 = vadd.f32 %v4181, %v4335
        %v4370 = vperm.slane %v3603, 0
        %v4372 = vadd.f32 %v4337, %v4370
        %v4373 = vadd.f32 %v4338, %v4370
        %v4374 = vadd.f32 %v4339, %v4370
        %v4375 = vadd.f32 %v4340, %v4370
        %v4376 = vadd.f32 %v4341, %v4370
        %v4377 = vadd.f32 %v4342, %v4370
        %v4378 = vadd.f32 %v4343, %v4370
        %v4379 = vadd.f32 %v4344, %v4370
        %v4380 = vadd.f32 %v4345, %v4370
        %v4381 = vadd.f32 %v4346, %v4370
        %v4382 = vadd.f32 %v4347, %v4370
        %v4383 = vadd.f32 %v4348, %v4370
        %v4384 = vadd.f32 %v4349, %v4370
        %v4385 = vadd.f32 %v4350, %v4370
        %v4386 = vadd.f32 %v4351, %v4370
        %v4387 = vadd.f32 %v4352, %v4370
        %v4388 = vadd.f32 %v4353, %v4370
        %v4389 = vadd.f32 %v4354, %v4370
        %v4390 = vadd.f32 %v4355, %v4370
        %v4391 = vadd.f32 %v4356, %v4370
        %v4392 = vadd.f32 %v4357, %v4370
        %v4393 = vadd.f32 %v4358, %v4370
        %v4394 = vadd.f32 %v4359, %v4370
        %v4395 = vadd.f32 %v4360, %v4370
        %v4396 = vadd.f32 %v4361, %v4370
        %v4397 = vadd.f32 %v4362, %v4370
        %v4398 = vadd.f32 %v4363, %v4370
        %v4399 = vadd.f32 %v4364, %v4370
        %v4400 = vadd.f32 %v4365, %v4370
        %v4401 = vadd.f32 %v4366, %v4370
        %v4402 = vadd.f32 %v4367, %v4370
        %v4403 = vadd.f32 %v4368, %v4370
        %v4404 = vpack.c.bf16 %v545, %v544
        %v4405 = vpack.c.bf16 %v547, %v546
        %v4406 = vpack.c.bf16 %v549, %v548
        %v4407 = vpack.c.bf16 %v551, %v550
        %v4408 = vpack.c.bf16 %v553, %v552
        %v4409 = vpack.c.bf16 %v555, %v554
        %v4410 = vpack.c.bf16 %v557, %v556
        %v4411 = vpack.c.bf16 %v559, %v558
        %v4412 = vpack.c.bf16 %v561, %v560
        %v4413 = vpack.c.bf16 %v563, %v562
        %v4414 = vpack.c.bf16 %v565, %v564
        %v4415 = vpack.c.bf16 %v567, %v566
        %v4416 = vpack.c.bf16 %v569, %v568
        %v4417 = vpack.c.bf16 %v571, %v570
        %v4418 = vpack.c.bf16 %v573, %v572
        %v4419 = vpack.c.bf16 %v575, %v574
        %v4420 = vld [vmem:[%s14] sm:$0xf]
        %v4421 = vld [vmem:[%s14 + $0x4] sm:$0xf]
        %v4422 = vld [vmem:[%s14 + $0x8] sm:$0xf]
        %v4423 = vld [vmem:[%s14 + $0xc] sm:$0xf]
        %v4424 = vld [vmem:[%s14 + $0x10] sm:$0xf]
        %v4425 = vld [vmem:[%s14 + $0x14] sm:$0xf]
        %v4426 = vld [vmem:[%s14 + $0x18] sm:$0xf]
        %v4427 = vld [vmem:[%s14 + $0x1c] sm:$0xf]
        %v4428 = vld [vmem:[%s15] sm:$0x1]
        %v4430 = vperm.slane %v4428, 0
        %v4440 = vunpack.c.l.b16 %v4420
        %v4441 = vunpack.c.l.b16 %v4421
        %v4442 = vunpack.c.l.b16 %v4422
        %v4443 = vunpack.c.l.b16 %v4423
        %v4444 = vunpack.c.l.b16 %v4424
        %v4445 = vunpack.c.l.b16 %v4425
        %v4446 = vunpack.c.l.b16 %v4426
        %v4447 = vunpack.c.l.b16 %v4427
        %v4448 = vpack.c.b16 %v4441, %v4440
        %v4449 = vpack.c.b16 %v4443, %v4442
        %v4450 = vpack.c.b16 %v4445, %v4444
        %v4451 = vpack.c.b16 %v4447, %v4446
        %v4457 = vsel %vm590, %v4404, 0
        %v4460 = vsel %vm590, %v4405, 0
        %v4463 = vsel %vm590, %v4406, 0
        %v4466 = vsel %vm590, %v4407, 0
        %v4469 = vsel %vm590, %v4408, 0
        %v4472 = vsel %vm590, %v4409, 0
        %v4475 = vsel %vm590, %v4410, 0
        %v4478 = vsel %vm590, %v4411, 0
        %v4481 = vsel %vm590, %v4412, 0
        %v4484 = vsel %vm590, %v4413, 0
        %v4487 = vsel %vm590, %v4414, 0
        %v4490 = vsel %vm590, %v4415, 0
        %v4493 = vsel %vm590, %v4416, 0
        %v4496 = vsel %vm590, %v4417, 0
        %v4499 = vsel %vm590, %v4418, 0
        %v4502 = vsel %vm590, %v4419, 0
        %4504 = vmatpush.bf16.msra.mxu0 0
        %4505 = vmatpush.bf16.msra.mxu0 0
        %4506 = vmatpush.bf16.msra.mxu0 0
        %4507 = vmatpush.bf16.msra.mxu0 0
        %4508 = vmatpush.bf16.msra.mxu0 %v4451
        %4509 = vmatpush.bf16.msra.mxu0 %v4450
        %4510 = vmatpush.bf16.msra.mxu0 %v4449
        %4511 = vmatpush.bf16.msra.mxu0 %v4448
        %4512 = vmatmul.bf16.gmra.mxu0 %v4457
        %v4513 = vpop.f32.mrf.mxu0
        %v4514 = vadd.f32 %v4430, %v4513
        %v4515 = vpop.f32.mrf.mxu0
        %v4516 = vadd.f32 %v4430, %v4515
        %4517 = vmatmul.bf16.gmra.mxu0 %v4460
        %v4518 = vpop.f32.mrf.mxu0
        %v4519 = vadd.f32 %v4430, %v4518
        %v4520 = vpop.f32.mrf.mxu0
        %v4521 = vadd.f32 %v4430, %v4520
        %4522 = vmatmul.bf16.gmra.mxu0 %v4463
        %v4523 = vpop.f32.mrf.mxu0
        %v4524 = vadd.f32 %v4430, %v4523
        %v4525 = vpop.f32.mrf.mxu0
        %v4526 = vadd.f32 %v4430, %v4525
        %4527 = vmatmul.bf16.gmra.mxu0 %v4466
        %v4528 = vpop.f32.mrf.mxu0
        %v4529 = vadd.f32 %v4430, %v4528
        %v4530 = vpop.f32.mrf.mxu0
        %v4531 = vadd.f32 %v4430, %v4530
        %4532 = vmatmul.bf16.gmra.mxu0 %v4469
        %v4533 = vpop.f32.mrf.mxu0
        %v4534 = vadd.f32 %v4430, %v4533
        %v4535 = vpop.f32.mrf.mxu0
        %v4536 = vadd.f32 %v4430, %v4535
        %4537 = vmatmul.bf16.gmra.mxu0 %v4472
        %v4538 = vpop.f32.mrf.mxu0
        %v4539 = vadd.f32 %v4430, %v4538
        %v4540 = vpop.f32.mrf.mxu0
        %v4541 = vadd.f32 %v4430, %v4540
        %4542 = vmatmul.bf16.gmra.mxu0 %v4475
        %v4543 = vpop.f32.mrf.mxu0
        %v4544 = vadd.f32 %v4430, %v4543
        %v4545 = vpop.f32.mrf.mxu0
        %v4546 = vadd.f32 %v4430, %v4545
        %4547 = vmatmul.bf16.gmra.mxu0 %v4478
        %v4548 = vpop.f32.mrf.mxu0
        %v4549 = vadd.f32 %v4430, %v4548
        %v4550 = vpop.f32.mrf.mxu0
        %v4551 = vadd.f32 %v4430, %v4550
        %4552 = vmatmul.bf16.gmra.mxu0 %v4481
        %v4553 = vpop.f32.mrf.mxu0
        %v4554 = vadd.f32 %v4430, %v4553
        %v4555 = vpop.f32.mrf.mxu0
        %v4556 = vadd.f32 %v4430, %v4555
        %4557 = vmatmul.bf16.gmra.mxu0 %v4484
        %v4558 = vpop.f32.mrf.mxu0
        %v4559 = vadd.f32 %v4430, %v4558
        %v4560 = vpop.f32.mrf.mxu0
        %v4561 = vadd.f32 %v4430, %v4560
        %4562 = vmatmul.bf16.gmra.mxu0 %v4487
        %v4563 = vpop.f32.mrf.mxu0
        %v4564 = vadd.f32 %v4430, %v4563
        %v4565 = vpop.f32.mrf.mxu0
        %v4566 = vadd.f32 %v4430, %v4565
        %4567 = vmatmul.bf16.gmra.mxu0 %v4490
        %v4568 = vpop.f32.mrf.mxu0
        %v4569 = vadd.f32 %v4430, %v4568
        %v4570 = vpop.f32.mrf.mxu0
        %v4571 = vadd.f32 %v4430, %v4570
        %4572 = vmatmul.bf16.gmra.mxu0 %v4493
        %v4573 = vpop.f32.mrf.mxu0
        %v4574 = vadd.f32 %v4430, %v4573
        %v4575 = vpop.f32.mrf.mxu0
        %v4576 = vadd.f32 %v4430, %v4575
        %4577 = vmatmul.bf16.gmra.mxu0 %v4496
        %v4578 = vpop.f32.mrf.mxu0
        %v4579 = vadd.f32 %v4430, %v4578
        %v4580 = vpop.f32.mrf.mxu0
        %v4581 = vadd.f32 %v4430, %v4580
        %4582 = vmatmul.bf16.gmra.mxu0 %v4499
        %v4583 = vpop.f32.mrf.mxu0
        %v4584 = vadd.f32 %v4430, %v4583
        %v4585 = vpop.f32.mrf.mxu0
        %v4586 = vadd.f32 %v4430, %v4585
        %4587 = vmatmul.bf16.gmra.mxu0 %v4502
        %v4588 = vpop.f32.mrf.mxu0
        %v4589 = vadd.f32 %v4430, %v4588
        %v4590 = vpop.f32.mrf.mxu0
        %v4591 = vadd.f32 %v4430, %v4590
        %4592 = vdwg.mxu0
        %v4593 = vadd.f32 %v4372, %v4514
        %v4594 = vadd.f32 %v4373, %v4516
        %v4595 = vadd.f32 %v4374, %v4519
        %v4596 = vadd.f32 %v4375, %v4521
        %v4597 = vadd.f32 %v4376, %v4524
        %v4598 = vadd.f32 %v4377, %v4526
        %v4599 = vadd.f32 %v4378, %v4529
        %v4600 = vadd.f32 %v4379, %v4531
        %v4601 = vadd.f32 %v4380, %v4534
        %v4602 = vadd.f32 %v4381, %v4536
        %v4603 = vadd.f32 %v4382, %v4539
        %v4604 = vadd.f32 %v4383, %v4541
        %v4605 = vadd.f32 %v4384, %v4544
        %v4606 = vadd.f32 %v4385, %v4546
        %v4607 = vadd.f32 %v4386, %v4549
        %v4608 = vadd.f32 %v4387, %v4551
        %v4609 = vadd.f32 %v4388, %v4554
        %v4610 = vadd.f32 %v4389, %v4556
        %v4611 = vadd.f32 %v4390, %v4559
        %v4612 = vadd.f32 %v4391, %v4561
        %v4613 = vadd.f32 %v4392, %v4564
        %v4614 = vadd.f32 %v4393, %v4566
        %v4615 = vadd.f32 %v4394, %v4569
        %v4616 = vadd.f32 %v4395, %v4571
        %v4617 = vadd.f32 %v4396, %v4574
        %v4618 = vadd.f32 %v4397, %v4576
        %v4619 = vadd.f32 %v4398, %v4579
        %v4620 = vadd.f32 %v4399, %v4581
        %v4621 = vadd.f32 %v4400, %v4584
        %v4622 = vadd.f32 %v4401, %v4586
        %v4623 = vadd.f32 %v4402, %v4589
        %v4624 = vadd.f32 %v4403, %v4591
        %4625 = vst [vmem:[%s530] sm:$0xff] %v4593
        %4626 = vst [vmem:[%s530 + $0x8] sm:$0xff] %v4594
        %4627 = vst [vmem:[%s530 + $0x10] sm:$0xff] %v4595
        %4628 = vst [vmem:[%s530 + $0x18] sm:$0xff] %v4596
        %4629 = vst [vmem:[%s530 + $0x20] sm:$0xff] %v4597
        %4630 = vst [vmem:[%s530 + $0x28] sm:$0xff] %v4598
        %4631 = vst [vmem:[%s530 + $0x30] sm:$0xff] %v4599
        %4632 = vst [vmem:[%s530 + $0x38] sm:$0xff] %v4600
        %4633 = vst [vmem:[%s530 + $0x40] sm:$0xff] %v4601
        %4634 = vst [vmem:[%s530 + $0x48] sm:$0xff] %v4602
        %4635 = vst [vmem:[%s530 + $0x50] sm:$0xff] %v4603
        %4636 = vst [vmem:[%s530 + $0x58] sm:$0xff] %v4604
        %4637 = vst [vmem:[%s530 + $0x60] sm:$0xff] %v4605
        %4638 = vst [vmem:[%s530 + $0x68] sm:$0xff] %v4606
        %4639 = vst [vmem:[%s530 + $0x70] sm:$0xff] %v4607
        %4640 = vst [vmem:[%s530 + $0x78] sm:$0xff] %v4608
        %4641 = vst [vmem:[%s530 + $0x80] sm:$0xff] %v4609
        %4642 = vst [vmem:[%s530 + $0x88] sm:$0xff] %v4610
        %4643 = vst [vmem:[%s530 + $0x90] sm:$0xff] %v4611
        %4644 = vst [vmem:[%s530 + $0x98] sm:$0xff] %v4612
        %4645 = vst [vmem:[%s530 + $0xa0] sm:$0xff] %v4613
        %4646 = vst [vmem:[%s530 + $0xa8] sm:$0xff] %v4614
        %4647 = vst [vmem:[%s530 + $0xb0] sm:$0xff] %v4615
        %4648 = vst [vmem:[%s530 + $0xb8] sm:$0xff] %v4616
        %4649 = vst [vmem:[%s530 + $0xc0] sm:$0xff] %v4617
        %4650 = vst [vmem:[%s530 + $0xc8] sm:$0xff] %v4618
        %4651 = vst [vmem:[%s530 + $0xd0] sm:$0xff] %v4619
        %4652 = vst [vmem:[%s530 + $0xd8] sm:$0xff] %v4620
        %4653 = vst [vmem:[%s530 + $0xe0] sm:$0xff] %v4621
        %4654 = vst [vmem:[%s530 + $0xe8] sm:$0xff] %v4622
        %4655 = vst [vmem:[%s530 + $0xf0] sm:$0xff] %v4623
        %4656 = vst [vmem:[%s530 + $0xf8] sm:$0xff] %v4624
        %s4657 = sand.u32 %s384, 1
        %s4658 = scalar_lea.sflag [#allocation3], %s4657
        %s4659 = sand.u32 %s384, 1
        %s4660 = smul.addr %s4659, 256
        %s4661 = scalar_lea.vmem [#allocation2], %s4660
        // Predicated region
        $region85: #{tpu_custom_call.1} parent=83 // pred_check
          %p4662 = pneg %p394
        $region86: #{tpu_custom_call.1} parent=83 // pred_check_branch
          %4664 = sbr.rel (%p4662) target = $region88
        $region87: #{tpu_custom_call.1} parent=83 // pred_region
          %s4665 = smul.u32 2, %s30
          %4667 = vsyncadd %s4658, 0
          %s4668 = smul.addr %s4665, 16
          %s4669 = smul.addr %s4668, 8
          %s4670 = scalar_lea.hbm %s16, %s4669
          %s4671 = sshll.u32 %s4661, 4
          %s4672 = int_to_ptr.vmem [resolvable:$true] %s4671
          %s4673 = sshll.u32 %s4670, 4
          %s4674 = int_to_ptr.hbm [resolvable:$true] %s4673
          %4679 = dma.vmem_to_hbm [thread:$0]  %s4672, 4096, %s4674, %s4658, 128, 128, 8
        $region88: #{tpu_custom_call.1} parent=83 // pred_fallthru
          _
      $region84: #{tpu_custom_call.1} parent=5 // pred_fallthru
        _
      %p4680 = scmp.le.s32.totalorder 2, %s25
      // Predicated region
      $region89: #{tpu_custom_call.1} parent=5 // pred_check
        %p4681 = pneg %p4680
      $region90: #{tpu_custom_call.1} parent=5 // pred_check_branch
        %4683 = sbr.rel (%p4681) target = $region92
      $region91: #{tpu_custom_call.1} parent=5 // pred_region
        %s4684 = ssub.s32 %s25, 2
        // Predicated region
        $region93: #{tpu_custom_call.1} parent=91 // pred_check
          %p4685 = pneg %p400
        $region94: #{tpu_custom_call.1} parent=91 // pred_check_branch
          %4687 = sbr.rel (%p4685) target = $region96
        $region95: #{tpu_custom_call.1} parent=91 // pred_region
          %s4688 = sand.u32 %s385, 1
          %s4689 = scalar_lea.sflag [#allocation3], %s4688
          %s4690 = sand.u32 %s385, 1
          %s4691 = smul.addr %s4690, 256
          %s4692 = scalar_lea.vmem [#allocation2], %s4691
          %4694 = dma.done %s4689, 4096
        $region96: #{tpu_custom_call.1} parent=91 // pred_fallthru
          _
      $region92: #{tpu_custom_call.1} parent=5 // pred_fallthru
        _
    $region6: #{tpu_custom_call.1} parent=1 // loop_footer
      %s29 = sadd.s32 1, %s25
    $region7: #{tpu_custom_call.1} parent=1 // loop_footer_branch
      %24 = sbr.rel target = $region3
    $region8: #{tpu_custom_call.1} parent=1 // loop_exit
      _
    %4695 = vsyncpa [#allocation3], 1
    %s4696 = scalar_lea.sflag [#allocation3], 1
    %4697 = vsyncpa %s4696, 1

</llo_original>
